<compile_context>
chip_gen: v6e
topology: v6e:2x2x1
jax: 0.10.0
libtpu: 0.0.40
codegen_flags: <defaults>
</compile_context>

<pallas_src>
import numpy as np
import jax
import jax.numpy as jnp
from jax import lax
from jax.experimental import pallas as pl
from jax.experimental.pallas import tpu as pltpu

_SQRT_2_OVER_PI = 0.7978845608028654


def _gelu_tanh(v):
    return 0.5 * v * (1.0 + jnp.tanh(_SQRT_2_OVER_PI * (v + 0.044715 * v * v * v)))


# -----------------------------------------------------------------------------
# Fused kernel: fc1 -> depthwise 3x3x3 conv (pad=1) -> GELU -> fc2
# -----------------------------------------------------------------------------
def _mixffn_kernel(xh_ref, w1_ref, b1_ref, dww_ref, dwb_ref, w2_ref, b2_ref,
                   out_ref, hpad_ref):
    TDp2, H, W, C1p = xh_ref.shape          # haloed depth tile, channels-last
    TD = TDp2 - 2
    C2p = w1_ref.shape[1]
    S_halo = TDp2 * H * W
    S = TD * H * W

    t = pl.program_id(1)
    n_t = pl.num_programs(1)

    # ---- fc1 on the haloed tile: (S_halo, C1p) @ (C1p, C2p) on the MXU --------
    xh = xh_ref[...].reshape(S_halo, C1p)
    h = jnp.dot(xh, w1_ref[...], preferred_element_type=jnp.float32) + b1_ref[...]

    # ---- stage into zero-padded scratch for the depthwise conv ----------------
    # (re-zeroed every step: scratch is per-core under "parallel" semantics)
    hpad_ref[...] = jnp.zeros(hpad_ref.shape, jnp.float32)
    hpad_ref[:, 1:1 + H, 1:1 + W, :] = h.reshape(TDp2, H, W, C2p)

    # D-halo planes outside the volume must be zero (conv zero padding); they
    # currently hold fc1(0) = fc1 bias, so overwrite them.
    @pl.when(t == 0)
    def _():
        hpad_ref[0:1, :, :, :] = jnp.zeros((1, H + 2, W + 2, C2p), jnp.float32)

    @pl.when(t == n_t - 1)
    def _():
        hpad_ref[TD + 1:TD + 2, :, :, :] = jnp.zeros((1, H + 2, W + 2, C2p),
                                                     jnp.float32)

    hp = hpad_ref[...]                       # (TD+2, H+2, W+2, C2p)

    # ---- depthwise 3x3x3 conv, padding=1 (channels on lanes, VPU) -------------
    acc = jnp.zeros((TD, H, W, C2p), jnp.float32)
    for kd in range(3):
        for kh in range(3):
            for kw in range(3):
                k = (kd * 3 + kh) * 3 + kw
                acc = acc + hp[kd:kd + TD, kh:kh + H, kw:kw + W, :] * dww_ref[k]
    acc = acc + dwb_ref[...]

    # ---- GELU + fc2: (S, C2p) @ (C2p, C1p) on the MXU --------------------------
    a = _gelu_tanh(acc).reshape(S, C2p)
    y = jnp.dot(a, w2_ref[...], preferred_element_type=jnp.float32) + b2_ref[...]
    out_ref[...] = y.reshape(TD, H, W, C1p)


# -----------------------------------------------------------------------------
# Tiling / VMEM helpers
# -----------------------------------------------------------------------------
def _round_up(v, m):
    return ((v + m - 1) // m) * m


def _vmem_estimate_bytes(td, H, W, c1p, c2p):
    f = 4
    halo = (td + 2) * H * W
    tile = td * H * W
    est = 2 * halo * c1p * f                          # haloed x block (double buf)
    est += 2 * tile * c1p * f                         # output block (double buf)
    est += 2 * (2 * c1p * c2p + 29 * c2p + c1p) * f   # weights / biases
    est += (td + 2) * (H + 2) * (W + 2) * c2p * f     # hpad scratch
    est += 4 * max(halo, tile) * max(c1p, c2p) * f    # h / acc / gelu temporaries
    return est


def _choose_tile_d(D, H, W, c1p, c2p, budget):
    for td in sorted((d for d in range(1, D + 1) if D % d == 0), reverse=True):
        if _vmem_estimate_bytes(td, H, W, c1p, c2p) <= budget:
            return td
    return 1


# -----------------------------------------------------------------------------
# Wrapper: layout plumbing + pallas_call
# -----------------------------------------------------------------------------
def mix_ffn(x, D, H, W, params, *, tile_d=None, vmem_budget_bytes=40 * 2**20):
    """MixFFN forward.  x: (B, N=D*H*W, C1) float32 -> (B, N, C1) float32."""
    B, N, C1 = x.shape
    assert N == D * H * W
    C2 = params['fc1_w'].shape[0]
    C1p = _round_up(C1, 128)
    C2p = _round_up(C2, 128)

    if tile_d is None:
        tile_d = _choose_tile_d(D, H, W, C1p, C2p, vmem_budget_bytes)
    assert D % tile_d == 0, "tile_d must divide D"
    TD = tile_d
    T = D // TD

    # ---- activations: channels-last, lane-dense (pad C1 -> C1p), 1-plane zero
    #      halo in D, one haloed slab per depth tile -----------------------------
    x_cl = x.reshape(B, D, H, W, C1)
    x_cl = jnp.pad(x_cl, ((0, 0), (0, 0), (0, 0), (0, 0), (0, C1p - C1)))
    x_dp = jnp.pad(x_cl, ((0, 0), (1, 1), (0, 0), (0, 0), (0, 0)))
    x_halo = jnp.stack([x_dp[:, t * TD:t * TD + TD + 2] for t in range(T)],
                       axis=1)                                  # (B,T,TD+2,H,W,C1p)

    # ---- weights (zero-padded so padded lanes stay exactly zero) ---------------
    w1 = jnp.pad(params['fc1_w'].T, ((0, C1p - C1), (0, C2p - C2)))   # (C1p, C2p)
    b1 = jnp.pad(params['fc1_b'], (0, C2p - C2)).reshape(1, C2p)
    dww = jnp.pad(jnp.transpose(params['dw_w'][:, 0], (1, 2, 3, 0)).reshape(27, C2),
                  ((0, 0), (0, C2p - C2))).reshape(27, 1, C2p)
    dwb = jnp.pad(params['dw_b'], (0, C2p - C2)).reshape(1, C2p)
    w2 = jnp.pad(params['fc2_w'].T, ((0, C2p - C2), (0, C1p - C1)))   # (C2p, C1p)
    b2 = jnp.pad(params['fc2_b'], (0, C1p - C1)).reshape(1, C1p)

    grid_spec = pltpu.PrefetchScalarGridSpec(
        num_scalar_prefetch=0,
        grid=(B, T),
        in_specs=[
            pl.BlockSpec((None, None, TD + 2, H, W, C1p),
                         lambda b, t: (b, t, 0, 0, 0, 0)),
            pl.BlockSpec((C1p, C2p), lambda b, t: (0, 0)),
            pl.BlockSpec((1, C2p), lambda b, t: (0, 0)),
            pl.BlockSpec((27, 1, C2p), lambda b, t: (0, 0, 0)),
            pl.BlockSpec((1, C2p), lambda b, t: (0, 0)),
            pl.BlockSpec((C2p, C1p), lambda b, t: (0, 0)),
            pl.BlockSpec((1, C1p), lambda b, t: (0, 0)),
        ],
        out_specs=pl.BlockSpec((None, TD, H, W, C1p),
                               lambda b, t: (b, t, 0, 0, 0)),
        scratch_shapes=[pltpu.VMEM((TD + 2, H + 2, W + 2, C2p), jnp.float32)],
    )

    est = _vmem_estimate_bytes(TD, H, W, C1p, C2p)
    vmem_limit = int(min(max(2 * est, 32 * 2**20), 128 * 2**20))

    out = pl.pallas_call(
        _mixffn_kernel,
        out_shape=jax.ShapeDtypeStruct((B, D, H, W, C1p), jnp.float32),
        grid_spec=grid_spec,
        compiler_params=pltpu.CompilerParams(
            dimension_semantics=("parallel", "parallel"),
            vmem_limit_bytes=vmem_limit),
    )(x_halo, w1, b1, dww, dwb, w2, b2)

    return out[..., :C1].reshape(B, N, C1)


# -----------------------------------------------------------------------------
# Parameter init (PyTorch-shaped, deterministic) and plain-JAX reference
# -----------------------------------------------------------------------------
def init_params(c1, c2, key):
    ks = jax.random.split(key, 6)

    def nrm(k, shape, s):
        return (s * jax.random.normal(k, shape)).astype(jnp.float32)

    return dict(
        fc1_w=nrm(ks[0], (c2, c1), 0.2), fc1_b=nrm(ks[1], (c2,), 0.1),
        dw_w=nrm(ks[2], (c2, 1, 3, 3, 3), 0.2), dw_b=nrm(ks[3], (c2,), 0.1),
        fc2_w=nrm(ks[4], (c1, c2), 0.2), fc2_b=nrm(ks[5], (c1,), 0.1),
    )


def reference_forward(x, D, H, W, p):
    B, N, C1 = x.shape
    C2 = p['fc1_w'].shape[0]
    h = x @ p['fc1_w'].T + p['fc1_b']                           # (B, N, C2)
    hv = jnp.transpose(h, (0, 2, 1)).reshape(B, C2, D, H, W)
    conv = lax.conv_general_dilated(
        hv, p['dw_w'], window_strides=(1, 1, 1), padding=[(1, 1)] * 3,
        dimension_numbers=('NCDHW', 'OIDHW', 'NCDHW'),
        feature_group_count=C2) + p['dw_b'].reshape(1, C2, 1, 1, 1)
    a = _gelu_tanh(conv)
    af = jnp.transpose(a.reshape(B, C2, N), (0, 2, 1))          # (B, N, C2)
    return af @ p['fc2_w'].T + p['fc2_b']


if __name__ == "__main__":
    B, C1, C2 = 2, 4, 32
    D = H = W = 8
    N = D * H * W

    key = jax.random.PRNGKey(0)
    kx, kp = jax.random.split(key)
    x = jax.random.normal(kx, (B, N, C1), jnp.float32)
    params = init_params(C1, C2, kp)

    y_ref = jax.block_until_ready(reference_forward(x, D, H, W, params))

    # multi-tile path (exercises D-halo handling across tile boundaries)
    y = jax.block_until_ready(mix_ffn(x, D, H, W, params, tile_d=4))
    assert y.shape == (B, N, C1)
    np.testing.assert_allclose(np.asarray(y), np.asarray(y_ref),
                               atol=1e-3, rtol=1e-3)

    # auto tile selection path
    y2 = jax.block_until_ready(mix_ffn(x, D, H, W, params))
    np.testing.assert_allclose(np.asarray(y2), np.asarray(y_ref),
                               atol=1e-3, rtol=1e-3)

    print("KERNEL_OK")
</pallas_src>

<mosaic_0001>
module attributes {stable_mosaic.version = 11 : i64} {
  func.func @_mixffn_kernel(%arg0: i32, %arg1: i32, %arg2: memref<1x1x6x8x8x128xf32, #tpu.memory_space<vmem>>, %arg3: memref<128x128xf32, #tpu.memory_space<vmem>>, %arg4: memref<1x128xf32, #tpu.memory_space<vmem>>, %arg5: memref<27x1x128xf32, #tpu.memory_space<vmem>>, %arg6: memref<1x128xf32, #tpu.memory_space<vmem>>, %arg7: memref<128x128xf32, #tpu.memory_space<vmem>>, %arg8: memref<1x128xf32, #tpu.memory_space<vmem>>, %arg9: memref<1x4x8x8x128xf32, #tpu.memory_space<vmem>>, %arg10: memref<6x10x10x128xf32, #tpu.memory_space<vmem>>) attributes {dimension_semantics = [#tpu.dimension_semantics<parallel>, #tpu.dimension_semantics<parallel>], iteration_bounds = array<i64: 2, 2>, scalar_prefetch = 0 : i64, scratch_operands = 1 : i64, tpu.core_type = #tpu.core_type<tc>, window_params = [{transform_indices = @transform_0, window_bounds = array<i64: 1, 1, 6, 8, 8, 128>}, {pipeline_mode = #tpu.pipeline_mode<synchronous>, transform_indices = @transform_1, window_bounds = array<i64: 128, 128>}, {pipeline_mode = #tpu.pipeline_mode<synchronous>, transform_indices = @transform_2, window_bounds = array<i64: 1, 128>}, {pipeline_mode = #tpu.pipeline_mode<synchronous>, transform_indices = @transform_3, window_bounds = array<i64: 27, 1, 128>}, {pipeline_mode = #tpu.pipeline_mode<synchronous>, transform_indices = @transform_4, window_bounds = array<i64: 1, 128>}, {pipeline_mode = #tpu.pipeline_mode<synchronous>, transform_indices = @transform_5, window_bounds = array<i64: 128, 128>}, {pipeline_mode = #tpu.pipeline_mode<synchronous>, transform_indices = @transform_6, window_bounds = array<i64: 1, 128>}, {transform_indices = @transform_7, window_bounds = array<i64: 1, 4, 8, 8, 128>}]} {
    %c0 = arith.constant 0 : index
    %c0_0 = arith.constant 0 : index
    %c0_1 = arith.constant 0 : index
    %c0_2 = arith.constant 0 : index
    %c0_3 = arith.constant 0 : index
    %c0_4 = arith.constant 0 : index
    %0 = vector.load %arg2[%c0, %c0_0, %c0_1, %c0_2, %c0_3, %c0_4] : memref<1x1x6x8x8x128xf32, #tpu.memory_space<vmem>>, vector<1x1x6x8x8x128xf32>
    %1 = vector.shape_cast %0 : vector<1x1x6x8x8x128xf32> to vector<6x8x8x128xf32>
    %2 = vector.shape_cast %1 : vector<6x8x8x128xf32> to vector<384x128xf32>
    %c0_5 = arith.constant 0 : index
    %c0_6 = arith.constant 0 : index
    %3 = vector.load %arg3[%c0_5, %c0_6] : memref<128x128xf32, #tpu.memory_space<vmem>>, vector<128x128xf32>
    %cst = arith.constant dense<0.000000e+00> : vector<384x128xf32>
    %4 = tpu.matmul %2, %3, %cst {dimension_numbers = #tpu.dot_dimension_numbers<[1], [0], [0], [1], [0, 0, 1, 1], [], []>} : vector<384x128xf32>, vector<128x128xf32>, vector<384x128xf32> -> vector<384x128xf32>
    %c0_7 = arith.constant 0 : index
    %c0_8 = arith.constant 0 : index
    %5 = vector.load %arg4[%c0_7, %c0_8] : memref<1x128xf32, #tpu.memory_space<vmem>>, vector<1x128xf32>
    %6 = vector.broadcast %5 : vector<1x128xf32> to vector<384x128xf32>
    %7 = arith.addf %4, %6 : vector<384x128xf32>
    %cst_9 = arith.constant 0.000000e+00 : f32
    %8 = vector.broadcast %cst_9 : f32 to vector<6x10x10x128xf32>
    %c0_10 = arith.constant 0 : index
    %c0_11 = arith.constant 0 : index
    %c0_12 = arith.constant 0 : index
    %c0_13 = arith.constant 0 : index
    %9 = vector.load %arg10[%c0_10, %c0_11, %c0_12, %c0_13] : memref<6x10x10x128xf32, #tpu.memory_space<vmem>>, vector<6x10x10x128xf32>
    tpu.vector_store %arg10[%c0_10, %c0_11, %c0_12, %c0_13], %8 {strides = array<i32>} : memref<6x10x10x128xf32, #tpu.memory_space<vmem>>, vector<6x10x10x128xf32>,
    %10 = vector.shape_cast %7 : vector<384x128xf32> to vector<6x8x8x128xf32>
    %c0_14 = arith.constant 0 : index
    %c1 = arith.constant 1 : index
    %c1_15 = arith.constant 1 : index
    %c0_16 = arith.constant 0 : index
    %11 = vector.load %arg10[%c0_14, %c1, %c1_15, %c0_16] : memref<6x10x10x128xf32, #tpu.memory_space<vmem>>, vector<6x8x8x128xf32>
    tpu.vector_store %arg10[%c0_14, %c1, %c1_15, %c0_16], %10 {strides = array<i32>} : memref<6x10x10x128xf32, #tpu.memory_space<vmem>>, vector<6x8x8x128xf32>,
    %c0_i32 = arith.constant 0 : i32
    %12 = arith.cmpi eq, %arg1, %c0_i32 : i32
    %13 = arith.extui %12 : i1 to i32
    %c0_i32_17 = arith.constant 0 : i32
    %14 = arith.cmpi ne, %13, %c0_i32_17 : i32
    scf.if %14 {
      %cst_96 = arith.constant 0.000000e+00 : f32
      %236 = vector.broadcast %cst_96 : f32 to vector<1x10x10x128xf32>
      %c0_97 = arith.constant 0 : index
      %c0_98 = arith.constant 0 : index
      %c0_99 = arith.constant 0 : index
      %c0_100 = arith.constant 0 : index
      %237 = vector.load %arg10[%c0_97, %c0_98, %c0_99, %c0_100] : memref<6x10x10x128xf32, #tpu.memory_space<vmem>>, vector<1x10x10x128xf32>
      tpu.vector_store %arg10[%c0_97, %c0_98, %c0_99, %c0_100], %236 {strides = array<i32>} : memref<6x10x10x128xf32, #tpu.memory_space<vmem>>, vector<1x10x10x128xf32>,
    } else {
    }
    %c1_i32 = arith.constant 1 : i32
    %15 = arith.cmpi eq, %arg1, %c1_i32 : i32
    %16 = arith.extui %15 : i1 to i32
    %c0_i32_18 = arith.constant 0 : i32
    %17 = arith.cmpi ne, %16, %c0_i32_18 : i32
    scf.if %17 {
      %cst_96 = arith.constant 0.000000e+00 : f32
      %236 = vector.broadcast %cst_96 : f32 to vector<1x10x10x128xf32>
      %c5_97 = arith.constant 5 : index
      %c0_98 = arith.constant 0 : index
      %c0_99 = arith.constant 0 : index
      %c0_100 = arith.constant 0 : index
      %237 = vector.load %arg10[%c5_97, %c0_98, %c0_99, %c0_100] : memref<6x10x10x128xf32, #tpu.memory_space<vmem>>, vector<1x10x10x128xf32>
      tpu.vector_store %arg10[%c5_97, %c0_98, %c0_99, %c0_100], %236 {strides = array<i32>} : memref<6x10x10x128xf32, #tpu.memory_space<vmem>>, vector<1x10x10x128xf32>,
    } else {
    }
    %c0_19 = arith.constant 0 : index
    %c0_20 = arith.constant 0 : index
    %c0_21 = arith.constant 0 : index
    %c0_22 = arith.constant 0 : index
    %18 = vector.load %arg10[%c0_19, %c0_20, %c0_21, %c0_22] : memref<6x10x10x128xf32, #tpu.memory_space<vmem>>, vector<6x10x10x128xf32>
    %cst_23 = arith.constant 0.000000e+00 : f32
    %19 = vector.broadcast %cst_23 : f32 to vector<4x8x8x128xf32>
    %20 = vector.extract_strided_slice %18 {offsets = [0, 0, 0, 0], sizes = [4, 8, 8, 128], strides = [1, 1, 1, 1]} : vector<6x10x10x128xf32> to vector<4x8x8x128xf32>
    %c0_24 = arith.constant 0 : index
    %c0_25 = arith.constant 0 : index
    %c0_26 = arith.constant 0 : index
    %21 = vector.load %arg5[%c0_24, %c0_25, %c0_26] : memref<27x1x128xf32, #tpu.memory_space<vmem>>, vector<1x1x128xf32>
    %22 = vector.shape_cast %21 : vector<1x1x128xf32> to vector<1x128xf32>
    %23 = vector.shape_cast %22 : vector<1x128xf32> to vector<1x1x1x128xf32>
    %24 = vector.broadcast %23 : vector<1x1x1x128xf32> to vector<4x8x8x128xf32>
    %25 = arith.mulf %20, %24 : vector<4x8x8x128xf32>
    %26 = arith.addf %19, %25 : vector<4x8x8x128xf32>
    %27 = vector.extract_strided_slice %18 {offsets = [0, 0, 1, 0], sizes = [4, 8, 8, 128], strides = [1, 1, 1, 1]} : vector<6x10x10x128xf32> to vector<4x8x8x128xf32>
    %c1_27 = arith.constant 1 : index
    %c0_28 = arith.constant 0 : index
    %c0_29 = arith.constant 0 : index
    %28 = vector.load %arg5[%c1_27, %c0_28, %c0_29] : memref<27x1x128xf32, #tpu.memory_space<vmem>>, vector<1x1x128xf32>
    %29 = vector.shape_cast %28 : vector<1x1x128xf32> to vector<1x128xf32>
    %30 = vector.shape_cast %29 : vector<1x128xf32> to vector<1x1x1x128xf32>
    %31 = vector.broadcast %30 : vector<1x1x1x128xf32> to vector<4x8x8x128xf32>
    %32 = arith.mulf %27, %31 : vector<4x8x8x128xf32>
    %33 = arith.addf %26, %32 : vector<4x8x8x128xf32>
    %34 = vector.extract_strided_slice %18 {offsets = [0, 0, 2, 0], sizes = [4, 8, 8, 128], strides = [1, 1, 1, 1]} : vector<6x10x10x128xf32> to vector<4x8x8x128xf32>
    %c2 = arith.constant 2 : index
    %c0_30 = arith.constant 0 : index
    %c0_31 = arith.constant 0 : index
    %35 = vector.load %arg5[%c2, %c0_30, %c0_31] : memref<27x1x128xf32, #tpu.memory_space<vmem>>, vector<1x1x128xf32>
    %36 = vector.shape_cast %35 : vector<1x1x128xf32> to vector<1x128xf32>
    %37 = vector.shape_cast %36 : vector<1x128xf32> to vector<1x1x1x128xf32>
    %38 = vector.broadcast %37 : vector<1x1x1x128xf32> to vector<4x8x8x128xf32>
    %39 = arith.mulf %34, %38 : vector<4x8x8x128xf32>
    %40 = arith.addf %33, %39 : vector<4x8x8x128xf32>
    %41 = vector.extract_strided_slice %18 {offsets = [0, 1, 0, 0], sizes = [4, 8, 8, 128], strides = [1, 1, 1, 1]} : vector<6x10x10x128xf32> to vector<4x8x8x128xf32>
    %c3 = arith.constant 3 : index
    %c0_32 = arith.constant 0 : index
    %c0_33 = arith.constant 0 : index
    %42 = vector.load %arg5[%c3, %c0_32, %c0_33] : memref<27x1x128xf32, #tpu.memory_space<vmem>>, vector<1x1x128xf32>
    %43 = vector.shape_cast %42 : vector<1x1x128xf32> to vector<1x128xf32>
    %44 = vector.shape_cast %43 : vector<1x128xf32> to vector<1x1x1x128xf32>
    %45 = vector.broadcast %44 : vector<1x1x1x128xf32> to vector<4x8x8x128xf32>
    %46 = arith.mulf %41, %45 : vector<4x8x8x128xf32>
    %47 = arith.addf %40, %46 : vector<4x8x8x128xf32>
    %48 = vector.extract_strided_slice %18 {offsets = [0, 1, 1, 0], sizes = [4, 8, 8, 128], strides = [1, 1, 1, 1]} : vector<6x10x10x128xf32> to vector<4x8x8x128xf32>
    %c4 = arith.constant 4 : index
    %c0_34 = arith.constant 0 : index
    %c0_35 = arith.constant 0 : index
    %49 = vector.load %arg5[%c4, %c0_34, %c0_35] : memref<27x1x128xf32, #tpu.memory_space<vmem>>, vector<1x1x128xf32>
    %50 = vector.shape_cast %49 : vector<1x1x128xf32> to vector<1x128xf32>
    %51 = vector.shape_cast %50 : vector<1x128xf32> to vector<1x1x1x128xf32>
    %52 = vector.broadcast %51 : vector<1x1x1x128xf32> to vector<4x8x8x128xf32>
    %53 = arith.mulf %48, %52 : vector<4x8x8x128xf32>
    %54 = arith.addf %47, %53 : vector<4x8x8x128xf32>
    %55 = vector.extract_strided_slice %18 {offsets = [0, 1, 2, 0], sizes = [4, 8, 8, 128], strides = [1, 1, 1, 1]} : vector<6x10x10x128xf32> to vector<4x8x8x128xf32>
    %c5 = arith.constant 5 : index
    %c0_36 = arith.constant 0 : index
    %c0_37 = arith.constant 0 : index
    %56 = vector.load %arg5[%c5, %c0_36, %c0_37] : memref<27x1x128xf32, #tpu.memory_space<vmem>>, vector<1x1x128xf32>
    %57 = vector.shape_cast %56 : vector<1x1x128xf32> to vector<1x128xf32>
    %58 = vector.shape_cast %57 : vector<1x128xf32> to vector<1x1x1x128xf32>
    %59 = vector.broadcast %58 : vector<1x1x1x128xf32> to vector<4x8x8x128xf32>
    %60 = arith.mulf %55, %59 : vector<4x8x8x128xf32>
    %61 = arith.addf %54, %60 : vector<4x8x8x128xf32>
    %62 = vector.extract_strided_slice %18 {offsets = [0, 2, 0, 0], sizes = [4, 8, 8, 128], strides = [1, 1, 1, 1]} : vector<6x10x10x128xf32> to vector<4x8x8x128xf32>
    %c6 = arith.constant 6 : index
    %c0_38 = arith.constant 0 : index
    %c0_39 = arith.constant 0 : index
    %63 = vector.load %arg5[%c6, %c0_38, %c0_39] : memref<27x1x128xf32, #tpu.memory_space<vmem>>, vector<1x1x128xf32>
    %64 = vector.shape_cast %63 : vector<1x1x128xf32> to vector<1x128xf32>
    %65 = vector.shape_cast %64 : vector<1x128xf32> to vector<1x1x1x128xf32>
    %66 = vector.broadcast %65 : vector<1x1x1x128xf32> to vector<4x8x8x128xf32>
    %67 = arith.mulf %62, %66 : vector<4x8x8x128xf32>
    %68 = arith.addf %61, %67 : vector<4x8x8x128xf32>
    %69 = vector.extract_strided_slice %18 {offsets = [0, 2, 1, 0], sizes = [4, 8, 8, 128], strides = [1, 1, 1, 1]} : vector<6x10x10x128xf32> to vector<4x8x8x128xf32>
    %c7 = arith.constant 7 : index
    %c0_40 = arith.constant 0 : index
    %c0_41 = arith.constant 0 : index
    %70 = vector.load %arg5[%c7, %c0_40, %c0_41] : memref<27x1x128xf32, #tpu.memory_space<vmem>>, vector<1x1x128xf32>
    %71 = vector.shape_cast %70 : vector<1x1x128xf32> to vector<1x128xf32>
    %72 = vector.shape_cast %71 : vector<1x128xf32> to vector<1x1x1x128xf32>
    %73 = vector.broadcast %72 : vector<1x1x1x128xf32> to vector<4x8x8x128xf32>
    %74 = arith.mulf %69, %73 : vector<4x8x8x128xf32>
    %75 = arith.addf %68, %74 : vector<4x8x8x128xf32>
    %76 = vector.extract_strided_slice %18 {offsets = [0, 2, 2, 0], sizes = [4, 8, 8, 128], strides = [1, 1, 1, 1]} : vector<6x10x10x128xf32> to vector<4x8x8x128xf32>
    %c8 = arith.constant 8 : index
    %c0_42 = arith.constant 0 : index
    %c0_43 = arith.constant 0 : index
    %77 = vector.load %arg5[%c8, %c0_42, %c0_43] : memref<27x1x128xf32, #tpu.memory_space<vmem>>, vector<1x1x128xf32>
    %78 = vector.shape_cast %77 : vector<1x1x128xf32> to vector<1x128xf32>
    %79 = vector.shape_cast %78 : vector<1x128xf32> to vector<1x1x1x128xf32>
    %80 = vector.broadcast %79 : vector<1x1x1x128xf32> to vector<4x8x8x128xf32>
    %81 = arith.mulf %76, %80 : vector<4x8x8x128xf32>
    %82 = arith.addf %75, %81 : vector<4x8x8x128xf32>
    %83 = vector.extract_strided_slice %18 {offsets = [1, 0, 0, 0], sizes = [4, 8, 8, 128], strides = [1, 1, 1, 1]} : vector<6x10x10x128xf32> to vector<4x8x8x128xf32>
    %c9 = arith.constant 9 : index
    %c0_44 = arith.constant 0 : index
    %c0_45 = arith.constant 0 : index
    %84 = vector.load %arg5[%c9, %c0_44, %c0_45] : memref<27x1x128xf32, #tpu.memory_space<vmem>>, vector<1x1x128xf32>
    %85 = vector.shape_cast %84 : vector<1x1x128xf32> to vector<1x128xf32>
    %86 = vector.shape_cast %85 : vector<1x128xf32> to vector<1x1x1x128xf32>
    %87 = vector.broadcast %86 : vector<1x1x1x128xf32> to vector<4x8x8x128xf32>
    %88 = arith.mulf %83, %87 : vector<4x8x8x128xf32>
    %89 = arith.addf %82, %88 : vector<4x8x8x128xf32>
    %90 = vector.extract_strided_slice %18 {offsets = [1, 0, 1, 0], sizes = [4, 8, 8, 128], strides = [1, 1, 1, 1]} : vector<6x10x10x128xf32> to vector<4x8x8x128xf32>
    %c10 = arith.constant 10 : index
    %c0_46 = arith.constant 0 : index
    %c0_47 = arith.constant 0 : index
    %91 = vector.load %arg5[%c10, %c0_46, %c0_47] : memref<27x1x128xf32, #tpu.memory_space<vmem>>, vector<1x1x128xf32>
    %92 = vector.shape_cast %91 : vector<1x1x128xf32> to vector<1x128xf32>
    %93 = vector.shape_cast %92 : vector<1x128xf32> to vector<1x1x1x128xf32>
    %94 = vector.broadcast %93 : vector<1x1x1x128xf32> to vector<4x8x8x128xf32>
    %95 = arith.mulf %90, %94 : vector<4x8x8x128xf32>
    %96 = arith.addf %89, %95 : vector<4x8x8x128xf32>
    %97 = vector.extract_strided_slice %18 {offsets = [1, 0, 2, 0], sizes = [4, 8, 8, 128], strides = [1, 1, 1, 1]} : vector<6x10x10x128xf32> to vector<4x8x8x128xf32>
    %c11 = arith.constant 11 : index
    %c0_48 = arith.constant 0 : index
    %c0_49 = arith.constant 0 : index
    %98 = vector.load %arg5[%c11, %c0_48, %c0_49] : memref<27x1x128xf32, #tpu.memory_space<vmem>>, vector<1x1x128xf32>
    %99 = vector.shape_cast %98 : vector<1x1x128xf32> to vector<1x128xf32>
    %100 = vector.shape_cast %99 : vector<1x128xf32> to vector<1x1x1x128xf32>
    %101 = vector.broadcast %100 : vector<1x1x1x128xf32> to vector<4x8x8x128xf32>
    %102 = arith.mulf %97, %101 : vector<4x8x8x128xf32>
    %103 = arith.addf %96, %102 : vector<4x8x8x128xf32>
    %104 = vector.extract_strided_slice %18 {offsets = [1, 1, 0, 0], sizes = [4, 8, 8, 128], strides = [1, 1, 1, 1]} : vector<6x10x10x128xf32> to vector<4x8x8x128xf32>
    %c12 = arith.constant 12 : index
    %c0_50 = arith.constant 0 : index
    %c0_51 = arith.constant 0 : index
    %105 = vector.load %arg5[%c12, %c0_50, %c0_51] : memref<27x1x128xf32, #tpu.memory_space<vmem>>, vector<1x1x128xf32>
    %106 = vector.shape_cast %105 : vector<1x1x128xf32> to vector<1x128xf32>
    %107 = vector.shape_cast %106 : vector<1x128xf32> to vector<1x1x1x128xf32>
    %108 = vector.broadcast %107 : vector<1x1x1x128xf32> to vector<4x8x8x128xf32>
    %109 = arith.mulf %104, %108 : vector<4x8x8x128xf32>
    %110 = arith.addf %103, %109 : vector<4x8x8x128xf32>
    %111 = vector.extract_strided_slice %18 {offsets = [1, 1, 1, 0], sizes = [4, 8, 8, 128], strides = [1, 1, 1, 1]} : vector<6x10x10x128xf32> to vector<4x8x8x128xf32>
    %c13 = arith.constant 13 : index
    %c0_52 = arith.constant 0 : index
    %c0_53 = arith.constant 0 : index
    %112 = vector.load %arg5[%c13, %c0_52, %c0_53] : memref<27x1x128xf32, #tpu.memory_space<vmem>>, vector<1x1x128xf32>
    %113 = vector.shape_cast %112 : vector<1x1x128xf32> to vector<1x128xf32>
    %114 = vector.shape_cast %113 : vector<1x128xf32> to vector<1x1x1x128xf32>
    %115 = vector.broadcast %114 : vector<1x1x1x128xf32> to vector<4x8x8x128xf32>
    %116 = arith.mulf %111, %115 : vector<4x8x8x128xf32>
    %117 = arith.addf %110, %116 : vector<4x8x8x128xf32>
    %118 = vector.extract_strided_slice %18 {offsets = [1, 1, 2, 0], sizes = [4, 8, 8, 128], strides = [1, 1, 1, 1]} : vector<6x10x10x128xf32> to vector<4x8x8x128xf32>
    %c14 = arith.constant 14 : index
    %c0_54 = arith.constant 0 : index
    %c0_55 = arith.constant 0 : index
    %119 = vector.load %arg5[%c14, %c0_54, %c0_55] : memref<27x1x128xf32, #tpu.memory_space<vmem>>, vector<1x1x128xf32>
    %120 = vector.shape_cast %119 : vector<1x1x128xf32> to vector<1x128xf32>
    %121 = vector.shape_cast %120 : vector<1x128xf32> to vector<1x1x1x128xf32>
    %122 = vector.broadcast %121 : vector<1x1x1x128xf32> to vector<4x8x8x128xf32>
    %123 = arith.mulf %118, %122 : vector<4x8x8x128xf32>
    %124 = arith.addf %117, %123 : vector<4x8x8x128xf32>
    %125 = vector.extract_strided_slice %18 {offsets = [1, 2, 0, 0], sizes = [4, 8, 8, 128], strides = [1, 1, 1, 1]} : vector<6x10x10x128xf32> to vector<4x8x8x128xf32>
    %c15 = arith.constant 15 : index
    %c0_56 = arith.constant 0 : index
    %c0_57 = arith.constant 0 : index
    %126 = vector.load %arg5[%c15, %c0_56, %c0_57] : memref<27x1x128xf32, #tpu.memory_space<vmem>>, vector<1x1x128xf32>
    %127 = vector.shape_cast %126 : vector<1x1x128xf32> to vector<1x128xf32>
    %128 = vector.shape_cast %127 : vector<1x128xf32> to vector<1x1x1x128xf32>
    %129 = vector.broadcast %128 : vector<1x1x1x128xf32> to vector<4x8x8x128xf32>
    %130 = arith.mulf %125, %129 : vector<4x8x8x128xf32>
    %131 = arith.addf %124, %130 : vector<4x8x8x128xf32>
    %132 = vector.extract_strided_slice %18 {offsets = [1, 2, 1, 0], sizes = [4, 8, 8, 128], strides = [1, 1, 1, 1]} : vector<6x10x10x128xf32> to vector<4x8x8x128xf32>
    %c16 = arith.constant 16 : index
    %c0_58 = arith.constant 0 : index
    %c0_59 = arith.constant 0 : index
    %133 = vector.load %arg5[%c16, %c0_58, %c0_59] : memref<27x1x128xf32, #tpu.memory_space<vmem>>, vector<1x1x128xf32>
    %134 = vector.shape_cast %133 : vector<1x1x128xf32> to vector<1x128xf32>
    %135 = vector.shape_cast %134 : vector<1x128xf32> to vector<1x1x1x128xf32>
    %136 = vector.broadcast %135 : vector<1x1x1x128xf32> to vector<4x8x8x128xf32>
    %137 = arith.mulf %132, %136 : vector<4x8x8x128xf32>
    %138 = arith.addf %131, %137 : vector<4x8x8x128xf32>
    %139 = vector.extract_strided_slice %18 {offsets = [1, 2, 2, 0], sizes = [4, 8, 8, 128], strides = [1, 1, 1, 1]} : vector<6x10x10x128xf32> to vector<4x8x8x128xf32>
    %c17 = arith.constant 17 : index
    %c0_60 = arith.constant 0 : index
    %c0_61 = arith.constant 0 : index
    %140 = vector.load %arg5[%c17, %c0_60, %c0_61] : memref<27x1x128xf32, #tpu.memory_space<vmem>>, vector<1x1x128xf32>
    %141 = vector.shape_cast %140 : vector<1x1x128xf32> to vector<1x128xf32>
    %142 = vector.shape_cast %141 : vector<1x128xf32> to vector<1x1x1x128xf32>
    %143 = vector.broadcast %142 : vector<1x1x1x128xf32> to vector<4x8x8x128xf32>
    %144 = arith.mulf %139, %143 : vector<4x8x8x128xf32>
    %145 = arith.addf %138, %144 : vector<4x8x8x128xf32>
    %146 = vector.extract_strided_slice %18 {offsets = [2, 0, 0, 0], sizes = [4, 8, 8, 128], strides = [1, 1, 1, 1]} : vector<6x10x10x128xf32> to vector<4x8x8x128xf32>
    %c18 = arith.constant 18 : index
    %c0_62 = arith.constant 0 : index
    %c0_63 = arith.constant 0 : index
    %147 = vector.load %arg5[%c18, %c0_62, %c0_63] : memref<27x1x128xf32, #tpu.memory_space<vmem>>, vector<1x1x128xf32>
    %148 = vector.shape_cast %147 : vector<1x1x128xf32> to vector<1x128xf32>
    %149 = vector.shape_cast %148 : vector<1x128xf32> to vector<1x1x1x128xf32>
    %150 = vector.broadcast %149 : vector<1x1x1x128xf32> to vector<4x8x8x128xf32>
    %151 = arith.mulf %146, %150 : vector<4x8x8x128xf32>
    %152 = arith.addf %145, %151 : vector<4x8x8x128xf32>
    %153 = vector.extract_strided_slice %18 {offsets = [2, 0, 1, 0], sizes = [4, 8, 8, 128], strides = [1, 1, 1, 1]} : vector<6x10x10x128xf32> to vector<4x8x8x128xf32>
    %c19 = arith.constant 19 : index
    %c0_64 = arith.constant 0 : index
    %c0_65 = arith.constant 0 : index
    %154 = vector.load %arg5[%c19, %c0_64, %c0_65] : memref<27x1x128xf32, #tpu.memory_space<vmem>>, vector<1x1x128xf32>
    %155 = vector.shape_cast %154 : vector<1x1x128xf32> to vector<1x128xf32>
    %156 = vector.shape_cast %155 : vector<1x128xf32> to vector<1x1x1x128xf32>
    %157 = vector.broadcast %156 : vector<1x1x1x128xf32> to vector<4x8x8x128xf32>
    %158 = arith.mulf %153, %157 : vector<4x8x8x128xf32>
    %159 = arith.addf %152, %158 : vector<4x8x8x128xf32>
    %160 = vector.extract_strided_slice %18 {offsets = [2, 0, 2, 0], sizes = [4, 8, 8, 128], strides = [1, 1, 1, 1]} : vector<6x10x10x128xf32> to vector<4x8x8x128xf32>
    %c20 = arith.constant 20 : index
    %c0_66 = arith.constant 0 : index
    %c0_67 = arith.constant 0 : index
    %161 = vector.load %arg5[%c20, %c0_66, %c0_67] : memref<27x1x128xf32, #tpu.memory_space<vmem>>, vector<1x1x128xf32>
    %162 = vector.shape_cast %161 : vector<1x1x128xf32> to vector<1x128xf32>
    %163 = vector.shape_cast %162 : vector<1x128xf32> to vector<1x1x1x128xf32>
    %164 = vector.broadcast %163 : vector<1x1x1x128xf32> to vector<4x8x8x128xf32>
    %165 = arith.mulf %160, %164 : vector<4x8x8x128xf32>
    %166 = arith.addf %159, %165 : vector<4x8x8x128xf32>
    %167 = vector.extract_strided_slice %18 {offsets = [2, 1, 0, 0], sizes = [4, 8, 8, 128], strides = [1, 1, 1, 1]} : vector<6x10x10x128xf32> to vector<4x8x8x128xf32>
    %c21 = arith.constant 21 : index
    %c0_68 = arith.constant 0 : index
    %c0_69 = arith.constant 0 : index
    %168 = vector.load %arg5[%c21, %c0_68, %c0_69] : memref<27x1x128xf32, #tpu.memory_space<vmem>>, vector<1x1x128xf32>
    %169 = vector.shape_cast %168 : vector<1x1x128xf32> to vector<1x128xf32>
    %170 = vector.shape_cast %169 : vector<1x128xf32> to vector<1x1x1x128xf32>
    %171 = vector.broadcast %170 : vector<1x1x1x128xf32> to vector<4x8x8x128xf32>
    %172 = arith.mulf %167, %171 : vector<4x8x8x128xf32>
    %173 = arith.addf %166, %172 : vector<4x8x8x128xf32>
    %174 = vector.extract_strided_slice %18 {offsets = [2, 1, 1, 0], sizes = [4, 8, 8, 128], strides = [1, 1, 1, 1]} : vector<6x10x10x128xf32> to vector<4x8x8x128xf32>
    %c22 = arith.constant 22 : index
    %c0_70 = arith.constant 0 : index
    %c0_71 = arith.constant 0 : index
    %175 = vector.load %arg5[%c22, %c0_70, %c0_71] : memref<27x1x128xf32, #tpu.memory_space<vmem>>, vector<1x1x128xf32>
    %176 = vector.shape_cast %175 : vector<1x1x128xf32> to vector<1x128xf32>
    %177 = vector.shape_cast %176 : vector<1x128xf32> to vector<1x1x1x128xf32>
    %178 = vector.broadcast %177 : vector<1x1x1x128xf32> to vector<4x8x8x128xf32>
    %179 = arith.mulf %174, %178 : vector<4x8x8x128xf32>
    %180 = arith.addf %173, %179 : vector<4x8x8x128xf32>
    %181 = vector.extract_strided_slice %18 {offsets = [2, 1, 2, 0], sizes = [4, 8, 8, 128], strides = [1, 1, 1, 1]} : vector<6x10x10x128xf32> to vector<4x8x8x128xf32>
    %c23 = arith.constant 23 : index
    %c0_72 = arith.constant 0 : index
    %c0_73 = arith.constant 0 : index
    %182 = vector.load %arg5[%c23, %c0_72, %c0_73] : memref<27x1x128xf32, #tpu.memory_space<vmem>>, vector<1x1x128xf32>
    %183 = vector.shape_cast %182 : vector<1x1x128xf32> to vector<1x128xf32>
    %184 = vector.shape_cast %183 : vector<1x128xf32> to vector<1x1x1x128xf32>
    %185 = vector.broadcast %184 : vector<1x1x1x128xf32> to vector<4x8x8x128xf32>
    %186 = arith.mulf %181, %185 : vector<4x8x8x128xf32>
    %187 = arith.addf %180, %186 : vector<4x8x8x128xf32>
    %188 = vector.extract_strided_slice %18 {offsets = [2, 2, 0, 0], sizes = [4, 8, 8, 128], strides = [1, 1, 1, 1]} : vector<6x10x10x128xf32> to vector<4x8x8x128xf32>
    %c24 = arith.constant 24 : index
    %c0_74 = arith.constant 0 : index
    %c0_75 = arith.constant 0 : index
    %189 = vector.load %arg5[%c24, %c0_74, %c0_75] : memref<27x1x128xf32, #tpu.memory_space<vmem>>, vector<1x1x128xf32>
    %190 = vector.shape_cast %189 : vector<1x1x128xf32> to vector<1x128xf32>
    %191 = vector.shape_cast %190 : vector<1x128xf32> to vector<1x1x1x128xf32>
    %192 = vector.broadcast %191 : vector<1x1x1x128xf32> to vector<4x8x8x128xf32>
    %193 = arith.mulf %188, %192 : vector<4x8x8x128xf32>
    %194 = arith.addf %187, %193 : vector<4x8x8x128xf32>
    %195 = vector.extract_strided_slice %18 {offsets = [2, 2, 1, 0], sizes = [4, 8, 8, 128], strides = [1, 1, 1, 1]} : vector<6x10x10x128xf32> to vector<4x8x8x128xf32>
    %c25 = arith.constant 25 : index
    %c0_76 = arith.constant 0 : index
    %c0_77 = arith.constant 0 : index
    %196 = vector.load %arg5[%c25, %c0_76, %c0_77] : memref<27x1x128xf32, #tpu.memory_space<vmem>>, vector<1x1x128xf32>
    %197 = vector.shape_cast %196 : vector<1x1x128xf32> to vector<1x128xf32>
    %198 = vector.shape_cast %197 : vector<1x128xf32> to vector<1x1x1x128xf32>
    %199 = vector.broadcast %198 : vector<1x1x1x128xf32> to vector<4x8x8x128xf32>
    %200 = arith.mulf %195, %199 : vector<4x8x8x128xf32>
    %201 = arith.addf %194, %200 : vector<4x8x8x128xf32>
    %202 = vector.extract_strided_slice %18 {offsets = [2, 2, 2, 0], sizes = [4, 8, 8, 128], strides = [1, 1, 1, 1]} : vector<6x10x10x128xf32> to vector<4x8x8x128xf32>
    %c26 = arith.constant 26 : index
    %c0_78 = arith.constant 0 : index
    %c0_79 = arith.constant 0 : index
    %203 = vector.load %arg5[%c26, %c0_78, %c0_79] : memref<27x1x128xf32, #tpu.memory_space<vmem>>, vector<1x1x128xf32>
    %204 = vector.shape_cast %203 : vector<1x1x128xf32> to vector<1x128xf32>
    %205 = vector.shape_cast %204 : vector<1x128xf32> to vector<1x1x1x128xf32>
    %206 = vector.broadcast %205 : vector<1x1x1x128xf32> to vector<4x8x8x128xf32>
    %207 = arith.mulf %202, %206 : vector<4x8x8x128xf32>
    %208 = arith.addf %201, %207 : vector<4x8x8x128xf32>
    %c0_80 = arith.constant 0 : index
    %c0_81 = arith.constant 0 : index
    %209 = vector.load %arg6[%c0_80, %c0_81] : memref<1x128xf32, #tpu.memory_space<vmem>>, vector<1x128xf32>
    %210 = vector.shape_cast %209 : vector<1x128xf32> to vector<1x1x1x128xf32>
    %211 = vector.broadcast %210 : vector<1x1x1x128xf32> to vector<4x8x8x128xf32>
    %212 = arith.addf %208, %211 : vector<4x8x8x128xf32>
    %cst_82 = arith.constant 5.000000e-01 : f32
    %213 = vector.broadcast %cst_82 : f32 to vector<4x8x8x128xf32>
    %214 = arith.mulf %213, %212 : vector<4x8x8x128xf32>
    %cst_83 = arith.constant 4.471500e-02 : f32
    %215 = vector.broadcast %cst_83 : f32 to vector<4x8x8x128xf32>
    %216 = arith.mulf %215, %212 : vector<4x8x8x128xf32>
    %217 = arith.mulf %216, %212 : vector<4x8x8x128xf32>
    %218 = arith.mulf %217, %212 : vector<4x8x8x128xf32>
    %219 = arith.addf %212, %218 : vector<4x8x8x128xf32>
    %cst_84 = arith.constant 0.797884583 : f32
    %220 = vector.broadcast %cst_84 : f32 to vector<4x8x8x128xf32>
    %221 = arith.mulf %220, %219 : vector<4x8x8x128xf32>
    %222 = math.tanh %221 : vector<4x8x8x128xf32>
    %cst_85 = arith.constant 1.000000e+00 : f32
    %223 = vector.broadcast %cst_85 : f32 to vector<4x8x8x128xf32>
    %224 = arith.addf %223, %222 : vector<4x8x8x128xf32>
    %225 = arith.mulf %214, %224 : vector<4x8x8x128xf32>
    %226 = vector.shape_cast %225 : vector<4x8x8x128xf32> to vector<256x128xf32>
    %c0_86 = arith.constant 0 : index
    %c0_87 = arith.constant 0 : index
    %227 = vector.load %arg7[%c0_86, %c0_87] : memref<128x128xf32, #tpu.memory_space<vmem>>, vector<128x128xf32>
    %cst_88 = arith.constant dense<0.000000e+00> : vector<256x128xf32>
    %228 = tpu.matmul %226, %227, %cst_88 {dimension_numbers = #tpu.dot_dimension_numbers<[1], [0], [0], [1], [0, 0, 1, 1], [], []>} : vector<256x128xf32>, vector<128x128xf32>, vector<256x128xf32> -> vector<256x128xf32>
    %c0_89 = arith.constant 0 : index
    %c0_90 = arith.constant 0 : index
    %229 = vector.load %arg8[%c0_89, %c0_90] : memref<1x128xf32, #tpu.memory_space<vmem>>, vector<1x128xf32>
    %230 = vector.broadcast %229 : vector<1x128xf32> to vector<256x128xf32>
    %231 = arith.addf %228, %230 : vector<256x128xf32>
    %232 = vector.shape_cast %231 : vector<256x128xf32> to vector<4x8x8x128xf32>
    %c0_91 = arith.constant 0 : index
    %c0_92 = arith.constant 0 : index
    %c0_93 = arith.constant 0 : index
    %c0_94 = arith.constant 0 : index
    %c0_95 = arith.constant 0 : index
    %233 = vector.load %arg9[%c0_91, %c0_92, %c0_93, %c0_94, %c0_95] : memref<1x4x8x8x128xf32, #tpu.memory_space<vmem>>, vector<1x4x8x8x128xf32>
    %234 = vector.shape_cast %233 : vector<1x4x8x8x128xf32> to vector<4x8x8x128xf32>
    %235 = vector.shape_cast %232 : vector<4x8x8x128xf32> to vector<1x4x8x8x128xf32>
    tpu.vector_store %arg9[%c0_91, %c0_92, %c0_93, %c0_94, %c0_95], %235 {strides = array<i32>} : memref<1x4x8x8x128xf32, #tpu.memory_space<vmem>>, vector<1x4x8x8x128xf32>,
    return
  }
  func.func @transform_0(%arg0: i32, %arg1: i32) -> (i32, i32, i32, i32, i32, i32) {
    %c0_i32 = arith.constant 0 : i32
    %c0_i32_0 = arith.constant 0 : i32
    %c0_i32_1 = arith.constant 0 : i32
    %c0_i32_2 = arith.constant 0 : i32
    %c0_i32_3 = arith.constant 0 : i32
    return %arg0, %arg1, %c0_i32, %c0_i32_0, %c0_i32_1, %c0_i32_2 : i32, i32, i32, i32, i32, i32
  }
  func.func @transform_1(%arg0: i32, %arg1: i32) -> (i32, i32) {
    %c0_i32 = arith.constant 0 : i32
    %c0_i32_0 = arith.constant 0 : i32
    %c0_i32_1 = arith.constant 0 : i32
    return %c0_i32, %c0_i32_0 : i32, i32
  }
  func.func @transform_2(%arg0: i32, %arg1: i32) -> (i32, i32) {
    %c0_i32 = arith.constant 0 : i32
    %c0_i32_0 = arith.constant 0 : i32
    %c0_i32_1 = arith.constant 0 : i32
    return %c0_i32, %c0_i32_0 : i32, i32
  }
  func.func @transform_3(%arg0: i32, %arg1: i32) -> (i32, i32, i32) {
    %c0_i32 = arith.constant 0 : i32
    %c0_i32_0 = arith.constant 0 : i32
    %c0_i32_1 = arith.constant 0 : i32
    %c0_i32_2 = arith.constant 0 : i32
    return %c0_i32, %c0_i32_0, %c0_i32_1 : i32, i32, i32
  }
  func.func @transform_4(%arg0: i32, %arg1: i32) -> (i32, i32) {
    %c0_i32 = arith.constant 0 : i32
    %c0_i32_0 = arith.constant 0 : i32
    %c0_i32_1 = arith.constant 0 : i32
    return %c0_i32, %c0_i32_0 : i32, i32
  }
  func.func @transform_5(%arg0: i32, %arg1: i32) -> (i32, i32) {
    %c0_i32 = arith.constant 0 : i32
    %c0_i32_0 = arith.constant 0 : i32
    %c0_i32_1 = arith.constant 0 : i32
    return %c0_i32, %c0_i32_0 : i32, i32
  }
  func.func @transform_6(%arg0: i32, %arg1: i32) -> (i32, i32) {
    %c0_i32 = arith.constant 0 : i32
    %c0_i32_0 = arith.constant 0 : i32
    %c0_i32_1 = arith.constant 0 : i32
    return %c0_i32, %c0_i32_0 : i32, i32
  }
  func.func @transform_7(%arg0: i32, %arg1: i32) -> (i32, i32, i32, i32, i32) {
    %c0_i32 = arith.constant 0 : i32
    %c0_i32_0 = arith.constant 0 : i32
    %c0_i32_1 = arith.constant 0 : i32
    %c0_i32_2 = arith.constant 0 : i32
    return %arg0, %arg1, %c0_i32, %c0_i32_0, %c0_i32_1 : i32, i32, i32, i32, i32
  }
}

</mosaic_0001>

<llo_original>
// kernel: tpu_custom_call.1
$region0: #{tpu_custom_call.1}
  #allocation0 [shape = 'u32[]', space=smem, size = 0x4, offset = 0x4, fixed_abs, tag = 'smem constant byte address 0x4 - core index']
  #allocation1 [shape = 'u32[144,128]{1,0:T(1,128)}', space=vmem, size = 0x12000, scoped, tag = 'internal scratch']
  #allocation2 [shape = 'f32[6,10,10,128]{3,2,1,0:T(8,128)}', space=vmem, size = 0x78000, scoped, tag = 'scratch operand']
  %s0 = inlined_call_operand.hbm [shape: f32[2,2,6,8,8,128], index: 0, kind: input, shape index: {}]
  %s1 = inlined_call_operand.hbm [shape: f32[128,128], index: 1, kind: input, shape index: {}]
  %s2 = inlined_call_operand.vmem [shape: f32[1,128], index: 2, kind: input, shape index: {}]
  %s3 = inlined_call_operand.hbm [shape: f32[27,1,128], index: 3, kind: input, shape index: {}]
  %s4 = inlined_call_operand.vmem [shape: f32[1,128], index: 4, kind: input, shape index: {}]
  %s5 = inlined_call_operand.hbm [shape: f32[128,128], index: 5, kind: input, shape index: {}]
  %s6 = inlined_call_operand.vmem [shape: f32[1,128], index: 6, kind: input, shape index: {}]
  %s7 = inlined_call_operand.hbm [shape: f32[2,8,8,8,128], index: 7, kind: output, shape index: {}]
  %s8 = sld [smem:[#allocation0]]
  $region85: #{tpu_custom_call.1} parent=0
    _
  %s10 = ssub.s32 1, %s8
  %s11 = scalar_select 0, %s10, %s8
  $region1: #{tpu_custom_call.1} parent=0
    #allocation3 [shape = 'u8[393216]{0}', space=vmem, size = 0x60000, scoped, tag = 'input window, operand 0']
    #allocation4 [shape = 's32[2]{0}', space=sflag, size = 0x8, scoped, tag = 'scoped memory for tpu_custom_call.1']
    #allocation5 [shape = 's32[2]{0}', space=sflag, size = 0x8, scoped, tag = 'scoped memory for tpu_custom_call.1']
    #allocation6 [shape = 'u8[65536]{0}', space=vmem, size = 0x10000, scoped, tag = 'input window, operand 1, single buffered']
    #allocation7 [shape = 's32[1]{0}', space=sflag, size = 0x4, scoped, tag = 'scoped memory for tpu_custom_call.1']
    #allocation8 [shape = 'u8[13824]{0}', space=vmem, size = 0x3800, scoped, tag = 'input window, operand 3, single buffered']
    #allocation9 [shape = 'u8[65536]{0}', space=vmem, size = 0x10000, scoped, tag = 'input window, operand 5, single buffered']
    #allocation10 [shape = 's32[1]{0}', space=sflag, size = 0x4, scoped, tag = 'scoped memory for tpu_custom_call.1']
    #allocation11 [shape = 'u8[262144]{0}', space=vmem, size = 0x40000, scoped, tag = 'output window, operand 0']
    %12 = vsyncpa [#allocation4], 0
    %s13 = scalar_lea.sflag [#allocation4], 1
    %14 = vsyncpa %s13, 0
    %15 = vsyncpa [#allocation7], 0
    %16 = vsyncpa [#allocation10], 0
    %17 = vsyncpa [#allocation5], 0
    %s18 = scalar_lea.sflag [#allocation5], 1
    %19 = vsyncpa %s18, 0
    loop: start=0, step=1, limit=6
    $region2: #{tpu_custom_call.1} parent=1 // loop_pre_header
      _
    $region3: #{tpu_custom_call.1} parent=1 // loop_header
      %s21 = sphi 0, %s25
      %p22 = scmp.ge.s32.totalorder %s21, 6
      %s28 = sphi 0, %s40
      %s29 = sphi 0, %s36
      %s30 = sphi 0, %s28
      %s31 = sphi 0, %s29
      %s32 = sphi 0, %s30
      %s33 = sphi 0, %s31
      %s45 = sphi 0, %s47
      %s48 = sphi 0, %s45
      %s49 = sphi 0, %s48
      %s65 = sphi 0, %s49
      %s69 = sphi 0, %s69
      %s71 = sphi 0, %s69
      %s72 = sphi 0, %s71
      %s86 = sphi 0, %s72
      %s90 = sphi 0, %s90
      %s92 = sphi 0, %s90
      %s93 = sphi 0, %s92
      %s107 = sphi 0, %s93
      %s111 = sphi 0, %s111
      %s113 = sphi 0, %s111
      %s114 = sphi 0, %s113
      %s128 = sphi 0, %s114
      %s132 = sphi 0, %s132
      %s134 = sphi 0, %s132
      %s135 = sphi 0, %s134
      %s149 = sphi 0, %s135
      %s153 = sphi 0, %s153
      %s155 = sphi 0, %s153
      %s156 = sphi 0, %s155
      %s170 = sphi 0, %s156
      %s174 = sphi 0, %s174
      %s176 = sphi 0, %s174
      %s177 = sphi 0, %s176
      %s191 = sphi 0, %s177
      %s199 = sphi 0, %s201
      %s202 = sphi 0, %s199
      %s203 = sphi 0, %s202
      %s219 = sphi 0, %s203
    $region4: #{tpu_custom_call.1} parent=1 // loop_header_branch
      %24 = sbr.rel (%p22) target = $region8
    $region5: #{tpu_custom_call.1} parent=1 // loop_body
      %s26 = ssub.s32 %s21, 1
      %s27 = ssub.s32 %s21, 2
      %s34 = sadd.s32 1, %s29
      %p35 = scmp.ge.s32.totalorder %s34, 2
      %s36 = scalar_select %p35, 0, %s34
      %s37 = sadd.s32 1, %s28
      %s38 = scalar_select %p35, %s37, %s28
      %p39 = scmp.ge.s32.totalorder %s38, 2
      %s40 = scalar_select %p39, 0, %s38
      %s41 = ssub.s32 %s28, %s40
      %s42 = ssub.s32 %s29, %s36
      %s43 = sor.u32 %s41, %s42
      %p44 = scmp.eq.s32.totalorder %s43, 0
      %s46 = sadd.s32 %s45, 1
      %s47 = scalar_select %p44, %s45, %s46
      %p50 = pneg %p44
      %p51 = scmp.eq.s32.totalorder %s21, 3
      %p52 = por %p50, %p51
      %p53 = scmp.ne.s32.totalorder %s45, %s48
      %p54 = scmp.eq.s32.totalorder %s21, 0
      %p55 = por %p53, %p54
      %p56 = scmp.ne.s32.totalorder %s45, %s48
      %p57 = scmp.eq.s32.totalorder %s26, 3
      %p58 = por %p56, %p57
      %p59 = scmp.ne.s32.totalorder %s48, %s49
      %p60 = scmp.eq.s32.totalorder %s26, 0
      %p61 = por %p59, %p60
      %p62 = scmp.ne.s32.totalorder %s48, %s49
      %p63 = scmp.eq.s32.totalorder %s27, 3
      %p64 = por %p62, %p63
      %p66 = scmp.ne.s32.totalorder %s49, %s65
      %p67 = scmp.eq.s32.totalorder %s27, 0
      %p68 = por %p66, %p67
      %s70 = sadd.s32 %s69, 1
      %p73 = scmp.eq.s32.totalorder %s21, 3
      %p74 = scmp.ne.s32.totalorder %s69, %s71
      %p75 = scmp.eq.s32.totalorder %s21, 0
      %p76 = por %p74, %p75
      %p77 = scmp.ne.s32.totalorder %s69, %s71
      %p78 = scmp.eq.s32.totalorder %s26, 3
      %p79 = por %p77, %p78
      %p80 = scmp.ne.s32.totalorder %s71, %s72
      %p81 = scmp.eq.s32.totalorder %s26, 0
      %p82 = por %p80, %p81
      %p83 = scmp.ne.s32.totalorder %s71, %s72
      %p84 = scmp.eq.s32.totalorder %s27, 3
      %p85 = por %p83, %p84
      %p87 = scmp.ne.s32.totalorder %s72, %s86
      %p88 = scmp.eq.s32.totalorder %s27, 0
      %p89 = por %p87, %p88
      %s91 = sadd.s32 %s90, 1
      %p94 = scmp.eq.s32.totalorder %s21, 3
      %p95 = scmp.ne.s32.totalorder %s90, %s92
      %p96 = scmp.eq.s32.totalorder %s21, 0
      %p97 = por %p95, %p96
      %p98 = scmp.ne.s32.totalorder %s90, %s92
      %p99 = scmp.eq.s32.totalorder %s26, 3
      %p100 = por %p98, %p99
      %p101 = scmp.ne.s32.totalorder %s92, %s93
      %p102 = scmp.eq.s32.totalorder %s26, 0
      %p103 = por %p101, %p102
      %p104 = scmp.ne.s32.totalorder %s92, %s93
      %p105 = scmp.eq.s32.totalorder %s27, 3
      %p106 = por %p104, %p105
      %p108 = scmp.ne.s32.totalorder %s93, %s107
      %p109 = scmp.eq.s32.totalorder %s27, 0
      %p110 = por %p108, %p109
      %s112 = sadd.s32 %s111, 1
      %p115 = scmp.eq.s32.totalorder %s21, 3
      %p116 = scmp.ne.s32.totalorder %s111, %s113
      %p117 = scmp.eq.s32.totalorder %s21, 0
      %p118 = por %p116, %p117
      %p119 = scmp.ne.s32.totalorder %s111, %s113
      %p120 = scmp.eq.s32.totalorder %s26, 3
      %p121 = por %p119, %p120
      %p122 = scmp.ne.s32.totalorder %s113, %s114
      %p123 = scmp.eq.s32.totalorder %s26, 0
      %p124 = por %p122, %p123
      %p125 = scmp.ne.s32.totalorder %s113, %s114
      %p126 = scmp.eq.s32.totalorder %s27, 3
      %p127 = por %p125, %p126
      %p129 = scmp.ne.s32.totalorder %s114, %s128
      %p130 = scmp.eq.s32.totalorder %s27, 0
      %p131 = por %p129, %p130
      %s133 = sadd.s32 %s132, 1
      %p136 = scmp.eq.s32.totalorder %s21, 3
      %p137 = scmp.ne.s32.totalorder %s132, %s134
      %p138 = scmp.eq.s32.totalorder %s21, 0
      %p139 = por %p137, %p138
      %p140 = scmp.ne.s32.totalorder %s132, %s134
      %p141 = scmp.eq.s32.totalorder %s26, 3
      %p142 = por %p140, %p141
      %p143 = scmp.ne.s32.totalorder %s134, %s135
      %p144 = scmp.eq.s32.totalorder %s26, 0
      %p145 = por %p143, %p144
      %p146 = scmp.ne.s32.totalorder %s134, %s135
      %p147 = scmp.eq.s32.totalorder %s27, 3
      %p148 = por %p146, %p147
      %p150 = scmp.ne.s32.totalorder %s135, %s149
      %p151 = scmp.eq.s32.totalorder %s27, 0
      %p152 = por %p150, %p151
      %s154 = sadd.s32 %s153, 1
      %p157 = scmp.eq.s32.totalorder %s21, 3
      %p158 = scmp.ne.s32.totalorder %s153, %s155
      %p159 = scmp.eq.s32.totalorder %s21, 0
      %p160 = por %p158, %p159
      %p161 = scmp.ne.s32.totalorder %s153, %s155
      %p162 = scmp.eq.s32.totalorder %s26, 3
      %p163 = por %p161, %p162
      %p164 = scmp.ne.s32.totalorder %s155, %s156
      %p165 = scmp.eq.s32.totalorder %s26, 0
      %p166 = por %p164, %p165
      %p167 = scmp.ne.s32.totalorder %s155, %s156
      %p168 = scmp.eq.s32.totalorder %s27, 3
      %p169 = por %p167, %p168
      %p171 = scmp.ne.s32.totalorder %s156, %s170
      %p172 = scmp.eq.s32.totalorder %s27, 0
      %p173 = por %p171, %p172
      %s175 = sadd.s32 %s174, 1
      %p178 = scmp.eq.s32.totalorder %s21, 3
      %p179 = scmp.ne.s32.totalorder %s174, %s176
      %p180 = scmp.eq.s32.totalorder %s21, 0
      %p181 = por %p179, %p180
      %p182 = scmp.ne.s32.totalorder %s174, %s176
      %p183 = scmp.eq.s32.totalorder %s26, 3
      %p184 = por %p182, %p183
      %p185 = scmp.ne.s32.totalorder %s176, %s177
      %p186 = scmp.eq.s32.totalorder %s26, 0
      %p187 = por %p185, %p186
      %p188 = scmp.ne.s32.totalorder %s176, %s177
      %p189 = scmp.eq.s32.totalorder %s27, 3
      %p190 = por %p188, %p189
      %p192 = scmp.ne.s32.totalorder %s177, %s191
      %p193 = scmp.eq.s32.totalorder %s27, 0
      %p194 = por %p192, %p193
      %s195 = ssub.s32 %s28, %s40
      %s196 = ssub.s32 %s29, %s36
      %s197 = sor.u32 %s195, %s196
      %p198 = scmp.eq.s32.totalorder %s197, 0
      %s200 = sadd.s32 %s199, 1
      %s201 = scalar_select %p198, %s199, %s200
      %p204 = pneg %p198
      %p205 = scmp.eq.s32.totalorder %s21, 3
      %p206 = por %p204, %p205
      %p207 = scmp.ne.s32.totalorder %s199, %s202
      %p208 = scmp.eq.s32.totalorder %s21, 0
      %p209 = por %p207, %p208
      %p210 = scmp.ne.s32.totalorder %s199, %s202
      %p211 = scmp.eq.s32.totalorder %s26, 3
      %p212 = por %p210, %p211
      %p213 = scmp.ne.s32.totalorder %s202, %s203
      %p214 = scmp.eq.s32.totalorder %s26, 0
      %p215 = por %p213, %p214
      %p216 = scmp.ne.s32.totalorder %s202, %s203
      %p217 = scmp.eq.s32.totalorder %s27, 3
      %p218 = por %p216, %p217
      %p220 = scmp.ne.s32.totalorder %s203, %s219
      %p221 = scmp.eq.s32.totalorder %s27, 0
      %p222 = por %p220, %p221
      %p223 = scmp.le.s32.totalorder 1, %s21
      %p224 = scmp.lt.s32.totalorder %s21, 5
      %p225 = pnand %p223, %p224
      %p226 = pneg %p225
      // Predicated region
      $region9: #{tpu_custom_call.1} parent=5 // pred_check
        _
      $region10: #{tpu_custom_call.1} parent=5 // pred_check_branch
        %228 = sbr.rel (%p225) target = $region12
      $region11: #{tpu_custom_call.1} parent=5 // pred_region
        %s229 = ssub.s32 %s21, 1
        // Predicated region
        $region13: #{tpu_custom_call.1} parent=11 // pred_check
          %p230 = pneg %p82
        $region14: #{tpu_custom_call.1} parent=11 // pred_check_branch
          %232 = sbr.rel (%p230) target = $region16
        $region15: #{tpu_custom_call.1} parent=11 // pred_region
          %s234 = ssub.s32 2048, 2048
          %235 = vsyncadd [#allocation7], %s234
          %s236 = sshll.u32 [#allocation6], 4
          %s237 = int_to_ptr.vmem [resolvable:$true] %s236
          %242 = dma.hbm_to_vmem [thread:$0]  %s1, 2048, %s237, [#allocation7], 128, 128, 8
        $region16: #{tpu_custom_call.1} parent=11 // pred_fallthru
          _
        // Predicated region
        $region17: #{tpu_custom_call.1} parent=11 // pred_check
          %p243 = pneg %p103
        $region18: #{tpu_custom_call.1} parent=11 // pred_check_branch
          %245 = sbr.rel (%p243) target = $region20
        $region19: #{tpu_custom_call.1} parent=11 // pred_region
          _
        $region20: #{tpu_custom_call.1} parent=11 // pred_fallthru
          _
        // Predicated region
        $region21: #{tpu_custom_call.1} parent=11 // pred_check
          %p246 = pneg %p124
        $region22: #{tpu_custom_call.1} parent=11 // pred_check_branch
          %248 = sbr.rel (%p246) target = $region24
        $region23: #{tpu_custom_call.1} parent=11 // pred_region
          %s250 = ssub.s32 432, 432
          %251 = vsyncadd [#allocation7], %s250
          %s252 = sshll.u32 [#allocation8], 4
          %s253 = int_to_ptr.vmem [resolvable:$true] %s252
          %258 = dma.hbm_to_vmem [thread:$0]  %s3, 432, %s253, [#allocation7], 16, 16, 1
        $region24: #{tpu_custom_call.1} parent=11 // pred_fallthru
          _
        // Predicated region
        $region25: #{tpu_custom_call.1} parent=11 // pred_check
          %p259 = pneg %p145
        $region26: #{tpu_custom_call.1} parent=11 // pred_check_branch
          %261 = sbr.rel (%p259) target = $region28
        $region27: #{tpu_custom_call.1} parent=11 // pred_region
          _
        $region28: #{tpu_custom_call.1} parent=11 // pred_fallthru
          _
        // Predicated region
        $region29: #{tpu_custom_call.1} parent=11 // pred_check
          %p262 = pneg %p166
        $region30: #{tpu_custom_call.1} parent=11 // pred_check_branch
          %264 = sbr.rel (%p262) target = $region32
        $region31: #{tpu_custom_call.1} parent=11 // pred_region
          %s266 = ssub.s32 2048, 2048
          %267 = vsyncadd [#allocation10], %s266
          %s268 = sshll.u32 [#allocation9], 4
          %s269 = int_to_ptr.vmem [resolvable:$true] %s268
          %274 = dma.hbm_to_vmem [thread:$0]  %s5, 2048, %s269, [#allocation10], 128, 128, 8
        $region32: #{tpu_custom_call.1} parent=11 // pred_fallthru
          _
        // Predicated region
        $region33: #{tpu_custom_call.1} parent=11 // pred_check
          %p275 = pneg %p187
        $region34: #{tpu_custom_call.1} parent=11 // pred_check_branch
          %277 = sbr.rel (%p275) target = $region36
        $region35: #{tpu_custom_call.1} parent=11 // pred_region
          _
        $region36: #{tpu_custom_call.1} parent=11 // pred_fallthru
          _
      $region12: #{tpu_custom_call.1} parent=5 // pred_fallthru
        _
      %p278 = scmp.lt.s32.totalorder %s21, 4
      // Predicated region
      $region37: #{tpu_custom_call.1} parent=5 // pred_check
        %p279 = pneg %p278
      $region38: #{tpu_custom_call.1} parent=5 // pred_check_branch
        %281 = sbr.rel (%p279) target = $region40
      $region39: #{tpu_custom_call.1} parent=5 // pred_region
        // Predicated region
        $region41: #{tpu_custom_call.1} parent=39 // pred_check
          %p282 = pneg %p55
        $region42: #{tpu_custom_call.1} parent=39 // pred_check_branch
          %284 = sbr.rel (%p282) target = $region44
        $region43: #{tpu_custom_call.1} parent=39 // pred_region
          %s285 = sand.u32 %s45, 1
          %s286 = scalar_lea.sflag [#allocation4], %s285
          %s287 = sand.u32 %s45, 1
          %s288 = smul.addr %s287, 384
          %s289 = scalar_lea.vmem [#allocation3], %s288
          %s291 = ssub.s32 6144, 6144
          %292 = vsyncadd %s286, %s291
          %s293 = smul.addr %s29, 48
          %s294 = smul.addr %s28, 96
          %s295 = sadd.s32 %s293, %s294
          %s296 = smul.addr %s295, 128
          %s297 = scalar_lea.hbm %s0, %s296
          %s298 = sshll.u32 %s289, 4
          %s299 = int_to_ptr.vmem [resolvable:$true] %s298
          %304 = dma.hbm_to_vmem [thread:$0]  %s297, 6144, %s299, %s286, 128, 128, 8
        $region44: #{tpu_custom_call.1} parent=39 // pred_fallthru
          _
      $region40: #{tpu_custom_call.1} parent=5 // pred_fallthru
        _
      %p305 = scmp.le.s32.totalorder 1, %s21
      %p306 = scmp.lt.s32.totalorder %s21, 5
      %p307 = pnand %p305, %p306
      %p308 = pneg %p307
      // Predicated region
      $region45: #{tpu_custom_call.1} parent=5 // pred_check
        _
      $region46: #{tpu_custom_call.1} parent=5 // pred_check_branch
        %310 = sbr.rel (%p307) target = $region48
      $region47: #{tpu_custom_call.1} parent=5 // pred_region
        %s311 = ssub.s32 %s21, 1
        %s312 = sand.u32 %s48, 1
        %s313 = scalar_lea.sflag [#allocation4], %s312
        %s314 = sand.u32 %s48, 1
        %s315 = smul.addr %s314, 384
        %s316 = scalar_lea.vmem [#allocation3], %s315
        // Predicated region
        $region49: #{tpu_custom_call.1} parent=47 // pred_check
          %p317 = pneg %p61
        $region50: #{tpu_custom_call.1} parent=47 // pred_check_branch
          %319 = sbr.rel (%p317) target = $region52
        $region51: #{tpu_custom_call.1} parent=47 // pred_region
          %320 = dma.done %s313, 6144
        $region52: #{tpu_custom_call.1} parent=47 // pred_fallthru
          _
        // Predicated region
        $region53: #{tpu_custom_call.1} parent=47 // pred_check
          %p321 = pneg %p82
        $region54: #{tpu_custom_call.1} parent=47 // pred_check_branch
          %323 = sbr.rel (%p321) target = $region56
        $region55: #{tpu_custom_call.1} parent=47 // pred_region
          %324 = dma.done [#allocation7], 2048
        $region56: #{tpu_custom_call.1} parent=47 // pred_fallthru
          _
        // Predicated region
        $region57: #{tpu_custom_call.1} parent=47 // pred_check
          %p325 = pneg %p124
        $region58: #{tpu_custom_call.1} parent=47 // pred_check_branch
          %327 = sbr.rel (%p325) target = $region60
        $region59: #{tpu_custom_call.1} parent=47 // pred_region
          %328 = dma.done [#allocation7], 432
        $region60: #{tpu_custom_call.1} parent=47 // pred_fallthru
          _
        // Predicated region
        $region61: #{tpu_custom_call.1} parent=47 // pred_check
          %p329 = pneg %p166
        $region62: #{tpu_custom_call.1} parent=47 // pred_check_branch
          %331 = sbr.rel (%p329) target = $region64
        $region63: #{tpu_custom_call.1} parent=47 // pred_region
          %332 = dma.done [#allocation10], 2048
        $region64: #{tpu_custom_call.1} parent=47 // pred_fallthru
          _
        %s333 = sand.u32 %s48, 1
        %s334 = scalar_lea.sflag [#allocation4], %s333
        %s335 = sand.u32 %s48, 1
        %s336 = smul.addr %s335, 384
        %s337 = scalar_lea.vmem [#allocation3], %s336
        %p338 = pneg %p61
        %p339 = pneg %p58
        %p340 = pneg %p82
        %p341 = pneg %p79
        %p342 = pneg %p103
        %p343 = pneg %p100
        %p344 = pneg %p124
        %p345 = pneg %p121
        %p346 = pneg %p145
        %p347 = pneg %p142
        %p348 = pneg %p166
        %p349 = pneg %p163
        %p350 = pneg %p187
        %p351 = pneg %p184
        %p352 = pneg %p215
        %p353 = pneg %p212
        %s354 = sand.u32 %s202, 1
        %s355 = scalar_lea.sflag [#allocation5], %s354
        %s356 = sand.u32 %s202, 1
        %s357 = smul.addr %s356, 256
        %s358 = scalar_lea.vmem [#allocation11], %s357
        %s359 = smul.u32 4, %s31
        %v360 = vld [vmem:[%s316] sm:$0xff]
        %v361 = vld [vmem:[%s316 + $0x8] sm:$0xff]
        %v362 = vld [vmem:[%s316 + $0x10] sm:$0xff]
        %v363 = vld [vmem:[%s316 + $0x18] sm:$0xff]
        %v364 = vld [vmem:[%s316 + $0x20] sm:$0xff]
        %v365 = vld [vmem:[%s316 + $0x28] sm:$0xff]
        %v366 = vld [vmem:[%s316 + $0x30] sm:$0xff]
        %v367 = vld [vmem:[%s316 + $0x38] sm:$0xff]
        %v368 = vld [vmem:[%s316 + $0x40] sm:$0xff]
        %v369 = vld [vmem:[%s316 + $0x48] sm:$0xff]
        %v370 = vld [vmem:[%s316 + $0x50] sm:$0xff]
        %v371 = vld [vmem:[%s316 + $0x58] sm:$0xff]
        %v372 = vld [vmem:[%s316 + $0x60] sm:$0xff]
        %v373 = vld [vmem:[%s316 + $0x68] sm:$0xff]
        %v374 = vld [vmem:[%s316 + $0x70] sm:$0xff]
        %v375 = vld [vmem:[%s316 + $0x78] sm:$0xff]
        %v376 = vld [vmem:[%s316 + $0x80] sm:$0xff]
        %v377 = vld [vmem:[%s316 + $0x88] sm:$0xff]
        %v378 = vld [vmem:[%s316 + $0x90] sm:$0xff]
        %v379 = vld [vmem:[%s316 + $0x98] sm:$0xff]
        %v380 = vld [vmem:[%s316 + $0xa0] sm:$0xff]
        %v381 = vld [vmem:[%s316 + $0xa8] sm:$0xff]
        %v382 = vld [vmem:[%s316 + $0xb0] sm:$0xff]
        %v383 = vld [vmem:[%s316 + $0xb8] sm:$0xff]
        %v384 = vld [vmem:[%s316 + $0xc0] sm:$0xff]
        %v385 = vld [vmem:[%s316 + $0xc8] sm:$0xff]
        %v386 = vld [vmem:[%s316 + $0xd0] sm:$0xff]
        %v387 = vld [vmem:[%s316 + $0xd8] sm:$0xff]
        %v388 = vld [vmem:[%s316 + $0xe0] sm:$0xff]
        %v389 = vld [vmem:[%s316 + $0xe8] sm:$0xff]
        %v390 = vld [vmem:[%s316 + $0xf0] sm:$0xff]
        %v391 = vld [vmem:[%s316 + $0xf8] sm:$0xff]
        %v392 = vld [vmem:[%s316 + $0x100] sm:$0xff]
        %v393 = vld [vmem:[%s316 + $0x108] sm:$0xff]
        %v394 = vld [vmem:[%s316 + $0x110] sm:$0xff]
        %v395 = vld [vmem:[%s316 + $0x118] sm:$0xff]
        %v396 = vld [vmem:[%s316 + $0x120] sm:$0xff]
        %v397 = vld [vmem:[%s316 + $0x128] sm:$0xff]
        %v398 = vld [vmem:[%s316 + $0x130] sm:$0xff]
        %v399 = vld [vmem:[%s316 + $0x138] sm:$0xff]
        %v400 = vld [vmem:[%s316 + $0x140] sm:$0xff]
        %v401 = vld [vmem:[%s316 + $0x148] sm:$0xff]
        %v402 = vld [vmem:[%s316 + $0x150] sm:$0xff]
        %v403 = vld [vmem:[%s316 + $0x158] sm:$0xff]
        %v404 = vld [vmem:[%s316 + $0x160] sm:$0xff]
        %v405 = vld [vmem:[%s316 + $0x168] sm:$0xff]
        %v406 = vld [vmem:[%s316 + $0x170] sm:$0xff]
        %v407 = vld [vmem:[%s316 + $0x178] sm:$0xff]
        %v408 = vld [vmem:[#allocation6] sm:$0xff]
        %v409 = vld [vmem:[#allocation6 + $0x8] sm:$0xff]
        %v410 = vld [vmem:[#allocation6 + $0x10] sm:$0xff]
        %v411 = vld [vmem:[#allocation6 + $0x18] sm:$0xff]
        %v412 = vld [vmem:[#allocation6 + $0x20] sm:$0xff]
        %v413 = vld [vmem:[#allocation6 + $0x28] sm:$0xff]
        %v414 = vld [vmem:[#allocation6 + $0x30] sm:$0xff]
        %v415 = vld [vmem:[#allocation6 + $0x38] sm:$0xff]
        %v416 = vld [vmem:[#allocation6 + $0x40] sm:$0xff]
        %v417 = vld [vmem:[#allocation6 + $0x48] sm:$0xff]
        %v418 = vld [vmem:[#allocation6 + $0x50] sm:$0xff]
        %v419 = vld [vmem:[#allocation6 + $0x58] sm:$0xff]
        %v420 = vld [vmem:[#allocation6 + $0x60] sm:$0xff]
        %v421 = vld [vmem:[#allocation6 + $0x68] sm:$0xff]
        %v422 = vld [vmem:[#allocation6 + $0x70] sm:$0xff]
        %v423 = vld [vmem:[#allocation6 + $0x78] sm:$0xff]
        %v424 = vld [vmem:[%s2] sm:$0x1]
        %v426 = vlaneseq
        %v427 = vshrl.u32 %v426, 7
        %v428 = vsub.s32 0, %v427
        %v429 = vrot.slane %v424, %v428
        %431 = vmatprep.subr.mxu0 0.0
        %432 = vmatpush1.msra.mxu0 %v423
        %433 = vmatprep.subr.mxu0 0.0
        %434 = vmatpush1.msra.mxu0 %v422
        %435 = vmatprep.subr.mxu0 0.0
        %436 = vmatpush1.msra.mxu0 %v421
        %437 = vmatprep.subr.mxu0 0.0
        %438 = vmatpush1.msra.mxu0 %v420
        %439 = vmatprep.subr.mxu0 0.0
        %440 = vmatpush1.msra.mxu0 %v419
        %441 = vmatprep.subr.mxu0 0.0
        %442 = vmatpush1.msra.mxu0 %v418
        %443 = vmatprep.subr.mxu0 0.0
        %444 = vmatpush1.msra.mxu0 %v417
        %445 = vmatprep.subr.mxu0 0.0
        %446 = vmatpush1.msra.mxu0 %v416
        %447 = vmatprep.subr.mxu0 0.0
        %448 = vmatpush1.msra.mxu0 %v415
        %449 = vmatprep.subr.mxu0 0.0
        %450 = vmatpush1.msra.mxu0 %v414
        %451 = vmatprep.subr.mxu0 0.0
        %452 = vmatpush1.msra.mxu0 %v413
        %453 = vmatprep.subr.mxu0 0.0
        %454 = vmatpush1.msra.mxu0 %v412
        %455 = vmatprep.subr.mxu0 0.0
        %456 = vmatpush1.msra.mxu0 %v411
        %457 = vmatprep.subr.mxu0 0.0
        %458 = vmatpush1.msra.mxu0 %v410
        %459 = vmatprep.subr.mxu0 0.0
        %460 = vmatpush1.msra.mxu0 %v409
        %461 = vmatprep.subr.mxu0 0.0
        %462 = vmatpush1.msra.mxu0 %v408
        %463 = vmatprep.subr.mxu0 0.0
        %464 = vmatpush2.msra.mxu0 0.0
        %465 = vmatprep.subr.mxu0 0.0
        %466 = vmatpush2.msra.mxu0 0.0
        %467 = vmatprep.subr.mxu0 0.0
        %468 = vmatpush2.msra.mxu0 0.0
        %469 = vmatprep.subr.mxu0 0.0
        %470 = vmatpush2.msra.mxu0 0.0
        %471 = vmatprep.subr.mxu0 0.0
        %472 = vmatpush2.msra.mxu0 0.0
        %473 = vmatprep.subr.mxu0 0.0
        %474 = vmatpush2.msra.mxu0 0.0
        %475 = vmatprep.subr.mxu0 0.0
        %476 = vmatpush2.msra.mxu0 0.0
        %477 = vmatprep.subr.mxu0 0.0
        %478 = vmatpush2.msra.mxu0 0.0
        %479 = vmatprep.subr.mxu0 0.0
        %480 = vmatpush2.msra.mxu0 0.0
        %481 = vmatprep.subr.mxu0 0.0
        %482 = vmatpush2.msra.mxu0 0.0
        %483 = vmatprep.subr.mxu0 0.0
        %484 = vmatpush2.msra.mxu0 0.0
        %485 = vmatprep.subr.mxu0 0.0
        %486 = vmatpush2.msra.mxu0 0.0
        %487 = vmatprep.subr.mxu0 0.0
        %488 = vmatpush2.msra.mxu0 0.0
        %489 = vmatprep.subr.mxu0 0.0
        %490 = vmatpush2.msra.mxu0 0.0
        %491 = vmatprep.subr.mxu0 0.0
        %492 = vmatpush2.msra.mxu0 0.0
        %493 = vmatprep.subr.mxu0 0.0
        %494 = vmatpush2.msra.mxu0 0.0
        %495 = vmatprep.mubr.f32.mxu0 0.0
        %496 = vmatmul.mubr.f32.gmra.mxu0 %v360
        %v497 = vpop.f32.mrf.mxu0
        %v498 = vadd.f32 %v429, %v497
        %v499 = vpop.f32.mrf.mxu0
        %500 = vmatprep.mubr.f32.mxu0 0.0
        %501 = vmatmul.mubr.f32.gmra.mxu0 %v361
        %v502 = vpop.f32.mrf.mxu0
        %v503 = vadd.f32 %v429, %v502
        %v504 = vpop.f32.mrf.mxu0
        %505 = vmatprep.mubr.f32.mxu0 0.0
        %506 = vmatmul.mubr.f32.gmra.mxu0 %v362
        %v507 = vpop.f32.mrf.mxu0
        %v508 = vadd.f32 %v429, %v507
        %v509 = vpop.f32.mrf.mxu0
        %510 = vmatprep.mubr.f32.mxu0 0.0
        %511 = vmatmul.mubr.f32.gmra.mxu0 %v363
        %v512 = vpop.f32.mrf.mxu0
        %v513 = vadd.f32 %v429, %v512
        %v514 = vpop.f32.mrf.mxu0
        %515 = vmatprep.mubr.f32.mxu0 0.0
        %516 = vmatmul.mubr.f32.gmra.mxu0 %v364
        %v517 = vpop.f32.mrf.mxu0
        %v518 = vadd.f32 %v429, %v517
        %v519 = vpop.f32.mrf.mxu0
        %520 = vmatprep.mubr.f32.mxu0 0.0
        %521 = vmatmul.mubr.f32.gmra.mxu0 %v365
        %v522 = vpop.f32.mrf.mxu0
        %v523 = vadd.f32 %v429, %v522
        %v524 = vpop.f32.mrf.mxu0
        %525 = vmatprep.mubr.f32.mxu0 0.0
        %526 = vmatmul.mubr.f32.gmra.mxu0 %v366
        %v527 = vpop.f32.mrf.mxu0
        %v528 = vadd.f32 %v429, %v527
        %v529 = vpop.f32.mrf.mxu0
        %530 = vmatprep.mubr.f32.mxu0 0.0
        %531 = vmatmul.mubr.f32.gmra.mxu0 %v367
        %v532 = vpop.f32.mrf.mxu0
        %v533 = vadd.f32 %v429, %v532
        %v534 = vpop.f32.mrf.mxu0
        %535 = vmatprep.mubr.f32.mxu0 0.0
        %536 = vmatmul.mubr.f32.gmra.mxu0 %v368
        %v537 = vpop.f32.mrf.mxu0
        %v538 = vadd.f32 %v429, %v537
        %v539 = vpop.f32.mrf.mxu0
        %540 = vmatprep.mubr.f32.mxu0 0.0
        %541 = vmatmul.mubr.f32.gmra.mxu0 %v369
        %v542 = vpop.f32.mrf.mxu0
        %v543 = vadd.f32 %v429, %v542
        %v544 = vpop.f32.mrf.mxu0
        %545 = vmatprep.mubr.f32.mxu0 0.0
        %546 = vmatmul.mubr.f32.gmra.mxu0 %v370
        %v547 = vpop.f32.mrf.mxu0
        %v548 = vadd.f32 %v429, %v547
        %v549 = vpop.f32.mrf.mxu0
        %550 = vmatprep.mubr.f32.mxu0 0.0
        %551 = vmatmul.mubr.f32.gmra.mxu0 %v371
        %v552 = vpop.f32.mrf.mxu0
        %v553 = vadd.f32 %v429, %v552
        %v554 = vpop.f32.mrf.mxu0
        %555 = vmatprep.mubr.f32.mxu0 0.0
        %556 = vmatmul.mubr.f32.gmra.mxu0 %v372
        %v557 = vpop.f32.mrf.mxu0
        %v558 = vadd.f32 %v429, %v557
        %v559 = vpop.f32.mrf.mxu0
        %560 = vmatprep.mubr.f32.mxu0 0.0
        %561 = vmatmul.mubr.f32.gmra.mxu0 %v373
        %v562 = vpop.f32.mrf.mxu0
        %v563 = vadd.f32 %v429, %v562
        %v564 = vpop.f32.mrf.mxu0
        %565 = vmatprep.mubr.f32.mxu0 0.0
        %566 = vmatmul.mubr.f32.gmra.mxu0 %v374
        %v567 = vpop.f32.mrf.mxu0
        %v568 = vadd.f32 %v429, %v567
        %v569 = vpop.f32.mrf.mxu0
        %570 = vmatprep.mubr.f32.mxu0 0.0
        %571 = vmatmul.mubr.f32.gmra.mxu0 %v375
        %v572 = vpop.f32.mrf.mxu0
        %v573 = vadd.f32 %v429, %v572
        %v574 = vpop.f32.mrf.mxu0
        %575 = vmatprep.mubr.f32.mxu0 0.0
        %576 = vmatmul.mubr.f32.gmra.mxu0 %v376
        %v577 = vpop.f32.mrf.mxu0
        %v578 = vadd.f32 %v429, %v577
        %v579 = vpop.f32.mrf.mxu0
        %580 = vmatprep.mubr.f32.mxu0 0.0
        %581 = vmatmul.mubr.f32.gmra.mxu0 %v377
        %v582 = vpop.f32.mrf.mxu0
        %v583 = vadd.f32 %v429, %v582
        %v584 = vpop.f32.mrf.mxu0
        %585 = vmatprep.mubr.f32.mxu0 0.0
        %586 = vmatmul.mubr.f32.gmra.mxu0 %v378
        %v587 = vpop.f32.mrf.mxu0
        %v588 = vadd.f32 %v429, %v587
        %v589 = vpop.f32.mrf.mxu0
        %590 = vmatprep.mubr.f32.mxu0 0.0
        %591 = vmatmul.mubr.f32.gmra.mxu0 %v379
        %v592 = vpop.f32.mrf.mxu0
        %v593 = vadd.f32 %v429, %v592
        %v594 = vpop.f32.mrf.mxu0
        %595 = vmatprep.mubr.f32.mxu0 0.0
        %596 = vmatmul.mubr.f32.gmra.mxu0 %v380
        %v597 = vpop.f32.mrf.mxu0
        %v598 = vadd.f32 %v429, %v597
        %v599 = vpop.f32.mrf.mxu0
        %600 = vmatprep.mubr.f32.mxu0 0.0
        %601 = vmatmul.mubr.f32.gmra.mxu0 %v381
        %v602 = vpop.f32.mrf.mxu0
        %v603 = vadd.f32 %v429, %v602
        %v604 = vpop.f32.mrf.mxu0
        %605 = vmatprep.mubr.f32.mxu0 0.0
        %606 = vmatmul.mubr.f32.gmra.mxu0 %v382
        %v607 = vpop.f32.mrf.mxu0
        %v608 = vadd.f32 %v429, %v607
        %v609 = vpop.f32.mrf.mxu0
        %610 = vmatprep.mubr.f32.mxu0 0.0
        %611 = vmatmul.mubr.f32.gmra.mxu0 %v383
        %v612 = vpop.f32.mrf.mxu0
        %v613 = vadd.f32 %v429, %v612
        %v614 = vpop.f32.mrf.mxu0
        %615 = vmatprep.mubr.f32.mxu0 0.0
        %616 = vmatmul.mubr.f32.gmra.mxu0 %v384
        %v617 = vpop.f32.mrf.mxu0
        %v618 = vadd.f32 %v429, %v617
        %v619 = vpop.f32.mrf.mxu0
        %620 = vmatprep.mubr.f32.mxu0 0.0
        %621 = vmatmul.mubr.f32.gmra.mxu0 %v385
        %v622 = vpop.f32.mrf.mxu0
        %v623 = vadd.f32 %v429, %v622
        %v624 = vpop.f32.mrf.mxu0
        %625 = vmatprep.mubr.f32.mxu0 0.0
        %626 = vmatmul.mubr.f32.gmra.mxu0 %v386
        %v627 = vpop.f32.mrf.mxu0
        %v628 = vadd.f32 %v429, %v627
        %v629 = vpop.f32.mrf.mxu0
        %630 = vmatprep.mubr.f32.mxu0 0.0
        %631 = vmatmul.mubr.f32.gmra.mxu0 %v387
        %v632 = vpop.f32.mrf.mxu0
        %v633 = vadd.f32 %v429, %v632
        %v634 = vpop.f32.mrf.mxu0
        %635 = vmatprep.mubr.f32.mxu0 0.0
        %636 = vmatmul.mubr.f32.gmra.mxu0 %v388
        %v637 = vpop.f32.mrf.mxu0
        %v638 = vadd.f32 %v429, %v637
        %v639 = vpop.f32.mrf.mxu0
        %640 = vmatprep.mubr.f32.mxu0 0.0
        %641 = vmatmul.mubr.f32.gmra.mxu0 %v389
        %v642 = vpop.f32.mrf.mxu0
        %v643 = vadd.f32 %v429, %v642
        %v644 = vpop.f32.mrf.mxu0
        %645 = vmatprep.mubr.f32.mxu0 0.0
        %646 = vmatmul.mubr.f32.gmra.mxu0 %v390
        %v647 = vpop.f32.mrf.mxu0
        %v648 = vadd.f32 %v429, %v647
        %v649 = vpop.f32.mrf.mxu0
        %650 = vmatprep.mubr.f32.mxu0 0.0
        %651 = vmatmul.mubr.f32.gmra.mxu0 %v391
        %v652 = vpop.f32.mrf.mxu0
        %v653 = vadd.f32 %v429, %v652
        %v654 = vpop.f32.mrf.mxu0
        %655 = vmatprep.mubr.f32.mxu0 0.0
        %656 = vmatmul.mubr.f32.gmra.mxu0 %v392
        %v657 = vpop.f32.mrf.mxu0
        %v658 = vadd.f32 %v429, %v657
        %v659 = vpop.f32.mrf.mxu0
        %660 = vmatprep.mubr.f32.mxu0 0.0
        %661 = vmatmul.mubr.f32.gmra.mxu0 %v393
        %v662 = vpop.f32.mrf.mxu0
        %v663 = vadd.f32 %v429, %v662
        %v664 = vpop.f32.mrf.mxu0
        %665 = vmatprep.mubr.f32.mxu0 0.0
        %666 = vmatmul.mubr.f32.gmra.mxu0 %v394
        %v667 = vpop.f32.mrf.mxu0
        %v668 = vadd.f32 %v429, %v667
        %v669 = vpop.f32.mrf.mxu0
        %670 = vmatprep.mubr.f32.mxu0 0.0
        %671 = vmatmul.mubr.f32.gmra.mxu0 %v395
        %v672 = vpop.f32.mrf.mxu0
        %v673 = vadd.f32 %v429, %v672
        %v674 = vpop.f32.mrf.mxu0
        %675 = vmatprep.mubr.f32.mxu0 0.0
        %676 = vmatmul.mubr.f32.gmra.mxu0 %v396
        %v677 = vpop.f32.mrf.mxu0
        %v678 = vadd.f32 %v429, %v677
        %v679 = vpop.f32.mrf.mxu0
        %680 = vmatprep.mubr.f32.mxu0 0.0
        %681 = vmatmul.mubr.f32.gmra.mxu0 %v397
        %v682 = vpop.f32.mrf.mxu0
        %v683 = vadd.f32 %v429, %v682
        %v684 = vpop.f32.mrf.mxu0
        %685 = vmatprep.mubr.f32.mxu0 0.0
        %686 = vmatmul.mubr.f32.gmra.mxu0 %v398
        %v687 = vpop.f32.mrf.mxu0
        %v688 = vadd.f32 %v429, %v687
        %v689 = vpop.f32.mrf.mxu0
        %690 = vmatprep.mubr.f32.mxu0 0.0
        %691 = vmatmul.mubr.f32.gmra.mxu0 %v399
        %v692 = vpop.f32.mrf.mxu0
        %v693 = vadd.f32 %v429, %v692
        %v694 = vpop.f32.mrf.mxu0
        %695 = vmatprep.mubr.f32.mxu0 0.0
        %696 = vmatmul.mubr.f32.gmra.mxu0 %v400
        %v697 = vpop.f32.mrf.mxu0
        %v698 = vadd.f32 %v429, %v697
        %v699 = vpop.f32.mrf.mxu0
        %700 = vmatprep.mubr.f32.mxu0 0.0
        %701 = vmatmul.mubr.f32.gmra.mxu0 %v401
        %v702 = vpop.f32.mrf.mxu0
        %v703 = vadd.f32 %v429, %v702
        %v704 = vpop.f32.mrf.mxu0
        %705 = vmatprep.mubr.f32.mxu0 0.0
        %706 = vmatmul.mubr.f32.gmra.mxu0 %v402
        %v707 = vpop.f32.mrf.mxu0
        %v708 = vadd.f32 %v429, %v707
        %v709 = vpop.f32.mrf.mxu0
        %710 = vmatprep.mubr.f32.mxu0 0.0
        %711 = vmatmul.mubr.f32.gmra.mxu0 %v403
        %v712 = vpop.f32.mrf.mxu0
        %v713 = vadd.f32 %v429, %v712
        %v714 = vpop.f32.mrf.mxu0
        %715 = vmatprep.mubr.f32.mxu0 0.0
        %716 = vmatmul.mubr.f32.gmra.mxu0 %v404
        %v717 = vpop.f32.mrf.mxu0
        %v718 = vadd.f32 %v429, %v717
        %v719 = vpop.f32.mrf.mxu0
        %720 = vmatprep.mubr.f32.mxu0 0.0
        %721 = vmatmul.mubr.f32.gmra.mxu0 %v405
        %v722 = vpop.f32.mrf.mxu0
        %v723 = vadd.f32 %v429, %v722
        %v724 = vpop.f32.mrf.mxu0
        %725 = vmatprep.mubr.f32.mxu0 0.0
        %726 = vmatmul.mubr.f32.gmra.mxu0 %v406
        %v727 = vpop.f32.mrf.mxu0
        %v728 = vadd.f32 %v429, %v727
        %v729 = vpop.f32.mrf.mxu0
        %730 = vmatprep.mubr.f32.mxu0 0.0
        %731 = vmatmul.mubr.f32.gmra.mxu0 %v407
        %v732 = vpop.f32.mrf.mxu0
        %v733 = vadd.f32 %v429, %v732
        %v734 = vpop.f32.mrf.mxu0
        %735 = vdwg.mxu0
        %736 = vst [vmem:[#allocation2] sm:$0xff] 0.0
        %737 = vst [vmem:[#allocation2 + $0x8] sm:$0x3] 0.0
        %738 = vst [vmem:[#allocation2 + $0x10] sm:$0xff] 0.0
        %739 = vst [vmem:[#allocation2 + $0x18] sm:$0x3] 0.0
        %740 = vst [vmem:[#allocation2 + $0x20] sm:$0xff] 0.0
        %741 = vst [vmem:[#allocation2 + $0x28] sm:$0x3] 0.0
        %742 = vst [vmem:[#allocation2 + $0x30] sm:$0xff] 0.0
        %743 = vst [vmem:[#allocation2 + $0x38] sm:$0x3] 0.0
        %744 = vst [vmem:[#allocation2 + $0x40] sm:$0xff] 0.0
        %745 = vst [vmem:[#allocation2 + $0x48] sm:$0x3] 0.0
        %746 = vst [vmem:[#allocation2 + $0x50] sm:$0xff] 0.0
        %747 = vst [vmem:[#allocation2 + $0x58] sm:$0x3] 0.0
        %748 = vst [vmem:[#allocation2 + $0x60] sm:$0xff] 0.0
        %749 = vst [vmem:[#allocation2 + $0x68] sm:$0x3] 0.0
        %750 = vst [vmem:[#allocation2 + $0x70] sm:$0xff] 0.0
        %751 = vst [vmem:[#allocation2 + $0x78] sm:$0x3] 0.0
        %752 = vst [vmem:[#allocation2 + $0x80] sm:$0xff] 0.0
        %753 = vst [vmem:[#allocation2 + $0x88] sm:$0x3] 0.0
        %754 = vst [vmem:[#allocation2 + $0x90] sm:$0xff] 0.0
        %755 = vst [vmem:[#allocation2 + $0x98] sm:$0x3] 0.0
        %756 = vst [vmem:[#allocation2 + $0xa0] sm:$0xff] 0.0
        %757 = vst [vmem:[#allocation2 + $0xa8] sm:$0x3] 0.0
        %758 = vst [vmem:[#allocation2 + $0xb0] sm:$0xff] 0.0
        %759 = vst [vmem:[#allocation2 + $0xb8] sm:$0x3] 0.0
        %760 = vst [vmem:[#allocation2 + $0xc0] sm:$0xff] 0.0
        %761 = vst [vmem:[#allocation2 + $0xc8] sm:$0x3] 0.0
        %762 = vst [vmem:[#allocation2 + $0xd0] sm:$0xff] 0.0
        %763 = vst [vmem:[#allocation2 + $0xd8] sm:$0x3] 0.0
        %764 = vst [vmem:[#allocation2 + $0xe0] sm:$0xff] 0.0
        %765 = vst [vmem:[#allocation2 + $0xe8] sm:$0x3] 0.0
        %766 = vst [vmem:[#allocation2 + $0xf0] sm:$0xff] 0.0
        %767 = vst [vmem:[#allocation2 + $0xf8] sm:$0x3] 0.0
        %768 = vst [vmem:[#allocation2 + $0x100] sm:$0xff] 0.0
        %769 = vst [vmem:[#allocation2 + $0x108] sm:$0x3] 0.0
        %770 = vst [vmem:[#allocation2 + $0x110] sm:$0xff] 0.0
        %771 = vst [vmem:[#allocation2 + $0x118] sm:$0x3] 0.0
        %772 = vst [vmem:[#allocation2 + $0x120] sm:$0xff] 0.0
        %773 = vst [vmem:[#allocation2 + $0x128] sm:$0x3] 0.0
        %774 = vst [vmem:[#allocation2 + $0x130] sm:$0xff] 0.0
        %775 = vst [vmem:[#allocation2 + $0x138] sm:$0x3] 0.0
        %776 = vst [vmem:[#allocation2 + $0x140] sm:$0xff] 0.0
        %777 = vst [vmem:[#allocation2 + $0x148] sm:$0x3] 0.0
        %778 = vst [vmem:[#allocation2 + $0x150] sm:$0xff] 0.0
        %779 = vst [vmem:[#allocation2 + $0x158] sm:$0x3] 0.0
        %780 = vst [vmem:[#allocation2 + $0x160] sm:$0xff] 0.0
        %781 = vst [vmem:[#allocation2 + $0x168] sm:$0x3] 0.0
        %782 = vst [vmem:[#allocation2 + $0x170] sm:$0xff] 0.0
        %783 = vst [vmem:[#allocation2 + $0x178] sm:$0x3] 0.0
        %784 = vst [vmem:[#allocation2 + $0x180] sm:$0xff] 0.0
        %785 = vst [vmem:[#allocation2 + $0x188] sm:$0x3] 0.0
        %786 = vst [vmem:[#allocation2 + $0x190] sm:$0xff] 0.0
        %787 = vst [vmem:[#allocation2 + $0x198] sm:$0x3] 0.0
        %788 = vst [vmem:[#allocation2 + $0x1a0] sm:$0xff] 0.0
        %789 = vst [vmem:[#allocation2 + $0x1a8] sm:$0x3] 0.0
        %790 = vst [vmem:[#allocation2 + $0x1b0] sm:$0xff] 0.0
        %791 = vst [vmem:[#allocation2 + $0x1b8] sm:$0x3] 0.0
        %792 = vst [vmem:[#allocation2 + $0x1c0] sm:$0xff] 0.0
        %793 = vst [vmem:[#allocation2 + $0x1c8] sm:$0x3] 0.0
        %794 = vst [vmem:[#allocation2 + $0x1d0] sm:$0xff] 0.0
        %795 = vst [vmem:[#allocation2 + $0x1d8] sm:$0x3] 0.0
        %796 = vst [vmem:[#allocation2 + $0x1e0] sm:$0xff] 0.0
        %797 = vst [vmem:[#allocation2 + $0x1e8] sm:$0x3] 0.0
        %798 = vst [vmem:[#allocation2 + $0x1f0] sm:$0xff] 0.0
        %799 = vst [vmem:[#allocation2 + $0x1f8] sm:$0x3] 0.0
        %800 = vst [vmem:[#allocation2 + $0x200] sm:$0xff] 0.0
        %801 = vst [vmem:[#allocation2 + $0x208] sm:$0x3] 0.0
        %802 = vst [vmem:[#allocation2 + $0x210] sm:$0xff] 0.0
        %803 = vst [vmem:[#allocation2 + $0x218] sm:$0x3] 0.0
        %804 = vst [vmem:[#allocation2 + $0x220] sm:$0xff] 0.0
        %805 = vst [vmem:[#allocation2 + $0x228] sm:$0x3] 0.0
        %806 = vst [vmem:[#allocation2 + $0x230] sm:$0xff] 0.0
        %807 = vst [vmem:[#allocation2 + $0x238] sm:$0x3] 0.0
        %808 = vst [vmem:[#allocation2 + $0x240] sm:$0xff] 0.0
        %809 = vst [vmem:[#allocation2 + $0x248] sm:$0x3] 0.0
        %810 = vst [vmem:[#allocation2 + $0x250] sm:$0xff] 0.0
        %811 = vst [vmem:[#allocation2 + $0x258] sm:$0x3] 0.0
        %812 = vst [vmem:[#allocation2 + $0x260] sm:$0xff] 0.0
        %813 = vst [vmem:[#allocation2 + $0x268] sm:$0x3] 0.0
        %814 = vst [vmem:[#allocation2 + $0x270] sm:$0xff] 0.0
        %815 = vst [vmem:[#allocation2 + $0x278] sm:$0x3] 0.0
        %816 = vst [vmem:[#allocation2 + $0x280] sm:$0xff] 0.0
        %817 = vst [vmem:[#allocation2 + $0x288] sm:$0x3] 0.0
        %818 = vst [vmem:[#allocation2 + $0x290] sm:$0xff] 0.0
        %819 = vst [vmem:[#allocation2 + $0x298] sm:$0x3] 0.0
        %820 = vst [vmem:[#allocation2 + $0x2a0] sm:$0xff] 0.0
        %821 = vst [vmem:[#allocation2 + $0x2a8] sm:$0x3] 0.0
        %822 = vst [vmem:[#allocation2 + $0x2b0] sm:$0xff] 0.0
        %823 = vst [vmem:[#allocation2 + $0x2b8] sm:$0x3] 0.0
        %824 = vst [vmem:[#allocation2 + $0x2c0] sm:$0xff] 0.0
        %825 = vst [vmem:[#allocation2 + $0x2c8] sm:$0x3] 0.0
        %826 = vst [vmem:[#allocation2 + $0x2d0] sm:$0xff] 0.0
        %827 = vst [vmem:[#allocation2 + $0x2d8] sm:$0x3] 0.0
        %828 = vst [vmem:[#allocation2 + $0x2e0] sm:$0xff] 0.0
        %829 = vst [vmem:[#allocation2 + $0x2e8] sm:$0x3] 0.0
        %830 = vst [vmem:[#allocation2 + $0x2f0] sm:$0xff] 0.0
        %831 = vst [vmem:[#allocation2 + $0x2f8] sm:$0x3] 0.0
        %832 = vst [vmem:[#allocation2 + $0x300] sm:$0xff] 0.0
        %833 = vst [vmem:[#allocation2 + $0x308] sm:$0x3] 0.0
        %834 = vst [vmem:[#allocation2 + $0x310] sm:$0xff] 0.0
        %835 = vst [vmem:[#allocation2 + $0x318] sm:$0x3] 0.0
        %836 = vst [vmem:[#allocation2 + $0x320] sm:$0xff] 0.0
        %837 = vst [vmem:[#allocation2 + $0x328] sm:$0x3] 0.0
        %838 = vst [vmem:[#allocation2 + $0x330] sm:$0xff] 0.0
        %839 = vst [vmem:[#allocation2 + $0x338] sm:$0x3] 0.0
        %840 = vst [vmem:[#allocation2 + $0x340] sm:$0xff] 0.0
        %841 = vst [vmem:[#allocation2 + $0x348] sm:$0x3] 0.0
        %842 = vst [vmem:[#allocation2 + $0x350] sm:$0xff] 0.0
        %843 = vst [vmem:[#allocation2 + $0x358] sm:$0x3] 0.0
        %844 = vst [vmem:[#allocation2 + $0x360] sm:$0xff] 0.0
        %845 = vst [vmem:[#allocation2 + $0x368] sm:$0x3] 0.0
        %846 = vst [vmem:[#allocation2 + $0x370] sm:$0xff] 0.0
        %847 = vst [vmem:[#allocation2 + $0x378] sm:$0x3] 0.0
        %848 = vst [vmem:[#allocation2 + $0x380] sm:$0xff] 0.0
        %849 = vst [vmem:[#allocation2 + $0x388] sm:$0x3] 0.0
        %850 = vst [vmem:[#allocation2 + $0x390] sm:$0xff] 0.0
        %851 = vst [vmem:[#allocation2 + $0x398] sm:$0x3] 0.0
        %852 = vst [vmem:[#allocation2 + $0x3a0] sm:$0xff] 0.0
        %853 = vst [vmem:[#allocation2 + $0x3a8] sm:$0x3] 0.0
        %854 = vst [vmem:[#allocation2 + $0x3b0] sm:$0xff] 0.0
        %855 = vst [vmem:[#allocation2 + $0x3b8] sm:$0x3] 0.0
        %s856 = scalar_lea.vmem [#allocation2], 16
        %857 = vst [vmem:[%s856 + $0x1] sm:$0xff] %v498
        %858 = vst [vmem:[%s856 + $0x11] sm:$0xff] %v503
        %859 = vst [vmem:[%s856 + $0x21] sm:$0xff] %v508
        %860 = vst [vmem:[%s856 + $0x31] sm:$0xff] %v513
        %861 = vst [vmem:[%s856 + $0x41] sm:$0xff] %v518
        %862 = vst [vmem:[%s856 + $0x51] sm:$0xff] %v523
        %863 = vst [vmem:[%s856 + $0x61] sm:$0xff] %v528
        %864 = vst [vmem:[%s856 + $0x71] sm:$0xff] %v533
        %865 = vst [vmem:[%s856 + $0xa1] sm:$0xff] %v538
        %866 = vst [vmem:[%s856 + $0xb1] sm:$0xff] %v543
        %867 = vst [vmem:[%s856 + $0xc1] sm:$0xff] %v548
        %868 = vst [vmem:[%s856 + $0xd1] sm:$0xff] %v553
        %869 = vst [vmem:[%s856 + $0xe1] sm:$0xff] %v558
        %870 = vst [vmem:[%s856 + $0xf1] sm:$0xff] %v563
        %871 = vst [vmem:[%s856 + $0x101] sm:$0xff] %v568
        %872 = vst [vmem:[%s856 + $0x111] sm:$0xff] %v573
        %873 = vst [vmem:[%s856 + $0x141] sm:$0xff] %v578
        %874 = vst [vmem:[%s856 + $0x151] sm:$0xff] %v583
        %875 = vst [vmem:[%s856 + $0x161] sm:$0xff] %v588
        %876 = vst [vmem:[%s856 + $0x171] sm:$0xff] %v593
        %877 = vst [vmem:[%s856 + $0x181] sm:$0xff] %v598
        %878 = vst [vmem:[%s856 + $0x191] sm:$0xff] %v603
        %879 = vst [vmem:[%s856 + $0x1a1] sm:$0xff] %v608
        %880 = vst [vmem:[%s856 + $0x1b1] sm:$0xff] %v613
        %881 = vst [vmem:[%s856 + $0x1e1] sm:$0xff] %v618
        %882 = vst [vmem:[%s856 + $0x1f1] sm:$0xff] %v623
        %883 = vst [vmem:[%s856 + $0x201] sm:$0xff] %v628
        %884 = vst [vmem:[%s856 + $0x211] sm:$0xff] %v633
        %885 = vst [vmem:[%s856 + $0x221] sm:$0xff] %v638
        %886 = vst [vmem:[%s856 + $0x231] sm:$0xff] %v643
        %887 = vst [vmem:[%s856 + $0x241] sm:$0xff] %v648
        %888 = vst [vmem:[%s856 + $0x251] sm:$0xff] %v653
        %889 = vst [vmem:[%s856 + $0x281] sm:$0xff] %v658
        %890 = vst [vmem:[%s856 + $0x291] sm:$0xff] %v663
        %891 = vst [vmem:[%s856 + $0x2a1] sm:$0xff] %v668
        %892 = vst [vmem:[%s856 + $0x2b1] sm:$0xff] %v673
        %893 = vst [vmem:[%s856 + $0x2c1] sm:$0xff] %v678
        %894 = vst [vmem:[%s856 + $0x2d1] sm:$0xff] %v683
        %895 = vst [vmem:[%s856 + $0x2e1] sm:$0xff] %v688
        %896 = vst [vmem:[%s856 + $0x2f1] sm:$0xff] %v693
        %897 = vst [vmem:[%s856 + $0x321] sm:$0xff] %v698
        %898 = vst [vmem:[%s856 + $0x331] sm:$0xff] %v703
        %899 = vst [vmem:[%s856 + $0x341] sm:$0xff] %v708
        %900 = vst [vmem:[%s856 + $0x351] sm:$0xff] %v713
        %901 = vst [vmem:[%s856 + $0x361] sm:$0xff] %v718
        %902 = vst [vmem:[%s856 + $0x371] sm:$0xff] %v723
        %903 = vst [vmem:[%s856 + $0x381] sm:$0xff] %v728
        %904 = vst [vmem:[%s856 + $0x391] sm:$0xff] %v733
        %p905 = scmp.eq.s32.totalorder %s31, 0
        // Predicated region
        $region65: #{tpu_custom_call.1} parent=47 // pred_check
          %p906 = pneg %p905
        $region66: #{tpu_custom_call.1} parent=47 // pred_check_branch
          %908 = sbr.rel (%p906) target = $region68
        $region67: #{tpu_custom_call.1} parent=47 // pred_region
          %909 = vst [vmem:[#allocation2] sm:$0xff] 0.0
          %910 = vst [vmem:[#allocation2 + $0x8] sm:$0x3] 0.0
          %911 = vst [vmem:[#allocation2 + $0x10] sm:$0xff] 0.0
          %912 = vst [vmem:[#allocation2 + $0x18] sm:$0x3] 0.0
          %913 = vst [vmem:[#allocation2 + $0x20] sm:$0xff] 0.0
          %914 = vst [vmem:[#allocation2 + $0x28] sm:$0x3] 0.0
          %915 = vst [vmem:[#allocation2 + $0x30] sm:$0xff] 0.0
          %916 = vst [vmem:[#allocation2 + $0x38] sm:$0x3] 0.0
          %917 = vst [vmem:[#allocation2 + $0x40] sm:$0xff] 0.0
          %918 = vst [vmem:[#allocation2 + $0x48] sm:$0x3] 0.0
          %919 = vst [vmem:[#allocation2 + $0x50] sm:$0xff] 0.0
          %920 = vst [vmem:[#allocation2 + $0x58] sm:$0x3] 0.0
          %921 = vst [vmem:[#allocation2 + $0x60] sm:$0xff] 0.0
          %922 = vst [vmem:[#allocation2 + $0x68] sm:$0x3] 0.0
          %923 = vst [vmem:[#allocation2 + $0x70] sm:$0xff] 0.0
          %924 = vst [vmem:[#allocation2 + $0x78] sm:$0x3] 0.0
          %925 = vst [vmem:[#allocation2 + $0x80] sm:$0xff] 0.0
          %926 = vst [vmem:[#allocation2 + $0x88] sm:$0x3] 0.0
          %927 = vst [vmem:[#allocation2 + $0x90] sm:$0xff] 0.0
          %928 = vst [vmem:[#allocation2 + $0x98] sm:$0x3] 0.0
        $region68: #{tpu_custom_call.1} parent=47 // pred_fallthru
          _
        %p929 = scmp.eq.s32.totalorder %s31, 1
        // Predicated region
        $region69: #{tpu_custom_call.1} parent=47 // pred_check
          %p930 = pneg %p929
        $region70: #{tpu_custom_call.1} parent=47 // pred_check_branch
          %932 = sbr.rel (%p930) target = $region72
        $region71: #{tpu_custom_call.1} parent=47 // pred_region
          %s933 = scalar_lea.vmem [#allocation2], 800
          %934 = vst [vmem:[%s933] sm:$0xff] 0.0
          %935 = vst [vmem:[%s933 + $0x8] sm:$0x3] 0.0
          %936 = vst [vmem:[%s933 + $0x10] sm:$0xff] 0.0
          %937 = vst [vmem:[%s933 + $0x18] sm:$0x3] 0.0
          %938 = vst [vmem:[%s933 + $0x20] sm:$0xff] 0.0
          %939 = vst [vmem:[%s933 + $0x28] sm:$0x3] 0.0
          %940 = vst [vmem:[%s933 + $0x30] sm:$0xff] 0.0
          %941 = vst [vmem:[%s933 + $0x38] sm:$0x3] 0.0
          %942 = vst [vmem:[%s933 + $0x40] sm:$0xff] 0.0
          %943 = vst [vmem:[%s933 + $0x48] sm:$0x3] 0.0
          %944 = vst [vmem:[%s933 + $0x50] sm:$0xff] 0.0
          %945 = vst [vmem:[%s933 + $0x58] sm:$0x3] 0.0
          %946 = vst [vmem:[%s933 + $0x60] sm:$0xff] 0.0
          %947 = vst [vmem:[%s933 + $0x68] sm:$0x3] 0.0
          %948 = vst [vmem:[%s933 + $0x70] sm:$0xff] 0.0
          %949 = vst [vmem:[%s933 + $0x78] sm:$0x3] 0.0
          %950 = vst [vmem:[%s933 + $0x80] sm:$0xff] 0.0
          %951 = vst [vmem:[%s933 + $0x88] sm:$0x3] 0.0
          %952 = vst [vmem:[%s933 + $0x90] sm:$0xff] 0.0
          %953 = vst [vmem:[%s933 + $0x98] sm:$0x3] 0.0
        $region72: #{tpu_custom_call.1} parent=47 // pred_fallthru
          _
        %v954 = vld [vmem:[#allocation2] sm:$0xff]
        %v955 = vld [vmem:[#allocation2 + $0x8] sm:$0x3]
        %v956 = vld [vmem:[#allocation2 + $0x10] sm:$0xff]
        %v957 = vld [vmem:[#allocation2 + $0x18] sm:$0x3]
        %v958 = vld [vmem:[#allocation2 + $0x20] sm:$0xff]
        %v959 = vld [vmem:[#allocation2 + $0x28] sm:$0x3]
        %v960 = vld [vmem:[#allocation2 + $0x30] sm:$0xff]
        %v961 = vld [vmem:[#allocation2 + $0x38] sm:$0x3]
        %v962 = vld [vmem:[#allocation2 + $0x40] sm:$0xff]
        %v963 = vld [vmem:[#allocation2 + $0x48] sm:$0x3]
        %v964 = vld [vmem:[#allocation2 + $0x50] sm:$0xff]
        %v965 = vld [vmem:[#allocation2 + $0x58] sm:$0x3]
        %v966 = vld [vmem:[#allocation2 + $0x60] sm:$0xff]
        %v967 = vld [vmem:[#allocation2 + $0x68] sm:$0x3]
        %v968 = vld [vmem:[#allocation2 + $0x70] sm:$0xff]
        %v969 = vld [vmem:[#allocation2 + $0x78] sm:$0x3]
        %v970 = vld [vmem:[#allocation2 + $0x80] sm:$0xff]
        %v971 = vld [vmem:[#allocation2 + $0x88] sm:$0x3]
        %v972 = vld [vmem:[#allocation2 + $0x90] sm:$0xff]
        %v973 = vld [vmem:[#allocation2 + $0x98] sm:$0x3]
        %v974 = vld [vmem:[#allocation2 + $0xa0] sm:$0xff]
        %v975 = vld [vmem:[#allocation2 + $0xa8] sm:$0x3]
        %v976 = vld [vmem:[#allocation2 + $0xb0] sm:$0xff]
        %v977 = vld [vmem:[#allocation2 + $0xb8] sm:$0x3]
        %v978 = vld [vmem:[#allocation2 + $0xc0] sm:$0xff]
        %v979 = vld [vmem:[#allocation2 + $0xc8] sm:$0x3]
        %v980 = vld [vmem:[#allocation2 + $0xd0] sm:$0xff]
        %v981 = vld [vmem:[#allocation2 + $0xd8] sm:$0x3]
        %v982 = vld [vmem:[#allocation2 + $0xe0] sm:$0xff]
        %v983 = vld [vmem:[#allocation2 + $0xe8] sm:$0x3]
        %v984 = vld [vmem:[#allocation2 + $0xf0] sm:$0xff]
        %v985 = vld [vmem:[#allocation2 + $0xf8] sm:$0x3]
        %v986 = vld [vmem:[#allocation2 + $0x100] sm:$0xff]
        %v987 = vld [vmem:[#allocation2 + $0x108] sm:$0x3]
        %v988 = vld [vmem:[#allocation2 + $0x110] sm:$0xff]
        %v989 = vld [vmem:[#allocation2 + $0x118] sm:$0x3]
        %v990 = vld [vmem:[#allocation2 + $0x120] sm:$0xff]
        %v991 = vld [vmem:[#allocation2 + $0x128] sm:$0x3]
        %v992 = vld [vmem:[#allocation2 + $0x130] sm:$0xff]
        %v993 = vld [vmem:[#allocation2 + $0x138] sm:$0x3]
        %v994 = vld [vmem:[#allocation2 + $0x140] sm:$0xff]
        %v995 = vld [vmem:[#allocation2 + $0x148] sm:$0x3]
        %v996 = vld [vmem:[#allocation2 + $0x150] sm:$0xff]
        %v997 = vld [vmem:[#allocation2 + $0x158] sm:$0x3]
        %v998 = vld [vmem:[#allocation2 + $0x160] sm:$0xff]
        %v999 = vld [vmem:[#allocation2 + $0x168] sm:$0x3]
        %v1000 = vld [vmem:[#allocation2 + $0x170] sm:$0xff]
        %v1001 = vld [vmem:[#allocation2 + $0x178] sm:$0x3]
        %v1002 = vld [vmem:[#allocation2 + $0x180] sm:$0xff]
        %v1003 = vld [vmem:[#allocation2 + $0x188] sm:$0x3]
        %v1004 = vld [vmem:[#allocation2 + $0x190] sm:$0xff]
        %v1005 = vld [vmem:[#allocation2 + $0x198] sm:$0x3]
        %v1006 = vld [vmem:[#allocation2 + $0x1a0] sm:$0xff]
        %v1007 = vld [vmem:[#allocation2 + $0x1a8] sm:$0x3]
        %v1008 = vld [vmem:[#allocation2 + $0x1b0] sm:$0xff]
        %v1009 = vld [vmem:[#allocation2 + $0x1b8] sm:$0x3]
        %v1010 = vld [vmem:[#allocation2 + $0x1c0] sm:$0xff]
        %v1011 = vld [vmem:[#allocation2 + $0x1c8] sm:$0x3]
        %v1012 = vld [vmem:[#allocation2 + $0x1d0] sm:$0xff]
        %v1013 = vld [vmem:[#allocation2 + $0x1d8] sm:$0x3]
        %v1014 = vld [vmem:[#allocation2 + $0x1e0] sm:$0xff]
        %v1015 = vld [vmem:[#allocation2 + $0x1e8] sm:$0x3]
        %v1016 = vld [vmem:[#allocation2 + $0x1f0] sm:$0xff]
        %v1017 = vld [vmem:[#allocation2 + $0x1f8] sm:$0x3]
        %v1018 = vld [vmem:[#allocation2 + $0x200] sm:$0xff]
        %v1019 = vld [vmem:[#allocation2 + $0x208] sm:$0x3]
        %v1020 = vld [vmem:[#allocation2 + $0x210] sm:$0xff]
        %v1021 = vld [vmem:[#allocation2 + $0x218] sm:$0x3]
        %v1022 = vld [vmem:[#allocation2 + $0x220] sm:$0xff]
        %v1023 = vld [vmem:[#allocation2 + $0x228] sm:$0x3]
        %v1024 = vld [vmem:[#allocation2 + $0x230] sm:$0xff]
        %v1025 = vld [vmem:[#allocation2 + $0x238] sm:$0x3]
        %v1026 = vld [vmem:[#allocation2 + $0x240] sm:$0xff]
        %v1027 = vld [vmem:[#allocation2 + $0x248] sm:$0x3]
        %v1028 = vld [vmem:[#allocation2 + $0x250] sm:$0xff]
        %v1029 = vld [vmem:[#allocation2 + $0x258] sm:$0x3]
        %v1030 = vld [vmem:[#allocation2 + $0x260] sm:$0xff]
        %v1031 = vld [vmem:[#allocation2 + $0x268] sm:$0x3]
        %v1032 = vld [vmem:[#allocation2 + $0x270] sm:$0xff]
        %v1033 = vld [vmem:[#allocation2 + $0x278] sm:$0x3]
        %v1034 = vld [vmem:[#allocation2 + $0x280] sm:$0xff]
        %v1035 = vld [vmem:[#allocation2 + $0x288] sm:$0x3]
        %v1036 = vld [vmem:[#allocation2 + $0x290] sm:$0xff]
        %v1037 = vld [vmem:[#allocation2 + $0x298] sm:$0x3]
        %v1038 = vld [vmem:[#allocation2 + $0x2a0] sm:$0xff]
        %v1039 = vld [vmem:[#allocation2 + $0x2a8] sm:$0x3]
        %v1040 = vld [vmem:[#allocation2 + $0x2b0] sm:$0xff]
        %v1041 = vld [vmem:[#allocation2 + $0x2b8] sm:$0x3]
        %v1042 = vld [vmem:[#allocation2 + $0x2c0] sm:$0xff]
        %v1043 = vld [vmem:[#allocation2 + $0x2c8] sm:$0x3]
        %v1044 = vld [vmem:[#allocation2 + $0x2d0] sm:$0xff]
        %v1045 = vld [vmem:[#allocation2 + $0x2d8] sm:$0x3]
        %v1046 = vld [vmem:[#allocation2 + $0x2e0] sm:$0xff]
        %v1047 = vld [vmem:[#allocation2 + $0x2e8] sm:$0x3]
        %v1048 = vld [vmem:[#allocation2 + $0x2f0] sm:$0xff]
        %v1049 = vld [vmem:[#allocation2 + $0x2f8] sm:$0x3]
        %v1050 = vld [vmem:[#allocation2 + $0x300] sm:$0xff]
        %v1051 = vld [vmem:[#allocation2 + $0x308] sm:$0x3]
        %v1052 = vld [vmem:[#allocation2 + $0x310] sm:$0xff]
        %v1053 = vld [vmem:[#allocation2 + $0x318] sm:$0x3]
        %v1054 = vld [vmem:[#allocation2 + $0x320] sm:$0xff]
        %v1055 = vld [vmem:[#allocation2 + $0x328] sm:$0x3]
        %v1056 = vld [vmem:[#allocation2 + $0x330] sm:$0xff]
        %v1057 = vld [vmem:[#allocation2 + $0x338] sm:$0x3]
        %v1058 = vld [vmem:[#allocation2 + $0x340] sm:$0xff]
        %v1059 = vld [vmem:[#allocation2 + $0x348] sm:$0x3]
        %v1060 = vld [vmem:[#allocation2 + $0x350] sm:$0xff]
        %v1061 = vld [vmem:[#allocation2 + $0x358] sm:$0x3]
        %v1062 = vld [vmem:[#allocation2 + $0x360] sm:$0xff]
        %v1063 = vld [vmem:[#allocation2 + $0x368] sm:$0x3]
        %v1064 = vld [vmem:[#allocation2 + $0x370] sm:$0xff]
        %v1065 = vld [vmem:[#allocation2 + $0x378] sm:$0x3]
        %v1066 = vld [vmem:[#allocation2 + $0x380] sm:$0xff]
        %v1067 = vld [vmem:[#allocation2 + $0x388] sm:$0x3]
        %v1068 = vld [vmem:[#allocation2 + $0x390] sm:$0xff]
        %v1069 = vld [vmem:[#allocation2 + $0x398] sm:$0x3]
        %v1070 = vld [vmem:[#allocation2 + $0x3a0] sm:$0xff]
        %v1071 = vld [vmem:[#allocation2 + $0x3a8] sm:$0x3]
        %v1072 = vld [vmem:[#allocation2 + $0x3b0] sm:$0xff]
        %v1073 = vld [vmem:[#allocation2 + $0x3b8] sm:$0x3]
        %v1074 = vld [vmem:[#allocation8] sm:$0x1]
        %v1076 = vlaneseq
        %v1077 = vshrl.u32 %v1076, 7
        %v1078 = vsub.s32 0, %v1077
        %v1079 = vrot.slane %v1074, %v1078
        %v1081 = vmul.f32 %v954, %v1079
        %v1082 = vmul.f32 %v956, %v1079
        %v1083 = vmul.f32 %v958, %v1079
        %v1084 = vmul.f32 %v960, %v1079
        %v1085 = vmul.f32 %v962, %v1079
        %v1086 = vmul.f32 %v964, %v1079
        %v1087 = vmul.f32 %v966, %v1079
        %v1088 = vmul.f32 %v968, %v1079
        %v1089 = vmul.f32 %v974, %v1079
        %v1090 = vmul.f32 %v976, %v1079
        %v1091 = vmul.f32 %v978, %v1079
        %v1092 = vmul.f32 %v980, %v1079
        %v1093 = vmul.f32 %v982, %v1079
        %v1094 = vmul.f32 %v984, %v1079
        %v1095 = vmul.f32 %v986, %v1079
        %v1096 = vmul.f32 %v988, %v1079
        %v1097 = vmul.f32 %v994, %v1079
        %v1098 = vmul.f32 %v996, %v1079
        %v1099 = vmul.f32 %v998, %v1079
        %v1100 = vmul.f32 %v1000, %v1079
        %v1101 = vmul.f32 %v1002, %v1079
        %v1102 = vmul.f32 %v1004, %v1079
        %v1103 = vmul.f32 %v1006, %v1079
        %v1104 = vmul.f32 %v1008, %v1079
        %v1105 = vmul.f32 %v1014, %v1079
        %v1106 = vmul.f32 %v1016, %v1079
        %v1107 = vmul.f32 %v1018, %v1079
        %v1108 = vmul.f32 %v1020, %v1079
        %v1109 = vmul.f32 %v1022, %v1079
        %v1110 = vmul.f32 %v1024, %v1079
        %v1111 = vmul.f32 %v1026, %v1079
        %v1112 = vmul.f32 %v1028, %v1079
        %v1113 = vadd.f32 %v1081, 0.0
        %v1114 = vadd.f32 %v1082, 0.0
        %v1115 = vadd.f32 %v1083, 0.0
        %v1116 = vadd.f32 %v1084, 0.0
        %v1117 = vadd.f32 %v1085, 0.0
        %v1118 = vadd.f32 %v1086, 0.0
        %v1119 = vadd.f32 %v1087, 0.0
        %v1120 = vadd.f32 %v1088, 0.0
        %v1121 = vadd.f32 %v1089, 0.0
        %v1122 = vadd.f32 %v1090, 0.0
        %v1123 = vadd.f32 %v1091, 0.0
        %v1124 = vadd.f32 %v1092, 0.0
        %v1125 = vadd.f32 %v1093, 0.0
        %v1126 = vadd.f32 %v1094, 0.0
        %v1127 = vadd.f32 %v1095, 0.0
        %v1128 = vadd.f32 %v1096, 0.0
        %v1129 = vadd.f32 %v1097, 0.0
        %v1130 = vadd.f32 %v1098, 0.0
        %v1131 = vadd.f32 %v1099, 0.0
        %v1132 = vadd.f32 %v1100, 0.0
        %v1133 = vadd.f32 %v1101, 0.0
        %v1134 = vadd.f32 %v1102, 0.0
        %v1135 = vadd.f32 %v1103, 0.0
        %v1136 = vadd.f32 %v1104, 0.0
        %v1137 = vadd.f32 %v1105, 0.0
        %v1138 = vadd.f32 %v1106, 0.0
        %v1139 = vadd.f32 %v1107, 0.0
        %v1140 = vadd.f32 %v1108, 0.0
        %v1141 = vadd.f32 %v1109, 0.0
        %v1142 = vadd.f32 %v1110, 0.0
        %v1143 = vadd.f32 %v1111, 0.0
        %v1144 = vadd.f32 %v1112, 0.0
        %s1145 = scalar_lea.vmem [#allocation8], 1
        %v1146 = vld [vmem:[%s1145] sm:$0x1]
        %v1148 = vlaneseq
        %v1149 = vshrl.u32 %v1148, 7
        %v1150 = vsub.s32 0, %v1149
        %v1151 = vrot.slane %v1146, %v1150
        %v1153 = vmul.f32 %v954, %v1151
        %v1154 = vmul.f32 %v955, %v1151
        %v1155 = vmul.f32 %v956, %v1151
        %v1156 = vmul.f32 %v957, %v1151
        %v1157 = vmul.f32 %v958, %v1151
        %v1158 = vmul.f32 %v959, %v1151
        %v1159 = vmul.f32 %v960, %v1151
        %v1160 = vmul.f32 %v961, %v1151
        %v1161 = vmul.f32 %v962, %v1151
        %v1162 = vmul.f32 %v963, %v1151
        %v1163 = vmul.f32 %v964, %v1151
        %v1164 = vmul.f32 %v965, %v1151
        %v1165 = vmul.f32 %v966, %v1151
        %v1166 = vmul.f32 %v967, %v1151
        %v1167 = vmul.f32 %v968, %v1151
        %v1168 = vmul.f32 %v969, %v1151
        %v1169 = vmul.f32 %v974, %v1151
        %v1170 = vmul.f32 %v975, %v1151
        %v1171 = vmul.f32 %v976, %v1151
        %v1172 = vmul.f32 %v977, %v1151
        %v1173 = vmul.f32 %v978, %v1151
        %v1174 = vmul.f32 %v979, %v1151
        %v1175 = vmul.f32 %v980, %v1151
        %v1176 = vmul.f32 %v981, %v1151
        %v1177 = vmul.f32 %v982, %v1151
        %v1178 = vmul.f32 %v983, %v1151
        %v1179 = vmul.f32 %v984, %v1151
        %v1180 = vmul.f32 %v985, %v1151
        %v1181 = vmul.f32 %v986, %v1151
        %v1182 = vmul.f32 %v987, %v1151
        %v1183 = vmul.f32 %v988, %v1151
        %v1184 = vmul.f32 %v989, %v1151
        %v1185 = vmul.f32 %v994, %v1151
        %v1186 = vmul.f32 %v995, %v1151
        %v1187 = vmul.f32 %v996, %v1151
        %v1188 = vmul.f32 %v997, %v1151
        %v1189 = vmul.f32 %v998, %v1151
        %v1190 = vmul.f32 %v999, %v1151
        %v1191 = vmul.f32 %v1000, %v1151
        %v1192 = vmul.f32 %v1001, %v1151
        %v1193 = vmul.f32 %v1002, %v1151
        %v1194 = vmul.f32 %v1003, %v1151
        %v1195 = vmul.f32 %v1004, %v1151
        %v1196 = vmul.f32 %v1005, %v1151
        %v1197 = vmul.f32 %v1006, %v1151
        %v1198 = vmul.f32 %v1007, %v1151
        %v1199 = vmul.f32 %v1008, %v1151
        %v1200 = vmul.f32 %v1009, %v1151
        %v1201 = vmul.f32 %v1014, %v1151
        %v1202 = vmul.f32 %v1015, %v1151
        %v1203 = vmul.f32 %v1016, %v1151
        %v1204 = vmul.f32 %v1017, %v1151
        %v1205 = vmul.f32 %v1018, %v1151
        %v1206 = vmul.f32 %v1019, %v1151
        %v1207 = vmul.f32 %v1020, %v1151
        %v1208 = vmul.f32 %v1021, %v1151
        %v1209 = vmul.f32 %v1022, %v1151
        %v1210 = vmul.f32 %v1023, %v1151
        %v1211 = vmul.f32 %v1024, %v1151
        %v1212 = vmul.f32 %v1025, %v1151
        %v1213 = vmul.f32 %v1026, %v1151
        %v1214 = vmul.f32 %v1027, %v1151
        %v1215 = vmul.f32 %v1028, %v1151
        %v1216 = vmul.f32 %v1029, %v1151
        %vm1281 = vcmask 1046528
        %v1282 = vrot.slane %v1153, 1
        %v1283 = vrot.slane %v1154, 1
        %v1284 = vsel %vm1281, %v1282, %v1283
        %v1285 = vrot.slane %v1155, 1
        %v1286 = vrot.slane %v1156, 1
        %v1287 = vsel %vm1281, %v1285, %v1286
        %v1288 = vrot.slane %v1157, 1
        %v1289 = vrot.slane %v1158, 1
        %v1290 = vsel %vm1281, %v1288, %v1289
        %v1291 = vrot.slane %v1159, 1
        %v1292 = vrot.slane %v1160, 1
        %v1293 = vsel %vm1281, %v1291, %v1292
        %v1294 = vrot.slane %v1161, 1
        %v1295 = vrot.slane %v1162, 1
        %v1296 = vsel %vm1281, %v1294, %v1295
        %v1297 = vrot.slane %v1163, 1
        %v1298 = vrot.slane %v1164, 1
        %v1299 = vsel %vm1281, %v1297, %v1298
        %v1300 = vrot.slane %v1165, 1
        %v1301 = vrot.slane %v1166, 1
        %v1302 = vsel %vm1281, %v1300, %v1301
        %v1303 = vrot.slane %v1167, 1
        %v1304 = vrot.slane %v1168, 1
        %v1305 = vsel %vm1281, %v1303, %v1304
        %v1306 = vrot.slane %v1169, 1
        %v1307 = vrot.slane %v1170, 1
        %v1308 = vsel %vm1281, %v1306, %v1307
        %v1309 = vrot.slane %v1171, 1
        %v1310 = vrot.slane %v1172, 1
        %v1311 = vsel %vm1281, %v1309, %v1310
        %v1312 = vrot.slane %v1173, 1
        %v1313 = vrot.slane %v1174, 1
        %v1314 = vsel %vm1281, %v1312, %v1313
        %v1315 = vrot.slane %v1175, 1
        %v1316 = vrot.slane %v1176, 1
        %v1317 = vsel %vm1281, %v1315, %v1316
        %v1318 = vrot.slane %v1177, 1
        %v1319 = vrot.slane %v1178, 1
        %v1320 = vsel %vm1281, %v1318, %v1319
        %v1321 = vrot.slane %v1179, 1
        %v1322 = vrot.slane %v1180, 1
        %v1323 = vsel %vm1281, %v1321, %v1322
        %v1324 = vrot.slane %v1181, 1
        %v1325 = vrot.slane %v1182, 1
        %v1326 = vsel %vm1281, %v1324, %v1325
        %v1327 = vrot.slane %v1183, 1
        %v1328 = vrot.slane %v1184, 1
        %v1329 = vsel %vm1281, %v1327, %v1328
        %v1330 = vrot.slane %v1185, 1
        %v1331 = vrot.slane %v1186, 1
        %v1332 = vsel %vm1281, %v1330, %v1331
        %v1333 = vrot.slane %v1187, 1
        %v1334 = vrot.slane %v1188, 1
        %v1335 = vsel %vm1281, %v1333, %v1334
        %v1336 = vrot.slane %v1189, 1
        %v1337 = vrot.slane %v1190, 1
        %v1338 = vsel %vm1281, %v1336, %v1337
        %v1339 = vrot.slane %v1191, 1
        %v1340 = vrot.slane %v1192, 1
        %v1341 = vsel %vm1281, %v1339, %v1340
        %v1342 = vrot.slane %v1193, 1
        %v1343 = vrot.slane %v1194, 1
        %v1344 = vsel %vm1281, %v1342, %v1343
        %v1345 = vrot.slane %v1195, 1
        %v1346 = vrot.slane %v1196, 1
        %v1347 = vsel %vm1281, %v1345, %v1346
        %v1348 = vrot.slane %v1197, 1
        %v1349 = vrot.slane %v1198, 1
        %v1350 = vsel %vm1281, %v1348, %v1349
        %v1351 = vrot.slane %v1199, 1
        %v1352 = vrot.slane %v1200, 1
        %v1353 = vsel %vm1281, %v1351, %v1352
        %v1354 = vrot.slane %v1201, 1
        %v1355 = vrot.slane %v1202, 1
        %v1356 = vsel %vm1281, %v1354, %v1355
        %v1357 = vrot.slane %v1203, 1
        %v1358 = vrot.slane %v1204, 1
        %v1359 = vsel %vm1281, %v1357, %v1358
        %v1360 = vrot.slane %v1205, 1
        %v1361 = vrot.slane %v1206, 1
        %v1362 = vsel %vm1281, %v1360, %v1361
        %v1363 = vrot.slane %v1207, 1
        %v1364 = vrot.slane %v1208, 1
        %v1365 = vsel %vm1281, %v1363, %v1364
        %v1366 = vrot.slane %v1209, 1
        %v1367 = vrot.slane %v1210, 1
        %v1368 = vsel %vm1281, %v1366, %v1367
        %v1369 = vrot.slane %v1211, 1
        %v1370 = vrot.slane %v1212, 1
        %v1371 = vsel %vm1281, %v1369, %v1370
        %v1372 = vrot.slane %v1213, 1
        %v1373 = vrot.slane %v1214, 1
        %v1374 = vsel %vm1281, %v1372, %v1373
        %v1375 = vrot.slane %v1215, 1
        %v1376 = vrot.slane %v1216, 1
        %v1377 = vsel %vm1281, %v1375, %v1376
        %v1410 = vadd.f32 %v1113, %v1284
        %v1411 = vadd.f32 %v1114, %v1287
        %v1412 = vadd.f32 %v1115, %v1290
        %v1413 = vadd.f32 %v1116, %v1293
        %v1414 = vadd.f32 %v1117, %v1296
        %v1415 = vadd.f32 %v1118, %v1299
        %v1416 = vadd.f32 %v1119, %v1302
        %v1417 = vadd.f32 %v1120, %v1305
        %v1418 = vadd.f32 %v1121, %v1308
        %v1419 = vadd.f32 %v1122, %v1311
        %v1420 = vadd.f32 %v1123, %v1314
        %v1421 = vadd.f32 %v1124, %v1317
        %v1422 = vadd.f32 %v1125, %v1320
        %v1423 = vadd.f32 %v1126, %v1323
        %v1424 = vadd.f32 %v1127, %v1326
        %v1425 = vadd.f32 %v1128, %v1329
        %v1426 = vadd.f32 %v1129, %v1332
        %v1427 = vadd.f32 %v1130, %v1335
        %v1428 = vadd.f32 %v1131, %v1338
        %v1429 = vadd.f32 %v1132, %v1341
        %v1430 = vadd.f32 %v1133, %v1344
        %v1431 = vadd.f32 %v1134, %v1347
        %v1432 = vadd.f32 %v1135, %v1350
        %v1433 = vadd.f32 %v1136, %v1353
        %v1434 = vadd.f32 %v1137, %v1356
        %v1435 = vadd.f32 %v1138, %v1359
        %v1436 = vadd.f32 %v1139, %v1362
        %v1437 = vadd.f32 %v1140, %v1365
        %v1438 = vadd.f32 %v1141, %v1368
        %v1439 = vadd.f32 %v1142, %v1371
        %v1440 = vadd.f32 %v1143, %v1374
        %v1441 = vadd.f32 %v1144, %v1377
        %s1442 = scalar_lea.vmem [#allocation8], 2
        %v1443 = vld [vmem:[%s1442] sm:$0x1]
        %v1445 = vlaneseq
        %v1446 = vshrl.u32 %v1445, 7
        %v1447 = vsub.s32 0, %v1446
        %v1448 = vrot.slane %v1443, %v1447
        %v1450 = vmul.f32 %v954, %v1448
        %v1451 = vmul.f32 %v955, %v1448
        %v1452 = vmul.f32 %v956, %v1448
        %v1453 = vmul.f32 %v957, %v1448
        %v1454 = vmul.f32 %v958, %v1448
        %v1455 = vmul.f32 %v959, %v1448
        %v1456 = vmul.f32 %v960, %v1448
        %v1457 = vmul.f32 %v961, %v1448
        %v1458 = vmul.f32 %v962, %v1448
        %v1459 = vmul.f32 %v963, %v1448
        %v1460 = vmul.f32 %v964, %v1448
        %v1461 = vmul.f32 %v965, %v1448
        %v1462 = vmul.f32 %v966, %v1448
        %v1463 = vmul.f32 %v967, %v1448
        %v1464 = vmul.f32 %v968, %v1448
        %v1465 = vmul.f32 %v969, %v1448
        %v1466 = vmul.f32 %v974, %v1448
        %v1467 = vmul.f32 %v975, %v1448
        %v1468 = vmul.f32 %v976, %v1448
        %v1469 = vmul.f32 %v977, %v1448
        %v1470 = vmul.f32 %v978, %v1448
        %v1471 = vmul.f32 %v979, %v1448
        %v1472 = vmul.f32 %v980, %v1448
        %v1473 = vmul.f32 %v981, %v1448
        %v1474 = vmul.f32 %v982, %v1448
        %v1475 = vmul.f32 %v983, %v1448
        %v1476 = vmul.f32 %v984, %v1448
        %v1477 = vmul.f32 %v985, %v1448
        %v1478 = vmul.f32 %v986, %v1448
        %v1479 = vmul.f32 %v987, %v1448
        %v1480 = vmul.f32 %v988, %v1448
        %v1481 = vmul.f32 %v989, %v1448
        %v1482 = vmul.f32 %v994, %v1448
        %v1483 = vmul.f32 %v995, %v1448
        %v1484 = vmul.f32 %v996, %v1448
        %v1485 = vmul.f32 %v997, %v1448
        %v1486 = vmul.f32 %v998, %v1448
        %v1487 = vmul.f32 %v999, %v1448
        %v1488 = vmul.f32 %v1000, %v1448
        %v1489 = vmul.f32 %v1001, %v1448
        %v1490 = vmul.f32 %v1002, %v1448
        %v1491 = vmul.f32 %v1003, %v1448
        %v1492 = vmul.f32 %v1004, %v1448
        %v1493 = vmul.f32 %v1005, %v1448
        %v1494 = vmul.f32 %v1006, %v1448
        %v1495 = vmul.f32 %v1007, %v1448
        %v1496 = vmul.f32 %v1008, %v1448
        %v1497 = vmul.f32 %v1009, %v1448
        %v1498 = vmul.f32 %v1014, %v1448
        %v1499 = vmul.f32 %v1015, %v1448
        %v1500 = vmul.f32 %v1016, %v1448
        %v1501 = vmul.f32 %v1017, %v1448
        %v1502 = vmul.f32 %v1018, %v1448
        %v1503 = vmul.f32 %v1019, %v1448
        %v1504 = vmul.f32 %v1020, %v1448
        %v1505 = vmul.f32 %v1021, %v1448
        %v1506 = vmul.f32 %v1022, %v1448
        %v1507 = vmul.f32 %v1023, %v1448
        %v1508 = vmul.f32 %v1024, %v1448
        %v1509 = vmul.f32 %v1025, %v1448
        %v1510 = vmul.f32 %v1026, %v1448
        %v1511 = vmul.f32 %v1027, %v1448
        %v1512 = vmul.f32 %v1028, %v1448
        %v1513 = vmul.f32 %v1029, %v1448
        %vm1578 = vcmask 1045504
        %v1579 = vrot.slane %v1450, 2
        %v1580 = vrot.slane %v1451, 2
        %v1581 = vsel %vm1578, %v1579, %v1580
        %v1582 = vrot.slane %v1452, 2
        %v1583 = vrot.slane %v1453, 2
        %v1584 = vsel %vm1578, %v1582, %v1583
        %v1585 = vrot.slane %v1454, 2
        %v1586 = vrot.slane %v1455, 2
        %v1587 = vsel %vm1578, %v1585, %v1586
        %v1588 = vrot.slane %v1456, 2
        %v1589 = vrot.slane %v1457, 2
        %v1590 = vsel %vm1578, %v1588, %v1589
        %v1591 = vrot.slane %v1458, 2
        %v1592 = vrot.slane %v1459, 2
        %v1593 = vsel %vm1578, %v1591, %v1592
        %v1594 = vrot.slane %v1460, 2
        %v1595 = vrot.slane %v1461, 2
        %v1596 = vsel %vm1578, %v1594, %v1595
        %v1597 = vrot.slane %v1462, 2
        %v1598 = vrot.slane %v1463, 2
        %v1599 = vsel %vm1578, %v1597, %v1598
        %v1600 = vrot.slane %v1464, 2
        %v1601 = vrot.slane %v1465, 2
        %v1602 = vsel %vm1578, %v1600, %v1601
        %v1603 = vrot.slane %v1466, 2
        %v1604 = vrot.slane %v1467, 2
        %v1605 = vsel %vm1578, %v1603, %v1604
        %v1606 = vrot.slane %v1468, 2
        %v1607 = vrot.slane %v1469, 2
        %v1608 = vsel %vm1578, %v1606, %v1607
        %v1609 = vrot.slane %v1470, 2
        %v1610 = vrot.slane %v1471, 2
        %v1611 = vsel %vm1578, %v1609, %v1610
        %v1612 = vrot.slane %v1472, 2
        %v1613 = vrot.slane %v1473, 2
        %v1614 = vsel %vm1578, %v1612, %v1613
        %v1615 = vrot.slane %v1474, 2
        %v1616 = vrot.slane %v1475, 2
        %v1617 = vsel %vm1578, %v1615, %v1616
        %v1618 = vrot.slane %v1476, 2
        %v1619 = vrot.slane %v1477, 2
        %v1620 = vsel %vm1578, %v1618, %v1619
        %v1621 = vrot.slane %v1478, 2
        %v1622 = vrot.slane %v1479, 2
        %v1623 = vsel %vm1578, %v1621, %v1622
        %v1624 = vrot.slane %v1480, 2
        %v1625 = vrot.slane %v1481, 2
        %v1626 = vsel %vm1578, %v1624, %v1625
        %v1627 = vrot.slane %v1482, 2
        %v1628 = vrot.slane %v1483, 2
        %v1629 = vsel %vm1578, %v1627, %v1628
        %v1630 = vrot.slane %v1484, 2
        %v1631 = vrot.slane %v1485, 2
        %v1632 = vsel %vm1578, %v1630, %v1631
        %v1633 = vrot.slane %v1486, 2
        %v1634 = vrot.slane %v1487, 2
        %v1635 = vsel %vm1578, %v1633, %v1634
        %v1636 = vrot.slane %v1488, 2
        %v1637 = vrot.slane %v1489, 2
        %v1638 = vsel %vm1578, %v1636, %v1637
        %v1639 = vrot.slane %v1490, 2
        %v1640 = vrot.slane %v1491, 2
        %v1641 = vsel %vm1578, %v1639, %v1640
        %v1642 = vrot.slane %v1492, 2
        %v1643 = vrot.slane %v1493, 2
        %v1644 = vsel %vm1578, %v1642, %v1643
        %v1645 = vrot.slane %v1494, 2
        %v1646 = vrot.slane %v1495, 2
        %v1647 = vsel %vm1578, %v1645, %v1646
        %v1648 = vrot.slane %v1496, 2
        %v1649 = vrot.slane %v1497, 2
        %v1650 = vsel %vm1578, %v1648, %v1649
        %v1651 = vrot.slane %v1498, 2
        %v1652 = vrot.slane %v1499, 2
        %v1653 = vsel %vm1578, %v1651, %v1652
        %v1654 = vrot.slane %v1500, 2
        %v1655 = vrot.slane %v1501, 2
        %v1656 = vsel %vm1578, %v1654, %v1655
        %v1657 = vrot.slane %v1502, 2
        %v1658 = vrot.slane %v1503, 2
        %v1659 = vsel %vm1578, %v1657, %v1658
        %v1660 = vrot.slane %v1504, 2
        %v1661 = vrot.slane %v1505, 2
        %v1662 = vsel %vm1578, %v1660, %v1661
        %v1663 = vrot.slane %v1506, 2
        %v1664 = vrot.slane %v1507, 2
        %v1665 = vsel %vm1578, %v1663, %v1664
        %v1666 = vrot.slane %v1508, 2
        %v1667 = vrot.slane %v1509, 2
        %v1668 = vsel %vm1578, %v1666, %v1667
        %v1669 = vrot.slane %v1510, 2
        %v1670 = vrot.slane %v1511, 2
        %v1671 = vsel %vm1578, %v1669, %v1670
        %v1672 = vrot.slane %v1512, 2
        %v1673 = vrot.slane %v1513, 2
        %v1674 = vsel %vm1578, %v1672, %v1673
        %v1707 = vadd.f32 %v1410, %v1581
        %v1708 = vadd.f32 %v1411, %v1584
        %v1709 = vadd.f32 %v1412, %v1587
        %v1710 = vadd.f32 %v1413, %v1590
        %v1711 = vadd.f32 %v1414, %v1593
        %v1712 = vadd.f32 %v1415, %v1596
        %v1713 = vadd.f32 %v1416, %v1599
        %v1714 = vadd.f32 %v1417, %v1602
        %v1715 = vadd.f32 %v1418, %v1605
        %v1716 = vadd.f32 %v1419, %v1608
        %v1717 = vadd.f32 %v1420, %v1611
        %v1718 = vadd.f32 %v1421, %v1614
        %v1719 = vadd.f32 %v1422, %v1617
        %v1720 = vadd.f32 %v1423, %v1620
        %v1721 = vadd.f32 %v1424, %v1623
        %v1722 = vadd.f32 %v1425, %v1626
        %v1723 = vadd.f32 %v1426, %v1629
        %v1724 = vadd.f32 %v1427, %v1632
        %v1725 = vadd.f32 %v1428, %v1635
        %v1726 = vadd.f32 %v1429, %v1638
        %v1727 = vadd.f32 %v1430, %v1641
        %v1728 = vadd.f32 %v1431, %v1644
        %v1729 = vadd.f32 %v1432, %v1647
        %v1730 = vadd.f32 %v1433, %v1650
        %v1731 = vadd.f32 %v1434, %v1653
        %v1732 = vadd.f32 %v1435, %v1656
        %v1733 = vadd.f32 %v1436, %v1659
        %v1734 = vadd.f32 %v1437, %v1662
        %v1735 = vadd.f32 %v1438, %v1665
        %v1736 = vadd.f32 %v1439, %v1668
        %v1737 = vadd.f32 %v1440, %v1671
        %v1738 = vadd.f32 %v1441, %v1674
        %s1739 = scalar_lea.vmem [#allocation8], 3
        %v1740 = vld [vmem:[%s1739] sm:$0x1]
        %v1742 = vlaneseq
        %v1743 = vshrl.u32 %v1742, 7
        %v1744 = vsub.s32 0, %v1743
        %v1745 = vrot.slane %v1740, %v1744
        %v1747 = vmul.f32 %v956, %v1745
        %v1748 = vmul.f32 %v958, %v1745
        %v1749 = vmul.f32 %v960, %v1745
        %v1750 = vmul.f32 %v962, %v1745
        %v1751 = vmul.f32 %v964, %v1745
        %v1752 = vmul.f32 %v966, %v1745
        %v1753 = vmul.f32 %v968, %v1745
        %v1754 = vmul.f32 %v970, %v1745
        %v1755 = vmul.f32 %v976, %v1745
        %v1756 = vmul.f32 %v978, %v1745
        %v1757 = vmul.f32 %v980, %v1745
        %v1758 = vmul.f32 %v982, %v1745
        %v1759 = vmul.f32 %v984, %v1745
        %v1760 = vmul.f32 %v986, %v1745
        %v1761 = vmul.f32 %v988, %v1745
        %v1762 = vmul.f32 %v990, %v1745
        %v1763 = vmul.f32 %v996, %v1745
        %v1764 = vmul.f32 %v998, %v1745
        %v1765 = vmul.f32 %v1000, %v1745
        %v1766 = vmul.f32 %v1002, %v1745
        %v1767 = vmul.f32 %v1004, %v1745
        %v1768 = vmul.f32 %v1006, %v1745
        %v1769 = vmul.f32 %v1008, %v1745
        %v1770 = vmul.f32 %v1010, %v1745
        %v1771 = vmul.f32 %v1016, %v1745
        %v1772 = vmul.f32 %v1018, %v1745
        %v1773 = vmul.f32 %v1020, %v1745
        %v1774 = vmul.f32 %v1022, %v1745
        %v1775 = vmul.f32 %v1024, %v1745
        %v1776 = vmul.f32 %v1026, %v1745
        %v1777 = vmul.f32 %v1028, %v1745
        %v1778 = vmul.f32 %v1030, %v1745
        %v1779 = vadd.f32 %v1707, %v1747
        %v1780 = vadd.f32 %v1708, %v1748
        %v1781 = vadd.f32 %v1709, %v1749
        %v1782 = vadd.f32 %v1710, %v1750
        %v1783 = vadd.f32 %v1711, %v1751
        %v1784 = vadd.f32 %v1712, %v1752
        %v1785 = vadd.f32 %v1713, %v1753
        %v1786 = vadd.f32 %v1714, %v1754
        %v1787 = vadd.f32 %v1715, %v1755
        %v1788 = vadd.f32 %v1716, %v1756
        %v1789 = vadd.f32 %v1717, %v1757
        %v1790 = vadd.f32 %v1718, %v1758
        %v1791 = vadd.f32 %v1719, %v1759
        %v1792 = vadd.f32 %v1720, %v1760
        %v1793 = vadd.f32 %v1721, %v1761
        %v1794 = vadd.f32 %v1722, %v1762
        %v1795 = vadd.f32 %v1723, %v1763
        %v1796 = vadd.f32 %v1724, %v1764
        %v1797 = vadd.f32 %v1725, %v1765
        %v1798 = vadd.f32 %v1726, %v1766
        %v1799 = vadd.f32 %v1727, %v1767
        %v1800 = vadd.f32 %v1728, %v1768
        %v1801 = vadd.f32 %v1729, %v1769
        %v1802 = vadd.f32 %v1730, %v1770
        %v1803 = vadd.f32 %v1731, %v1771
        %v1804 = vadd.f32 %v1732, %v1772
        %v1805 = vadd.f32 %v1733, %v1773
        %v1806 = vadd.f32 %v1734, %v1774
        %v1807 = vadd.f32 %v1735, %v1775
        %v1808 = vadd.f32 %v1736, %v1776
        %v1809 = vadd.f32 %v1737, %v1777
        %v1810 = vadd.f32 %v1738, %v1778
        %s1811 = scalar_lea.vmem [#allocation8], 4
        %v1812 = vld [vmem:[%s1811] sm:$0x1]
        %v1814 = vlaneseq
        %v1815 = vshrl.u32 %v1814, 7
        %v1816 = vsub.s32 0, %v1815
        %v1817 = vrot.slane %v1812, %v1816
        %v1819 = vmul.f32 %v956, %v1817
        %v1820 = vmul.f32 %v957, %v1817
        %v1821 = vmul.f32 %v958, %v1817
        %v1822 = vmul.f32 %v959, %v1817
        %v1823 = vmul.f32 %v960, %v1817
        %v1824 = vmul.f32 %v961, %v1817
        %v1825 = vmul.f32 %v962, %v1817
        %v1826 = vmul.f32 %v963, %v1817
        %v1827 = vmul.f32 %v964, %v1817
        %v1828 = vmul.f32 %v965, %v1817
        %v1829 = vmul.f32 %v966, %v1817
        %v1830 = vmul.f32 %v967, %v1817
        %v1831 = vmul.f32 %v968, %v1817
        %v1832 = vmul.f32 %v969, %v1817
        %v1833 = vmul.f32 %v970, %v1817
        %v1834 = vmul.f32 %v971, %v1817
        %v1835 = vmul.f32 %v976, %v1817
        %v1836 = vmul.f32 %v977, %v1817
        %v1837 = vmul.f32 %v978, %v1817
        %v1838 = vmul.f32 %v979, %v1817
        %v1839 = vmul.f32 %v980, %v1817
        %v1840 = vmul.f32 %v981, %v1817
        %v1841 = vmul.f32 %v982, %v1817
        %v1842 = vmul.f32 %v983, %v1817
        %v1843 = vmul.f32 %v984, %v1817
        %v1844 = vmul.f32 %v985, %v1817
        %v1845 = vmul.f32 %v986, %v1817
        %v1846 = vmul.f32 %v987, %v1817
        %v1847 = vmul.f32 %v988, %v1817
        %v1848 = vmul.f32 %v989, %v1817
        %v1849 = vmul.f32 %v990, %v1817
        %v1850 = vmul.f32 %v991, %v1817
        %v1851 = vmul.f32 %v996, %v1817
        %v1852 = vmul.f32 %v997, %v1817
        %v1853 = vmul.f32 %v998, %v1817
        %v1854 = vmul.f32 %v999, %v1817
        %v1855 = vmul.f32 %v1000, %v1817
        %v1856 = vmul.f32 %v1001, %v1817
        %v1857 = vmul.f32 %v1002, %v1817
        %v1858 = vmul.f32 %v1003, %v1817
        %v1859 = vmul.f32 %v1004, %v1817
        %v1860 = vmul.f32 %v1005, %v1817
        %v1861 = vmul.f32 %v1006, %v1817
        %v1862 = vmul.f32 %v1007, %v1817
        %v1863 = vmul.f32 %v1008, %v1817
        %v1864 = vmul.f32 %v1009, %v1817
        %v1865 = vmul.f32 %v1010, %v1817
        %v1866 = vmul.f32 %v1011, %v1817
        %v1867 = vmul.f32 %v1016, %v1817
        %v1868 = vmul.f32 %v1017, %v1817
        %v1869 = vmul.f32 %v1018, %v1817
        %v1870 = vmul.f32 %v1019, %v1817
        %v1871 = vmul.f32 %v1020, %v1817
        %v1872 = vmul.f32 %v1021, %v1817
        %v1873 = vmul.f32 %v1022, %v1817
        %v1874 = vmul.f32 %v1023, %v1817
        %v1875 = vmul.f32 %v1024, %v1817
        %v1876 = vmul.f32 %v1025, %v1817
        %v1877 = vmul.f32 %v1026, %v1817
        %v1878 = vmul.f32 %v1027, %v1817
        %v1879 = vmul.f32 %v1028, %v1817
        %v1880 = vmul.f32 %v1029, %v1817
        %v1881 = vmul.f32 %v1030, %v1817
        %v1882 = vmul.f32 %v1031, %v1817
        %v1947 = vrot.slane %v1819, 1
        %v1948 = vrot.slane %v1820, 1
        %v1949 = vsel %vm1281, %v1947, %v1948
        %v1950 = vrot.slane %v1821, 1
        %v1951 = vrot.slane %v1822, 1
        %v1952 = vsel %vm1281, %v1950, %v1951
        %v1953 = vrot.slane %v1823, 1
        %v1954 = vrot.slane %v1824, 1
        %v1955 = vsel %vm1281, %v1953, %v1954
        %v1956 = vrot.slane %v1825, 1
        %v1957 = vrot.slane %v1826, 1
        %v1958 = vsel %vm1281, %v1956, %v1957
        %v1959 = vrot.slane %v1827, 1
        %v1960 = vrot.slane %v1828, 1
        %v1961 = vsel %vm1281, %v1959, %v1960
        %v1962 = vrot.slane %v1829, 1
        %v1963 = vrot.slane %v1830, 1
        %v1964 = vsel %vm1281, %v1962, %v1963
        %v1965 = vrot.slane %v1831, 1
        %v1966 = vrot.slane %v1832, 1
        %v1967 = vsel %vm1281, %v1965, %v1966
        %v1968 = vrot.slane %v1833, 1
        %v1969 = vrot.slane %v1834, 1
        %v1970 = vsel %vm1281, %v1968, %v1969
        %v1971 = vrot.slane %v1835, 1
        %v1972 = vrot.slane %v1836, 1
        %v1973 = vsel %vm1281, %v1971, %v1972
        %v1974 = vrot.slane %v1837, 1
        %v1975 = vrot.slane %v1838, 1
        %v1976 = vsel %vm1281, %v1974, %v1975
        %v1977 = vrot.slane %v1839, 1
        %v1978 = vrot.slane %v1840, 1
        %v1979 = vsel %vm1281, %v1977, %v1978
        %v1980 = vrot.slane %v1841, 1
        %v1981 = vrot.slane %v1842, 1
        %v1982 = vsel %vm1281, %v1980, %v1981
        %v1983 = vrot.slane %v1843, 1
        %v1984 = vrot.slane %v1844, 1
        %v1985 = vsel %vm1281, %v1983, %v1984
        %v1986 = vrot.slane %v1845, 1
        %v1987 = vrot.slane %v1846, 1
        %v1988 = vsel %vm1281, %v1986, %v1987
        %v1989 = vrot.slane %v1847, 1
        %v1990 = vrot.slane %v1848, 1
        %v1991 = vsel %vm1281, %v1989, %v1990
        %v1992 = vrot.slane %v1849, 1
        %v1993 = vrot.slane %v1850, 1
        %v1994 = vsel %vm1281, %v1992, %v1993
        %v1995 = vrot.slane %v1851, 1
        %v1996 = vrot.slane %v1852, 1
        %v1997 = vsel %vm1281, %v1995, %v1996
        %v1998 = vrot.slane %v1853, 1
        %v1999 = vrot.slane %v1854, 1
        %v2000 = vsel %vm1281, %v1998, %v1999
        %v2001 = vrot.slane %v1855, 1
        %v2002 = vrot.slane %v1856, 1
        %v2003 = vsel %vm1281, %v2001, %v2002
        %v2004 = vrot.slane %v1857, 1
        %v2005 = vrot.slane %v1858, 1
        %v2006 = vsel %vm1281, %v2004, %v2005
        %v2007 = vrot.slane %v1859, 1
        %v2008 = vrot.slane %v1860, 1
        %v2009 = vsel %vm1281, %v2007, %v2008
        %v2010 = vrot.slane %v1861, 1
        %v2011 = vrot.slane %v1862, 1
        %v2012 = vsel %vm1281, %v2010, %v2011
        %v2013 = vrot.slane %v1863, 1
        %v2014 = vrot.slane %v1864, 1
        %v2015 = vsel %vm1281, %v2013, %v2014
        %v2016 = vrot.slane %v1865, 1
        %v2017 = vrot.slane %v1866, 1
        %v2018 = vsel %vm1281, %v2016, %v2017
        %v2019 = vrot.slane %v1867, 1
        %v2020 = vrot.slane %v1868, 1
        %v2021 = vsel %vm1281, %v2019, %v2020
        %v2022 = vrot.slane %v1869, 1
        %v2023 = vrot.slane %v1870, 1
        %v2024 = vsel %vm1281, %v2022, %v2023
        %v2025 = vrot.slane %v1871, 1
        %v2026 = vrot.slane %v1872, 1
        %v2027 = vsel %vm1281, %v2025, %v2026
        %v2028 = vrot.slane %v1873, 1
        %v2029 = vrot.slane %v1874, 1
        %v2030 = vsel %vm1281, %v2028, %v2029
        %v2031 = vrot.slane %v1875, 1
        %v2032 = vrot.slane %v1876, 1
        %v2033 = vsel %vm1281, %v2031, %v2032
        %v2034 = vrot.slane %v1877, 1
        %v2035 = vrot.slane %v1878, 1
        %v2036 = vsel %vm1281, %v2034, %v2035
        %v2037 = vrot.slane %v1879, 1
        %v2038 = vrot.slane %v1880, 1
        %v2039 = vsel %vm1281, %v2037, %v2038
        %v2040 = vrot.slane %v1881, 1
        %v2041 = vrot.slane %v1882, 1
        %v2042 = vsel %vm1281, %v2040, %v2041
        %v2075 = vadd.f32 %v1779, %v1949
        %v2076 = vadd.f32 %v1780, %v1952
        %v2077 = vadd.f32 %v1781, %v1955
        %v2078 = vadd.f32 %v1782, %v1958
        %v2079 = vadd.f32 %v1783, %v1961
        %v2080 = vadd.f32 %v1784, %v1964
        %v2081 = vadd.f32 %v1785, %v1967
        %v2082 = vadd.f32 %v1786, %v1970
        %v2083 = vadd.f32 %v1787, %v1973
        %v2084 = vadd.f32 %v1788, %v1976
        %v2085 = vadd.f32 %v1789, %v1979
        %v2086 = vadd.f32 %v1790, %v1982
        %v2087 = vadd.f32 %v1791, %v1985
        %v2088 = vadd.f32 %v1792, %v1988
        %v2089 = vadd.f32 %v1793, %v1991
        %v2090 = vadd.f32 %v1794, %v1994
        %v2091 = vadd.f32 %v1795, %v1997
        %v2092 = vadd.f32 %v1796, %v2000
        %v2093 = vadd.f32 %v1797, %v2003
        %v2094 = vadd.f32 %v1798, %v2006
        %v2095 = vadd.f32 %v1799, %v2009
        %v2096 = vadd.f32 %v1800, %v2012
        %v2097 = vadd.f32 %v1801, %v2015
        %v2098 = vadd.f32 %v1802, %v2018
        %v2099 = vadd.f32 %v1803, %v2021
        %v2100 = vadd.f32 %v1804, %v2024
        %v2101 = vadd.f32 %v1805, %v2027
        %v2102 = vadd.f32 %v1806, %v2030
        %v2103 = vadd.f32 %v1807, %v2033
        %v2104 = vadd.f32 %v1808, %v2036
        %v2105 = vadd.f32 %v1809, %v2039
        %v2106 = vadd.f32 %v1810, %v2042
        %s2107 = scalar_lea.vmem [#allocation8], 5
        %v2108 = vld [vmem:[%s2107] sm:$0x1]
        %v2110 = vlaneseq
        %v2111 = vshrl.u32 %v2110, 7
        %v2112 = vsub.s32 0, %v2111
        %v2113 = vrot.slane %v2108, %v2112
        %v2115 = vmul.f32 %v956, %v2113
        %v2116 = vmul.f32 %v957, %v2113
        %v2117 = vmul.f32 %v958, %v2113
        %v2118 = vmul.f32 %v959, %v2113
        %v2119 = vmul.f32 %v960, %v2113
        %v2120 = vmul.f32 %v961, %v2113
        %v2121 = vmul.f32 %v962, %v2113
        %v2122 = vmul.f32 %v963, %v2113
        %v2123 = vmul.f32 %v964, %v2113
        %v2124 = vmul.f32 %v965, %v2113
        %v2125 = vmul.f32 %v966, %v2113
        %v2126 = vmul.f32 %v967, %v2113
        %v2127 = vmul.f32 %v968, %v2113
        %v2128 = vmul.f32 %v969, %v2113
        %v2129 = vmul.f32 %v970, %v2113
        %v2130 = vmul.f32 %v971, %v2113
        %v2131 = vmul.f32 %v976, %v2113
        %v2132 = vmul.f32 %v977, %v2113
        %v2133 = vmul.f32 %v978, %v2113
        %v2134 = vmul.f32 %v979, %v2113
        %v2135 = vmul.f32 %v980, %v2113
        %v2136 = vmul.f32 %v981, %v2113
        %v2137 = vmul.f32 %v982, %v2113
        %v2138 = vmul.f32 %v983, %v2113
        %v2139 = vmul.f32 %v984, %v2113
        %v2140 = vmul.f32 %v985, %v2113
        %v2141 = vmul.f32 %v986, %v2113
        %v2142 = vmul.f32 %v987, %v2113
        %v2143 = vmul.f32 %v988, %v2113
        %v2144 = vmul.f32 %v989, %v2113
        %v2145 = vmul.f32 %v990, %v2113
        %v2146 = vmul.f32 %v991, %v2113
        %v2147 = vmul.f32 %v996, %v2113
        %v2148 = vmul.f32 %v997, %v2113
        %v2149 = vmul.f32 %v998, %v2113
        %v2150 = vmul.f32 %v999, %v2113
        %v2151 = vmul.f32 %v1000, %v2113
        %v2152 = vmul.f32 %v1001, %v2113
        %v2153 = vmul.f32 %v1002, %v2113
        %v2154 = vmul.f32 %v1003, %v2113
        %v2155 = vmul.f32 %v1004, %v2113
        %v2156 = vmul.f32 %v1005, %v2113
        %v2157 = vmul.f32 %v1006, %v2113
        %v2158 = vmul.f32 %v1007, %v2113
        %v2159 = vmul.f32 %v1008, %v2113
        %v2160 = vmul.f32 %v1009, %v2113
        %v2161 = vmul.f32 %v1010, %v2113
        %v2162 = vmul.f32 %v1011, %v2113
        %v2163 = vmul.f32 %v1016, %v2113
        %v2164 = vmul.f32 %v1017, %v2113
        %v2165 = vmul.f32 %v1018, %v2113
        %v2166 = vmul.f32 %v1019, %v2113
        %v2167 = vmul.f32 %v1020, %v2113
        %v2168 = vmul.f32 %v1021, %v2113
        %v2169 = vmul.f32 %v1022, %v2113
        %v2170 = vmul.f32 %v1023, %v2113
        %v2171 = vmul.f32 %v1024, %v2113
        %v2172 = vmul.f32 %v1025, %v2113
        %v2173 = vmul.f32 %v1026, %v2113
        %v2174 = vmul.f32 %v1027, %v2113
        %v2175 = vmul.f32 %v1028, %v2113
        %v2176 = vmul.f32 %v1029, %v2113
        %v2177 = vmul.f32 %v1030, %v2113
        %v2178 = vmul.f32 %v1031, %v2113
        %v2243 = vrot.slane %v2115, 2
        %v2244 = vrot.slane %v2116, 2
        %v2245 = vsel %vm1578, %v2243, %v2244
        %v2246 = vrot.slane %v2117, 2
        %v2247 = vrot.slane %v2118, 2
        %v2248 = vsel %vm1578, %v2246, %v2247
        %v2249 = vrot.slane %v2119, 2
        %v2250 = vrot.slane %v2120, 2
        %v2251 = vsel %vm1578, %v2249, %v2250
        %v2252 = vrot.slane %v2121, 2
        %v2253 = vrot.slane %v2122, 2
        %v2254 = vsel %vm1578, %v2252, %v2253
        %v2255 = vrot.slane %v2123, 2
        %v2256 = vrot.slane %v2124, 2
        %v2257 = vsel %vm1578, %v2255, %v2256
        %v2258 = vrot.slane %v2125, 2
        %v2259 = vrot.slane %v2126, 2
        %v2260 = vsel %vm1578, %v2258, %v2259
        %v2261 = vrot.slane %v2127, 2
        %v2262 = vrot.slane %v2128, 2
        %v2263 = vsel %vm1578, %v2261, %v2262
        %v2264 = vrot.slane %v2129, 2
        %v2265 = vrot.slane %v2130, 2
        %v2266 = vsel %vm1578, %v2264, %v2265
        %v2267 = vrot.slane %v2131, 2
        %v2268 = vrot.slane %v2132, 2
        %v2269 = vsel %vm1578, %v2267, %v2268
        %v2270 = vrot.slane %v2133, 2
        %v2271 = vrot.slane %v2134, 2
        %v2272 = vsel %vm1578, %v2270, %v2271
        %v2273 = vrot.slane %v2135, 2
        %v2274 = vrot.slane %v2136, 2
        %v2275 = vsel %vm1578, %v2273, %v2274
        %v2276 = vrot.slane %v2137, 2
        %v2277 = vrot.slane %v2138, 2
        %v2278 = vsel %vm1578, %v2276, %v2277
        %v2279 = vrot.slane %v2139, 2
        %v2280 = vrot.slane %v2140, 2
        %v2281 = vsel %vm1578, %v2279, %v2280
        %v2282 = vrot.slane %v2141, 2
        %v2283 = vrot.slane %v2142, 2
        %v2284 = vsel %vm1578, %v2282, %v2283
        %v2285 = vrot.slane %v2143, 2
        %v2286 = vrot.slane %v2144, 2
        %v2287 = vsel %vm1578, %v2285, %v2286
        %v2288 = vrot.slane %v2145, 2
        %v2289 = vrot.slane %v2146, 2
        %v2290 = vsel %vm1578, %v2288, %v2289
        %v2291 = vrot.slane %v2147, 2
        %v2292 = vrot.slane %v2148, 2
        %v2293 = vsel %vm1578, %v2291, %v2292
        %v2294 = vrot.slane %v2149, 2
        %v2295 = vrot.slane %v2150, 2
        %v2296 = vsel %vm1578, %v2294, %v2295
        %v2297 = vrot.slane %v2151, 2
        %v2298 = vrot.slane %v2152, 2
        %v2299 = vsel %vm1578, %v2297, %v2298
        %v2300 = vrot.slane %v2153, 2
        %v2301 = vrot.slane %v2154, 2
        %v2302 = vsel %vm1578, %v2300, %v2301
        %v2303 = vrot.slane %v2155, 2
        %v2304 = vrot.slane %v2156, 2
        %v2305 = vsel %vm1578, %v2303, %v2304
        %v2306 = vrot.slane %v2157, 2
        %v2307 = vrot.slane %v2158, 2
        %v2308 = vsel %vm1578, %v2306, %v2307
        %v2309 = vrot.slane %v2159, 2
        %v2310 = vrot.slane %v2160, 2
        %v2311 = vsel %vm1578, %v2309, %v2310
        %v2312 = vrot.slane %v2161, 2
        %v2313 = vrot.slane %v2162, 2
        %v2314 = vsel %vm1578, %v2312, %v2313
        %v2315 = vrot.slane %v2163, 2
        %v2316 = vrot.slane %v2164, 2
        %v2317 = vsel %vm1578, %v2315, %v2316
        %v2318 = vrot.slane %v2165, 2
        %v2319 = vrot.slane %v2166, 2
        %v2320 = vsel %vm1578, %v2318, %v2319
        %v2321 = vrot.slane %v2167, 2
        %v2322 = vrot.slane %v2168, 2
        %v2323 = vsel %vm1578, %v2321, %v2322
        %v2324 = vrot.slane %v2169, 2
        %v2325 = vrot.slane %v2170, 2
        %v2326 = vsel %vm1578, %v2324, %v2325
        %v2327 = vrot.slane %v2171, 2
        %v2328 = vrot.slane %v2172, 2
        %v2329 = vsel %vm1578, %v2327, %v2328
        %v2330 = vrot.slane %v2173, 2
        %v2331 = vrot.slane %v2174, 2
        %v2332 = vsel %vm1578, %v2330, %v2331
        %v2333 = vrot.slane %v2175, 2
        %v2334 = vrot.slane %v2176, 2
        %v2335 = vsel %vm1578, %v2333, %v2334
        %v2336 = vrot.slane %v2177, 2
        %v2337 = vrot.slane %v2178, 2
        %v2338 = vsel %vm1578, %v2336, %v2337
        %v2371 = vadd.f32 %v2075, %v2245
        %v2372 = vadd.f32 %v2076, %v2248
        %v2373 = vadd.f32 %v2077, %v2251
        %v2374 = vadd.f32 %v2078, %v2254
        %v2375 = vadd.f32 %v2079, %v2257
        %v2376 = vadd.f32 %v2080, %v2260
        %v2377 = vadd.f32 %v2081, %v2263
        %v2378 = vadd.f32 %v2082, %v2266
        %v2379 = vadd.f32 %v2083, %v2269
        %v2380 = vadd.f32 %v2084, %v2272
        %v2381 = vadd.f32 %v2085, %v2275
        %v2382 = vadd.f32 %v2086, %v2278
        %v2383 = vadd.f32 %v2087, %v2281
        %v2384 = vadd.f32 %v2088, %v2284
        %v2385 = vadd.f32 %v2089, %v2287
        %v2386 = vadd.f32 %v2090, %v2290
        %v2387 = vadd.f32 %v2091, %v2293
        %v2388 = vadd.f32 %v2092, %v2296
        %v2389 = vadd.f32 %v2093, %v2299
        %v2390 = vadd.f32 %v2094, %v2302
        %v2391 = vadd.f32 %v2095, %v2305
        %v2392 = vadd.f32 %v2096, %v2308
        %v2393 = vadd.f32 %v2097, %v2311
        %v2394 = vadd.f32 %v2098, %v2314
        %v2395 = vadd.f32 %v2099, %v2317
        %v2396 = vadd.f32 %v2100, %v2320
        %v2397 = vadd.f32 %v2101, %v2323
        %v2398 = vadd.f32 %v2102, %v2326
        %v2399 = vadd.f32 %v2103, %v2329
        %v2400 = vadd.f32 %v2104, %v2332
        %v2401 = vadd.f32 %v2105, %v2335
        %v2402 = vadd.f32 %v2106, %v2338
        %s2403 = scalar_lea.vmem [#allocation8], 6
        %v2404 = vld [vmem:[%s2403] sm:$0x1]
        %v2406 = vlaneseq
        %v2407 = vshrl.u32 %v2406, 7
        %v2408 = vsub.s32 0, %v2407
        %v2409 = vrot.slane %v2404, %v2408
        %v2411 = vmul.f32 %v958, %v2409
        %v2412 = vmul.f32 %v960, %v2409
        %v2413 = vmul.f32 %v962, %v2409
        %v2414 = vmul.f32 %v964, %v2409
        %v2415 = vmul.f32 %v966, %v2409
        %v2416 = vmul.f32 %v968, %v2409
        %v2417 = vmul.f32 %v970, %v2409
        %v2418 = vmul.f32 %v972, %v2409
        %v2419 = vmul.f32 %v978, %v2409
        %v2420 = vmul.f32 %v980, %v2409
        %v2421 = vmul.f32 %v982, %v2409
        %v2422 = vmul.f32 %v984, %v2409
        %v2423 = vmul.f32 %v986, %v2409
        %v2424 = vmul.f32 %v988, %v2409
        %v2425 = vmul.f32 %v990, %v2409
        %v2426 = vmul.f32 %v992, %v2409
        %v2427 = vmul.f32 %v998, %v2409
        %v2428 = vmul.f32 %v1000, %v2409
        %v2429 = vmul.f32 %v1002, %v2409
        %v2430 = vmul.f32 %v1004, %v2409
        %v2431 = vmul.f32 %v1006, %v2409
        %v2432 = vmul.f32 %v1008, %v2409
        %v2433 = vmul.f32 %v1010, %v2409
        %v2434 = vmul.f32 %v1012, %v2409
        %v2435 = vmul.f32 %v1018, %v2409
        %v2436 = vmul.f32 %v1020, %v2409
        %v2437 = vmul.f32 %v1022, %v2409
        %v2438 = vmul.f32 %v1024, %v2409
        %v2439 = vmul.f32 %v1026, %v2409
        %v2440 = vmul.f32 %v1028, %v2409
        %v2441 = vmul.f32 %v1030, %v2409
        %v2442 = vmul.f32 %v1032, %v2409
        %v2443 = vadd.f32 %v2371, %v2411
        %v2444 = vadd.f32 %v2372, %v2412
        %v2445 = vadd.f32 %v2373, %v2413
        %v2446 = vadd.f32 %v2374, %v2414
        %v2447 = vadd.f32 %v2375, %v2415
        %v2448 = vadd.f32 %v2376, %v2416
        %v2449 = vadd.f32 %v2377, %v2417
        %v2450 = vadd.f32 %v2378, %v2418
        %v2451 = vadd.f32 %v2379, %v2419
        %v2452 = vadd.f32 %v2380, %v2420
        %v2453 = vadd.f32 %v2381, %v2421
        %v2454 = vadd.f32 %v2382, %v2422
        %v2455 = vadd.f32 %v2383, %v2423
        %v2456 = vadd.f32 %v2384, %v2424
        %v2457 = vadd.f32 %v2385, %v2425
        %v2458 = vadd.f32 %v2386, %v2426
        %v2459 = vadd.f32 %v2387, %v2427
        %v2460 = vadd.f32 %v2388, %v2428
        %v2461 = vadd.f32 %v2389, %v2429
        %v2462 = vadd.f32 %v2390, %v2430
        %v2463 = vadd.f32 %v2391, %v2431
        %v2464 = vadd.f32 %v2392, %v2432
        %v2465 = vadd.f32 %v2393, %v2433
        %v2466 = vadd.f32 %v2394, %v2434
        %v2467 = vadd.f32 %v2395, %v2435
        %v2468 = vadd.f32 %v2396, %v2436
        %v2469 = vadd.f32 %v2397, %v2437
        %v2470 = vadd.f32 %v2398, %v2438
        %v2471 = vadd.f32 %v2399, %v2439
        %v2472 = vadd.f32 %v2400, %v2440
        %v2473 = vadd.f32 %v2401, %v2441
        %v2474 = vadd.f32 %v2402, %v2442
        %s2475 = scalar_lea.vmem [#allocation8], 7
        %v2476 = vld [vmem:[%s2475] sm:$0x1]
        %v2478 = vlaneseq
        %v2479 = vshrl.u32 %v2478, 7
        %v2480 = vsub.s32 0, %v2479
        %v2481 = vrot.slane %v2476, %v2480
        %v2483 = vmul.f32 %v958, %v2481
        %v2484 = vmul.f32 %v959, %v2481
        %v2485 = vmul.f32 %v960, %v2481
        %v2486 = vmul.f32 %v961, %v2481
        %v2487 = vmul.f32 %v962, %v2481
        %v2488 = vmul.f32 %v963, %v2481
        %v2489 = vmul.f32 %v964, %v2481
        %v2490 = vmul.f32 %v965, %v2481
        %v2491 = vmul.f32 %v966, %v2481
        %v2492 = vmul.f32 %v967, %v2481
        %v2493 = vmul.f32 %v968, %v2481
        %v2494 = vmul.f32 %v969, %v2481
        %v2495 = vmul.f32 %v970, %v2481
        %v2496 = vmul.f32 %v971, %v2481
        %v2497 = vmul.f32 %v972, %v2481
        %v2498 = vmul.f32 %v973, %v2481
        %v2499 = vmul.f32 %v978, %v2481
        %v2500 = vmul.f32 %v979, %v2481
        %v2501 = vmul.f32 %v980, %v2481
        %v2502 = vmul.f32 %v981, %v2481
        %v2503 = vmul.f32 %v982, %v2481
        %v2504 = vmul.f32 %v983, %v2481
        %v2505 = vmul.f32 %v984, %v2481
        %v2506 = vmul.f32 %v985, %v2481
        %v2507 = vmul.f32 %v986, %v2481
        %v2508 = vmul.f32 %v987, %v2481
        %v2509 = vmul.f32 %v988, %v2481
        %v2510 = vmul.f32 %v989, %v2481
        %v2511 = vmul.f32 %v990, %v2481
        %v2512 = vmul.f32 %v991, %v2481
        %v2513 = vmul.f32 %v992, %v2481
        %v2514 = vmul.f32 %v993, %v2481
        %v2515 = vmul.f32 %v998, %v2481
        %v2516 = vmul.f32 %v999, %v2481
        %v2517 = vmul.f32 %v1000, %v2481
        %v2518 = vmul.f32 %v1001, %v2481
        %v2519 = vmul.f32 %v1002, %v2481
        %v2520 = vmul.f32 %v1003, %v2481
        %v2521 = vmul.f32 %v1004, %v2481
        %v2522 = vmul.f32 %v1005, %v2481
        %v2523 = vmul.f32 %v1006, %v2481
        %v2524 = vmul.f32 %v1007, %v2481
        %v2525 = vmul.f32 %v1008, %v2481
        %v2526 = vmul.f32 %v1009, %v2481
        %v2527 = vmul.f32 %v1010, %v2481
        %v2528 = vmul.f32 %v1011, %v2481
        %v2529 = vmul.f32 %v1012, %v2481
        %v2530 = vmul.f32 %v1013, %v2481
        %v2531 = vmul.f32 %v1018, %v2481
        %v2532 = vmul.f32 %v1019, %v2481
        %v2533 = vmul.f32 %v1020, %v2481
        %v2534 = vmul.f32 %v1021, %v2481
        %v2535 = vmul.f32 %v1022, %v2481
        %v2536 = vmul.f32 %v1023, %v2481
        %v2537 = vmul.f32 %v1024, %v2481
        %v2538 = vmul.f32 %v1025, %v2481
        %v2539 = vmul.f32 %v1026, %v2481
        %v2540 = vmul.f32 %v1027, %v2481
        %v2541 = vmul.f32 %v1028, %v2481
        %v2542 = vmul.f32 %v1029, %v2481
        %v2543 = vmul.f32 %v1030, %v2481
        %v2544 = vmul.f32 %v1031, %v2481
        %v2545 = vmul.f32 %v1032, %v2481
        %v2546 = vmul.f32 %v1033, %v2481
        %v2611 = vrot.slane %v2483, 1
        %v2612 = vrot.slane %v2484, 1
        %v2613 = vsel %vm1281, %v2611, %v2612
        %v2614 = vrot.slane %v2485, 1
        %v2615 = vrot.slane %v2486, 1
        %v2616 = vsel %vm1281, %v2614, %v2615
        %v2617 = vrot.slane %v2487, 1
        %v2618 = vrot.slane %v2488, 1
        %v2619 = vsel %vm1281, %v2617, %v2618
        %v2620 = vrot.slane %v2489, 1
        %v2621 = vrot.slane %v2490, 1
        %v2622 = vsel %vm1281, %v2620, %v2621
        %v2623 = vrot.slane %v2491, 1
        %v2624 = vrot.slane %v2492, 1
        %v2625 = vsel %vm1281, %v2623, %v2624
        %v2626 = vrot.slane %v2493, 1
        %v2627 = vrot.slane %v2494, 1
        %v2628 = vsel %vm1281, %v2626, %v2627
        %v2629 = vrot.slane %v2495, 1
        %v2630 = vrot.slane %v2496, 1
        %v2631 = vsel %vm1281, %v2629, %v2630
        %v2632 = vrot.slane %v2497, 1
        %v2633 = vrot.slane %v2498, 1
        %v2634 = vsel %vm1281, %v2632, %v2633
        %v2635 = vrot.slane %v2499, 1
        %v2636 = vrot.slane %v2500, 1
        %v2637 = vsel %vm1281, %v2635, %v2636
        %v2638 = vrot.slane %v2501, 1
        %v2639 = vrot.slane %v2502, 1
        %v2640 = vsel %vm1281, %v2638, %v2639
        %v2641 = vrot.slane %v2503, 1
        %v2642 = vrot.slane %v2504, 1
        %v2643 = vsel %vm1281, %v2641, %v2642
        %v2644 = vrot.slane %v2505, 1
        %v2645 = vrot.slane %v2506, 1
        %v2646 = vsel %vm1281, %v2644, %v2645
        %v2647 = vrot.slane %v2507, 1
        %v2648 = vrot.slane %v2508, 1
        %v2649 = vsel %vm1281, %v2647, %v2648
        %v2650 = vrot.slane %v2509, 1
        %v2651 = vrot.slane %v2510, 1
        %v2652 = vsel %vm1281, %v2650, %v2651
        %v2653 = vrot.slane %v2511, 1
        %v2654 = vrot.slane %v2512, 1
        %v2655 = vsel %vm1281, %v2653, %v2654
        %v2656 = vrot.slane %v2513, 1
        %v2657 = vrot.slane %v2514, 1
        %v2658 = vsel %vm1281, %v2656, %v2657
        %v2659 = vrot.slane %v2515, 1
        %v2660 = vrot.slane %v2516, 1
        %v2661 = vsel %vm1281, %v2659, %v2660
        %v2662 = vrot.slane %v2517, 1
        %v2663 = vrot.slane %v2518, 1
        %v2664 = vsel %vm1281, %v2662, %v2663
        %v2665 = vrot.slane %v2519, 1
        %v2666 = vrot.slane %v2520, 1
        %v2667 = vsel %vm1281, %v2665, %v2666
        %v2668 = vrot.slane %v2521, 1
        %v2669 = vrot.slane %v2522, 1
        %v2670 = vsel %vm1281, %v2668, %v2669
        %v2671 = vrot.slane %v2523, 1
        %v2672 = vrot.slane %v2524, 1
        %v2673 = vsel %vm1281, %v2671, %v2672
        %v2674 = vrot.slane %v2525, 1
        %v2675 = vrot.slane %v2526, 1
        %v2676 = vsel %vm1281, %v2674, %v2675
        %v2677 = vrot.slane %v2527, 1
        %v2678 = vrot.slane %v2528, 1
        %v2679 = vsel %vm1281, %v2677, %v2678
        %v2680 = vrot.slane %v2529, 1
        %v2681 = vrot.slane %v2530, 1
        %v2682 = vsel %vm1281, %v2680, %v2681
        %v2683 = vrot.slane %v2531, 1
        %v2684 = vrot.slane %v2532, 1
        %v2685 = vsel %vm1281, %v2683, %v2684
        %v2686 = vrot.slane %v2533, 1
        %v2687 = vrot.slane %v2534, 1
        %v2688 = vsel %vm1281, %v2686, %v2687
        %v2689 = vrot.slane %v2535, 1
        %v2690 = vrot.slane %v2536, 1
        %v2691 = vsel %vm1281, %v2689, %v2690
        %v2692 = vrot.slane %v2537, 1
        %v2693 = vrot.slane %v2538, 1
        %v2694 = vsel %vm1281, %v2692, %v2693
        %v2695 = vrot.slane %v2539, 1
        %v2696 = vrot.slane %v2540, 1
        %v2697 = vsel %vm1281, %v2695, %v2696
        %v2698 = vrot.slane %v2541, 1
        %v2699 = vrot.slane %v2542, 1
        %v2700 = vsel %vm1281, %v2698, %v2699
        %v2701 = vrot.slane %v2543, 1
        %v2702 = vrot.slane %v2544, 1
        %v2703 = vsel %vm1281, %v2701, %v2702
        %v2704 = vrot.slane %v2545, 1
        %v2705 = vrot.slane %v2546, 1
        %v2706 = vsel %vm1281, %v2704, %v2705
        %v2739 = vadd.f32 %v2443, %v2613
        %v2740 = vadd.f32 %v2444, %v2616
        %v2741 = vadd.f32 %v2445, %v2619
        %v2742 = vadd.f32 %v2446, %v2622
        %v2743 = vadd.f32 %v2447, %v2625
        %v2744 = vadd.f32 %v2448, %v2628
        %v2745 = vadd.f32 %v2449, %v2631
        %v2746 = vadd.f32 %v2450, %v2634
        %v2747 = vadd.f32 %v2451, %v2637
        %v2748 = vadd.f32 %v2452, %v2640
        %v2749 = vadd.f32 %v2453, %v2643
        %v2750 = vadd.f32 %v2454, %v2646
        %v2751 = vadd.f32 %v2455, %v2649
        %v2752 = vadd.f32 %v2456, %v2652
        %v2753 = vadd.f32 %v2457, %v2655
        %v2754 = vadd.f32 %v2458, %v2658
        %v2755 = vadd.f32 %v2459, %v2661
        %v2756 = vadd.f32 %v2460, %v2664
        %v2757 = vadd.f32 %v2461, %v2667
        %v2758 = vadd.f32 %v2462, %v2670
        %v2759 = vadd.f32 %v2463, %v2673
        %v2760 = vadd.f32 %v2464, %v2676
        %v2761 = vadd.f32 %v2465, %v2679
        %v2762 = vadd.f32 %v2466, %v2682
        %v2763 = vadd.f32 %v2467, %v2685
        %v2764 = vadd.f32 %v2468, %v2688
        %v2765 = vadd.f32 %v2469, %v2691
        %v2766 = vadd.f32 %v2470, %v2694
        %v2767 = vadd.f32 %v2471, %v2697
        %v2768 = vadd.f32 %v2472, %v2700
        %v2769 = vadd.f32 %v2473, %v2703
        %v2770 = vadd.f32 %v2474, %v2706
        %s2771 = scalar_lea.vmem [#allocation8], 8
        %v2772 = vld [vmem:[%s2771] sm:$0x1]
        %v2774 = vlaneseq
        %v2775 = vshrl.u32 %v2774, 7
        %v2776 = vsub.s32 0, %v2775
        %v2777 = vrot.slane %v2772, %v2776
        %v2779 = vmul.f32 %v958, %v2777
        %v2780 = vmul.f32 %v959, %v2777
        %v2781 = vmul.f32 %v960, %v2777
        %v2782 = vmul.f32 %v961, %v2777
        %v2783 = vmul.f32 %v962, %v2777
        %v2784 = vmul.f32 %v963, %v2777
        %v2785 = vmul.f32 %v964, %v2777
        %v2786 = vmul.f32 %v965, %v2777
        %v2787 = vmul.f32 %v966, %v2777
        %v2788 = vmul.f32 %v967, %v2777
        %v2789 = vmul.f32 %v968, %v2777
        %v2790 = vmul.f32 %v969, %v2777
        %v2791 = vmul.f32 %v970, %v2777
        %v2792 = vmul.f32 %v971, %v2777
        %v2793 = vmul.f32 %v972, %v2777
        %v2794 = vmul.f32 %v973, %v2777
        %v2795 = vmul.f32 %v978, %v2777
        %v2796 = vmul.f32 %v979, %v2777
        %v2797 = vmul.f32 %v980, %v2777
        %v2798 = vmul.f32 %v981, %v2777
        %v2799 = vmul.f32 %v982, %v2777
        %v2800 = vmul.f32 %v983, %v2777
        %v2801 = vmul.f32 %v984, %v2777
        %v2802 = vmul.f32 %v985, %v2777
        %v2803 = vmul.f32 %v986, %v2777
        %v2804 = vmul.f32 %v987, %v2777
        %v2805 = vmul.f32 %v988, %v2777
        %v2806 = vmul.f32 %v989, %v2777
        %v2807 = vmul.f32 %v990, %v2777
        %v2808 = vmul.f32 %v991, %v2777
        %v2809 = vmul.f32 %v992, %v2777
        %v2810 = vmul.f32 %v993, %v2777
        %v2811 = vmul.f32 %v998, %v2777
        %v2812 = vmul.f32 %v999, %v2777
        %v2813 = vmul.f32 %v1000, %v2777
        %v2814 = vmul.f32 %v1001, %v2777
        %v2815 = vmul.f32 %v1002, %v2777
        %v2816 = vmul.f32 %v1003, %v2777
        %v2817 = vmul.f32 %v1004, %v2777
        %v2818 = vmul.f32 %v1005, %v2777
        %v2819 = vmul.f32 %v1006, %v2777
        %v2820 = vmul.f32 %v1007, %v2777
        %v2821 = vmul.f32 %v1008, %v2777
        %v2822 = vmul.f32 %v1009, %v2777
        %v2823 = vmul.f32 %v1010, %v2777
        %v2824 = vmul.f32 %v1011, %v2777
        %v2825 = vmul.f32 %v1012, %v2777
        %v2826 = vmul.f32 %v1013, %v2777
        %v2827 = vmul.f32 %v1018, %v2777
        %v2828 = vmul.f32 %v1019, %v2777
        %v2829 = vmul.f32 %v1020, %v2777
        %v2830 = vmul.f32 %v1021, %v2777
        %v2831 = vmul.f32 %v1022, %v2777
        %v2832 = vmul.f32 %v1023, %v2777
        %v2833 = vmul.f32 %v1024, %v2777
        %v2834 = vmul.f32 %v1025, %v2777
        %v2835 = vmul.f32 %v1026, %v2777
        %v2836 = vmul.f32 %v1027, %v2777
        %v2837 = vmul.f32 %v1028, %v2777
        %v2838 = vmul.f32 %v1029, %v2777
        %v2839 = vmul.f32 %v1030, %v2777
        %v2840 = vmul.f32 %v1031, %v2777
        %v2841 = vmul.f32 %v1032, %v2777
        %v2842 = vmul.f32 %v1033, %v2777
        %v2907 = vrot.slane %v2779, 2
        %v2908 = vrot.slane %v2780, 2
        %v2909 = vsel %vm1578, %v2907, %v2908
        %v2910 = vrot.slane %v2781, 2
        %v2911 = vrot.slane %v2782, 2
        %v2912 = vsel %vm1578, %v2910, %v2911
        %v2913 = vrot.slane %v2783, 2
        %v2914 = vrot.slane %v2784, 2
        %v2915 = vsel %vm1578, %v2913, %v2914
        %v2916 = vrot.slane %v2785, 2
        %v2917 = vrot.slane %v2786, 2
        %v2918 = vsel %vm1578, %v2916, %v2917
        %v2919 = vrot.slane %v2787, 2
        %v2920 = vrot.slane %v2788, 2
        %v2921 = vsel %vm1578, %v2919, %v2920
        %v2922 = vrot.slane %v2789, 2
        %v2923 = vrot.slane %v2790, 2
        %v2924 = vsel %vm1578, %v2922, %v2923
        %v2925 = vrot.slane %v2791, 2
        %v2926 = vrot.slane %v2792, 2
        %v2927 = vsel %vm1578, %v2925, %v2926
        %v2928 = vrot.slane %v2793, 2
        %v2929 = vrot.slane %v2794, 2
        %v2930 = vsel %vm1578, %v2928, %v2929
        %v2931 = vrot.slane %v2795, 2
        %v2932 = vrot.slane %v2796, 2
        %v2933 = vsel %vm1578, %v2931, %v2932
        %v2934 = vrot.slane %v2797, 2
        %v2935 = vrot.slane %v2798, 2
        %v2936 = vsel %vm1578, %v2934, %v2935
        %v2937 = vrot.slane %v2799, 2
        %v2938 = vrot.slane %v2800, 2
        %v2939 = vsel %vm1578, %v2937, %v2938
        %v2940 = vrot.slane %v2801, 2
        %v2941 = vrot.slane %v2802, 2
        %v2942 = vsel %vm1578, %v2940, %v2941
        %v2943 = vrot.slane %v2803, 2
        %v2944 = vrot.slane %v2804, 2
        %v2945 = vsel %vm1578, %v2943, %v2944
        %v2946 = vrot.slane %v2805, 2
        %v2947 = vrot.slane %v2806, 2
        %v2948 = vsel %vm1578, %v2946, %v2947
        %v2949 = vrot.slane %v2807, 2
        %v2950 = vrot.slane %v2808, 2
        %v2951 = vsel %vm1578, %v2949, %v2950
        %v2952 = vrot.slane %v2809, 2
        %v2953 = vrot.slane %v2810, 2
        %v2954 = vsel %vm1578, %v2952, %v2953
        %v2955 = vrot.slane %v2811, 2
        %v2956 = vrot.slane %v2812, 2
        %v2957 = vsel %vm1578, %v2955, %v2956
        %v2958 = vrot.slane %v2813, 2
        %v2959 = vrot.slane %v2814, 2
        %v2960 = vsel %vm1578, %v2958, %v2959
        %v2961 = vrot.slane %v2815, 2
        %v2962 = vrot.slane %v2816, 2
        %v2963 = vsel %vm1578, %v2961, %v2962
        %v2964 = vrot.slane %v2817, 2
        %v2965 = vrot.slane %v2818, 2
        %v2966 = vsel %vm1578, %v2964, %v2965
        %v2967 = vrot.slane %v2819, 2
        %v2968 = vrot.slane %v2820, 2
        %v2969 = vsel %vm1578, %v2967, %v2968
        %v2970 = vrot.slane %v2821, 2
        %v2971 = vrot.slane %v2822, 2
        %v2972 = vsel %vm1578, %v2970, %v2971
        %v2973 = vrot.slane %v2823, 2
        %v2974 = vrot.slane %v2824, 2
        %v2975 = vsel %vm1578, %v2973, %v2974
        %v2976 = vrot.slane %v2825, 2
        %v2977 = vrot.slane %v2826, 2
        %v2978 = vsel %vm1578, %v2976, %v2977
        %v2979 = vrot.slane %v2827, 2
        %v2980 = vrot.slane %v2828, 2
        %v2981 = vsel %vm1578, %v2979, %v2980
        %v2982 = vrot.slane %v2829, 2
        %v2983 = vrot.slane %v2830, 2
        %v2984 = vsel %vm1578, %v2982, %v2983
        %v2985 = vrot.slane %v2831, 2
        %v2986 = vrot.slane %v2832, 2
        %v2987 = vsel %vm1578, %v2985, %v2986
        %v2988 = vrot.slane %v2833, 2
        %v2989 = vrot.slane %v2834, 2
        %v2990 = vsel %vm1578, %v2988, %v2989
        %v2991 = vrot.slane %v2835, 2
        %v2992 = vrot.slane %v2836, 2
        %v2993 = vsel %vm1578, %v2991, %v2992
        %v2994 = vrot.slane %v2837, 2
        %v2995 = vrot.slane %v2838, 2
        %v2996 = vsel %vm1578, %v2994, %v2995
        %v2997 = vrot.slane %v2839, 2
        %v2998 = vrot.slane %v2840, 2
        %v2999 = vsel %vm1578, %v2997, %v2998
        %v3000 = vrot.slane %v2841, 2
        %v3001 = vrot.slane %v2842, 2
        %v3002 = vsel %vm1578, %v3000, %v3001
        %v3035 = vadd.f32 %v2739, %v2909
        %v3036 = vadd.f32 %v2740, %v2912
        %v3037 = vadd.f32 %v2741, %v2915
        %v3038 = vadd.f32 %v2742, %v2918
        %v3039 = vadd.f32 %v2743, %v2921
        %v3040 = vadd.f32 %v2744, %v2924
        %v3041 = vadd.f32 %v2745, %v2927
        %v3042 = vadd.f32 %v2746, %v2930
        %v3043 = vadd.f32 %v2747, %v2933
        %v3044 = vadd.f32 %v2748, %v2936
        %v3045 = vadd.f32 %v2749, %v2939
        %v3046 = vadd.f32 %v2750, %v2942
        %v3047 = vadd.f32 %v2751, %v2945
        %v3048 = vadd.f32 %v2752, %v2948
        %v3049 = vadd.f32 %v2753, %v2951
        %v3050 = vadd.f32 %v2754, %v2954
        %v3051 = vadd.f32 %v2755, %v2957
        %v3052 = vadd.f32 %v2756, %v2960
        %v3053 = vadd.f32 %v2757, %v2963
        %v3054 = vadd.f32 %v2758, %v2966
        %v3055 = vadd.f32 %v2759, %v2969
        %v3056 = vadd.f32 %v2760, %v2972
        %v3057 = vadd.f32 %v2761, %v2975
        %v3058 = vadd.f32 %v2762, %v2978
        %v3059 = vadd.f32 %v2763, %v2981
        %v3060 = vadd.f32 %v2764, %v2984
        %v3061 = vadd.f32 %v2765, %v2987
        %v3062 = vadd.f32 %v2766, %v2990
        %v3063 = vadd.f32 %v2767, %v2993
        %v3064 = vadd.f32 %v2768, %v2996
        %v3065 = vadd.f32 %v2769, %v2999
        %v3066 = vadd.f32 %v2770, %v3002
        %s3067 = scalar_lea.vmem [#allocation8], 9
        %v3068 = vld [vmem:[%s3067] sm:$0x1]
        %v3070 = vlaneseq
        %v3071 = vshrl.u32 %v3070, 7
        %v3072 = vsub.s32 0, %v3071
        %v3073 = vrot.slane %v3068, %v3072
        %v3075 = vmul.f32 %v974, %v3073
        %v3076 = vmul.f32 %v976, %v3073
        %v3077 = vmul.f32 %v978, %v3073
        %v3078 = vmul.f32 %v980, %v3073
        %v3079 = vmul.f32 %v982, %v3073
        %v3080 = vmul.f32 %v984, %v3073
        %v3081 = vmul.f32 %v986, %v3073
        %v3082 = vmul.f32 %v988, %v3073
        %v3083 = vmul.f32 %v994, %v3073
        %v3084 = vmul.f32 %v996, %v3073
        %v3085 = vmul.f32 %v998, %v3073
        %v3086 = vmul.f32 %v1000, %v3073
        %v3087 = vmul.f32 %v1002, %v3073
        %v3088 = vmul.f32 %v1004, %v3073
        %v3089 = vmul.f32 %v1006, %v3073
        %v3090 = vmul.f32 %v1008, %v3073
        %v3091 = vmul.f32 %v1014, %v3073
        %v3092 = vmul.f32 %v1016, %v3073
        %v3093 = vmul.f32 %v1018, %v3073
        %v3094 = vmul.f32 %v1020, %v3073
        %v3095 = vmul.f32 %v1022, %v3073
        %v3096 = vmul.f32 %v1024, %v3073
        %v3097 = vmul.f32 %v1026, %v3073
        %v3098 = vmul.f32 %v1028, %v3073
        %v3099 = vmul.f32 %v1034, %v3073
        %v3100 = vmul.f32 %v1036, %v3073
        %v3101 = vmul.f32 %v1038, %v3073
        %v3102 = vmul.f32 %v1040, %v3073
        %v3103 = vmul.f32 %v1042, %v3073
        %v3104 = vmul.f32 %v1044, %v3073
        %v3105 = vmul.f32 %v1046, %v3073
        %v3106 = vmul.f32 %v1048, %v3073
        %v3107 = vadd.f32 %v3035, %v3075
        %v3108 = vadd.f32 %v3036, %v3076
        %v3109 = vadd.f32 %v3037, %v3077
        %v3110 = vadd.f32 %v3038, %v3078
        %v3111 = vadd.f32 %v3039, %v3079
        %v3112 = vadd.f32 %v3040, %v3080
        %v3113 = vadd.f32 %v3041, %v3081
        %v3114 = vadd.f32 %v3042, %v3082
        %v3115 = vadd.f32 %v3043, %v3083
        %v3116 = vadd.f32 %v3044, %v3084
        %v3117 = vadd.f32 %v3045, %v3085
        %v3118 = vadd.f32 %v3046, %v3086
        %v3119 = vadd.f32 %v3047, %v3087
        %v3120 = vadd.f32 %v3048, %v3088
        %v3121 = vadd.f32 %v3049, %v3089
        %v3122 = vadd.f32 %v3050, %v3090
        %v3123 = vadd.f32 %v3051, %v3091
        %v3124 = vadd.f32 %v3052, %v3092
        %v3125 = vadd.f32 %v3053, %v3093
        %v3126 = vadd.f32 %v3054, %v3094
        %v3127 = vadd.f32 %v3055, %v3095
        %v3128 = vadd.f32 %v3056, %v3096
        %v3129 = vadd.f32 %v3057, %v3097
        %v3130 = vadd.f32 %v3058, %v3098
        %v3131 = vadd.f32 %v3059, %v3099
        %v3132 = vadd.f32 %v3060, %v3100
        %v3133 = vadd.f32 %v3061, %v3101
        %v3134 = vadd.f32 %v3062, %v3102
        %v3135 = vadd.f32 %v3063, %v3103
        %v3136 = vadd.f32 %v3064, %v3104
        %v3137 = vadd.f32 %v3065, %v3105
        %v3138 = vadd.f32 %v3066, %v3106
        %s3139 = scalar_lea.vmem [#allocation8], 10
        %v3140 = vld [vmem:[%s3139] sm:$0x1]
        %v3142 = vlaneseq
        %v3143 = vshrl.u32 %v3142, 7
        %v3144 = vsub.s32 0, %v3143
        %v3145 = vrot.slane %v3140, %v3144
        %v3147 = vmul.f32 %v974, %v3145
        %v3148 = vmul.f32 %v975, %v3145
        %v3149 = vmul.f32 %v976, %v3145
        %v3150 = vmul.f32 %v977, %v3145
        %v3151 = vmul.f32 %v978, %v3145
        %v3152 = vmul.f32 %v979, %v3145
        %v3153 = vmul.f32 %v980, %v3145
        %v3154 = vmul.f32 %v981, %v3145
        %v3155 = vmul.f32 %v982, %v3145
        %v3156 = vmul.f32 %v983, %v3145
        %v3157 = vmul.f32 %v984, %v3145
        %v3158 = vmul.f32 %v985, %v3145
        %v3159 = vmul.f32 %v986, %v3145
        %v3160 = vmul.f32 %v987, %v3145
        %v3161 = vmul.f32 %v988, %v3145
        %v3162 = vmul.f32 %v989, %v3145
        %v3163 = vmul.f32 %v994, %v3145
        %v3164 = vmul.f32 %v995, %v3145
        %v3165 = vmul.f32 %v996, %v3145
        %v3166 = vmul.f32 %v997, %v3145
        %v3167 = vmul.f32 %v998, %v3145
        %v3168 = vmul.f32 %v999, %v3145
        %v3169 = vmul.f32 %v1000, %v3145
        %v3170 = vmul.f32 %v1001, %v3145
        %v3171 = vmul.f32 %v1002, %v3145
        %v3172 = vmul.f32 %v1003, %v3145
        %v3173 = vmul.f32 %v1004, %v3145
        %v3174 = vmul.f32 %v1005, %v3145
        %v3175 = vmul.f32 %v1006, %v3145
        %v3176 = vmul.f32 %v1007, %v3145
        %v3177 = vmul.f32 %v1008, %v3145
        %v3178 = vmul.f32 %v1009, %v3145
        %v3179 = vmul.f32 %v1014, %v3145
        %v3180 = vmul.f32 %v1015, %v3145
        %v3181 = vmul.f32 %v1016, %v3145
        %v3182 = vmul.f32 %v1017, %v3145
        %v3183 = vmul.f32 %v1018, %v3145
        %v3184 = vmul.f32 %v1019, %v3145
        %v3185 = vmul.f32 %v1020, %v3145
        %v3186 = vmul.f32 %v1021, %v3145
        %v3187 = vmul.f32 %v1022, %v3145
        %v3188 = vmul.f32 %v1023, %v3145
        %v3189 = vmul.f32 %v1024, %v3145
        %v3190 = vmul.f32 %v1025, %v3145
        %v3191 = vmul.f32 %v1026, %v3145
        %v3192 = vmul.f32 %v1027, %v3145
        %v3193 = vmul.f32 %v1028, %v3145
        %v3194 = vmul.f32 %v1029, %v3145
        %v3195 = vmul.f32 %v1034, %v3145
        %v3196 = vmul.f32 %v1035, %v3145
        %v3197 = vmul.f32 %v1036, %v3145
        %v3198 = vmul.f32 %v1037, %v3145
        %v3199 = vmul.f32 %v1038, %v3145
        %v3200 = vmul.f32 %v1039, %v3145
        %v3201 = vmul.f32 %v1040, %v3145
        %v3202 = vmul.f32 %v1041, %v3145
        %v3203 = vmul.f32 %v1042, %v3145
        %v3204 = vmul.f32 %v1043, %v3145
        %v3205 = vmul.f32 %v1044, %v3145
        %v3206 = vmul.f32 %v1045, %v3145
        %v3207 = vmul.f32 %v1046, %v3145
        %v3208 = vmul.f32 %v1047, %v3145
        %v3209 = vmul.f32 %v1048, %v3145
        %v3210 = vmul.f32 %v1049, %v3145
        %v3275 = vrot.slane %v3147, 1
        %v3276 = vrot.slane %v3148, 1
        %v3277 = vsel %vm1281, %v3275, %v3276
        %v3278 = vrot.slane %v3149, 1
        %v3279 = vrot.slane %v3150, 1
        %v3280 = vsel %vm1281, %v3278, %v3279
        %v3281 = vrot.slane %v3151, 1
        %v3282 = vrot.slane %v3152, 1
        %v3283 = vsel %vm1281, %v3281, %v3282
        %v3284 = vrot.slane %v3153, 1
        %v3285 = vrot.slane %v3154, 1
        %v3286 = vsel %vm1281, %v3284, %v3285
        %v3287 = vrot.slane %v3155, 1
        %v3288 = vrot.slane %v3156, 1
        %v3289 = vsel %vm1281, %v3287, %v3288
        %v3290 = vrot.slane %v3157, 1
        %v3291 = vrot.slane %v3158, 1
        %v3292 = vsel %vm1281, %v3290, %v3291
        %v3293 = vrot.slane %v3159, 1
        %v3294 = vrot.slane %v3160, 1
        %v3295 = vsel %vm1281, %v3293, %v3294
        %v3296 = vrot.slane %v3161, 1
        %v3297 = vrot.slane %v3162, 1
        %v3298 = vsel %vm1281, %v3296, %v3297
        %v3299 = vrot.slane %v3163, 1
        %v3300 = vrot.slane %v3164, 1
        %v3301 = vsel %vm1281, %v3299, %v3300
        %v3302 = vrot.slane %v3165, 1
        %v3303 = vrot.slane %v3166, 1
        %v3304 = vsel %vm1281, %v3302, %v3303
        %v3305 = vrot.slane %v3167, 1
        %v3306 = vrot.slane %v3168, 1
        %v3307 = vsel %vm1281, %v3305, %v3306
        %v3308 = vrot.slane %v3169, 1
        %v3309 = vrot.slane %v3170, 1
        %v3310 = vsel %vm1281, %v3308, %v3309
        %v3311 = vrot.slane %v3171, 1
        %v3312 = vrot.slane %v3172, 1
        %v3313 = vsel %vm1281, %v3311, %v3312
        %v3314 = vrot.slane %v3173, 1
        %v3315 = vrot.slane %v3174, 1
        %v3316 = vsel %vm1281, %v3314, %v3315
        %v3317 = vrot.slane %v3175, 1
        %v3318 = vrot.slane %v3176, 1
        %v3319 = vsel %vm1281, %v3317, %v3318
        %v3320 = vrot.slane %v3177, 1
        %v3321 = vrot.slane %v3178, 1
        %v3322 = vsel %vm1281, %v3320, %v3321
        %v3323 = vrot.slane %v3179, 1
        %v3324 = vrot.slane %v3180, 1
        %v3325 = vsel %vm1281, %v3323, %v3324
        %v3326 = vrot.slane %v3181, 1
        %v3327 = vrot.slane %v3182, 1
        %v3328 = vsel %vm1281, %v3326, %v3327
        %v3329 = vrot.slane %v3183, 1
        %v3330 = vrot.slane %v3184, 1
        %v3331 = vsel %vm1281, %v3329, %v3330
        %v3332 = vrot.slane %v3185, 1
        %v3333 = vrot.slane %v3186, 1
        %v3334 = vsel %vm1281, %v3332, %v3333
        %v3335 = vrot.slane %v3187, 1
        %v3336 = vrot.slane %v3188, 1
        %v3337 = vsel %vm1281, %v3335, %v3336
        %v3338 = vrot.slane %v3189, 1
        %v3339 = vrot.slane %v3190, 1
        %v3340 = vsel %vm1281, %v3338, %v3339
        %v3341 = vrot.slane %v3191, 1
        %v3342 = vrot.slane %v3192, 1
        %v3343 = vsel %vm1281, %v3341, %v3342
        %v3344 = vrot.slane %v3193, 1
        %v3345 = vrot.slane %v3194, 1
        %v3346 = vsel %vm1281, %v3344, %v3345
        %v3347 = vrot.slane %v3195, 1
        %v3348 = vrot.slane %v3196, 1
        %v3349 = vsel %vm1281, %v3347, %v3348
        %v3350 = vrot.slane %v3197, 1
        %v3351 = vrot.slane %v3198, 1
        %v3352 = vsel %vm1281, %v3350, %v3351
        %v3353 = vrot.slane %v3199, 1
        %v3354 = vrot.slane %v3200, 1
        %v3355 = vsel %vm1281, %v3353, %v3354
        %v3356 = vrot.slane %v3201, 1
        %v3357 = vrot.slane %v3202, 1
        %v3358 = vsel %vm1281, %v3356, %v3357
        %v3359 = vrot.slane %v3203, 1
        %v3360 = vrot.slane %v3204, 1
        %v3361 = vsel %vm1281, %v3359, %v3360
        %v3362 = vrot.slane %v3205, 1
        %v3363 = vrot.slane %v3206, 1
        %v3364 = vsel %vm1281, %v3362, %v3363
        %v3365 = vrot.slane %v3207, 1
        %v3366 = vrot.slane %v3208, 1
        %v3367 = vsel %vm1281, %v3365, %v3366
        %v3368 = vrot.slane %v3209, 1
        %v3369 = vrot.slane %v3210, 1
        %v3370 = vsel %vm1281, %v3368, %v3369
        %v3403 = vadd.f32 %v3107, %v3277
        %v3404 = vadd.f32 %v3108, %v3280
        %v3405 = vadd.f32 %v3109, %v3283
        %v3406 = vadd.f32 %v3110, %v3286
        %v3407 = vadd.f32 %v3111, %v3289
        %v3408 = vadd.f32 %v3112, %v3292
        %v3409 = vadd.f32 %v3113, %v3295
        %v3410 = vadd.f32 %v3114, %v3298
        %v3411 = vadd.f32 %v3115, %v3301
        %v3412 = vadd.f32 %v3116, %v3304
        %v3413 = vadd.f32 %v3117, %v3307
        %v3414 = vadd.f32 %v3118, %v3310
        %v3415 = vadd.f32 %v3119, %v3313
        %v3416 = vadd.f32 %v3120, %v3316
        %v3417 = vadd.f32 %v3121, %v3319
        %v3418 = vadd.f32 %v3122, %v3322
        %v3419 = vadd.f32 %v3123, %v3325
        %v3420 = vadd.f32 %v3124, %v3328
        %v3421 = vadd.f32 %v3125, %v3331
        %v3422 = vadd.f32 %v3126, %v3334
        %v3423 = vadd.f32 %v3127, %v3337
        %v3424 = vadd.f32 %v3128, %v3340
        %v3425 = vadd.f32 %v3129, %v3343
        %v3426 = vadd.f32 %v3130, %v3346
        %v3427 = vadd.f32 %v3131, %v3349
        %v3428 = vadd.f32 %v3132, %v3352
        %v3429 = vadd.f32 %v3133, %v3355
        %v3430 = vadd.f32 %v3134, %v3358
        %v3431 = vadd.f32 %v3135, %v3361
        %v3432 = vadd.f32 %v3136, %v3364
        %v3433 = vadd.f32 %v3137, %v3367
        %v3434 = vadd.f32 %v3138, %v3370
        %s3435 = scalar_lea.vmem [#allocation8], 11
        %v3436 = vld [vmem:[%s3435] sm:$0x1]
        %v3438 = vlaneseq
        %v3439 = vshrl.u32 %v3438, 7
        %v3440 = vsub.s32 0, %v3439
        %v3441 = vrot.slane %v3436, %v3440
        %v3443 = vmul.f32 %v974, %v3441
        %v3444 = vmul.f32 %v975, %v3441
        %v3445 = vmul.f32 %v976, %v3441
        %v3446 = vmul.f32 %v977, %v3441
        %v3447 = vmul.f32 %v978, %v3441
        %v3448 = vmul.f32 %v979, %v3441
        %v3449 = vmul.f32 %v980, %v3441
        %v3450 = vmul.f32 %v981, %v3441
        %v3451 = vmul.f32 %v982, %v3441
        %v3452 = vmul.f32 %v983, %v3441
        %v3453 = vmul.f32 %v984, %v3441
        %v3454 = vmul.f32 %v985, %v3441
        %v3455 = vmul.f32 %v986, %v3441
        %v3456 = vmul.f32 %v987, %v3441
        %v3457 = vmul.f32 %v988, %v3441
        %v3458 = vmul.f32 %v989, %v3441
        %v3459 = vmul.f32 %v994, %v3441
        %v3460 = vmul.f32 %v995, %v3441
        %v3461 = vmul.f32 %v996, %v3441
        %v3462 = vmul.f32 %v997, %v3441
        %v3463 = vmul.f32 %v998, %v3441
        %v3464 = vmul.f32 %v999, %v3441
        %v3465 = vmul.f32 %v1000, %v3441
        %v3466 = vmul.f32 %v1001, %v3441
        %v3467 = vmul.f32 %v1002, %v3441
        %v3468 = vmul.f32 %v1003, %v3441
        %v3469 = vmul.f32 %v1004, %v3441
        %v3470 = vmul.f32 %v1005, %v3441
        %v3471 = vmul.f32 %v1006, %v3441
        %v3472 = vmul.f32 %v1007, %v3441
        %v3473 = vmul.f32 %v1008, %v3441
        %v3474 = vmul.f32 %v1009, %v3441
        %v3475 = vmul.f32 %v1014, %v3441
        %v3476 = vmul.f32 %v1015, %v3441
        %v3477 = vmul.f32 %v1016, %v3441
        %v3478 = vmul.f32 %v1017, %v3441
        %v3479 = vmul.f32 %v1018, %v3441
        %v3480 = vmul.f32 %v1019, %v3441
        %v3481 = vmul.f32 %v1020, %v3441
        %v3482 = vmul.f32 %v1021, %v3441
        %v3483 = vmul.f32 %v1022, %v3441
        %v3484 = vmul.f32 %v1023, %v3441
        %v3485 = vmul.f32 %v1024, %v3441
        %v3486 = vmul.f32 %v1025, %v3441
        %v3487 = vmul.f32 %v1026, %v3441
        %v3488 = vmul.f32 %v1027, %v3441
        %v3489 = vmul.f32 %v1028, %v3441
        %v3490 = vmul.f32 %v1029, %v3441
        %v3491 = vmul.f32 %v1034, %v3441
        %v3492 = vmul.f32 %v1035, %v3441
        %v3493 = vmul.f32 %v1036, %v3441
        %v3494 = vmul.f32 %v1037, %v3441
        %v3495 = vmul.f32 %v1038, %v3441
        %v3496 = vmul.f32 %v1039, %v3441
        %v3497 = vmul.f32 %v1040, %v3441
        %v3498 = vmul.f32 %v1041, %v3441
        %v3499 = vmul.f32 %v1042, %v3441
        %v3500 = vmul.f32 %v1043, %v3441
        %v3501 = vmul.f32 %v1044, %v3441
        %v3502 = vmul.f32 %v1045, %v3441
        %v3503 = vmul.f32 %v1046, %v3441
        %v3504 = vmul.f32 %v1047, %v3441
        %v3505 = vmul.f32 %v1048, %v3441
        %v3506 = vmul.f32 %v1049, %v3441
        %v3571 = vrot.slane %v3443, 2
        %v3572 = vrot.slane %v3444, 2
        %v3573 = vsel %vm1578, %v3571, %v3572
        %v3574 = vrot.slane %v3445, 2
        %v3575 = vrot.slane %v3446, 2
        %v3576 = vsel %vm1578, %v3574, %v3575
        %v3577 = vrot.slane %v3447, 2
        %v3578 = vrot.slane %v3448, 2
        %v3579 = vsel %vm1578, %v3577, %v3578
        %v3580 = vrot.slane %v3449, 2
        %v3581 = vrot.slane %v3450, 2
        %v3582 = vsel %vm1578, %v3580, %v3581
        %v3583 = vrot.slane %v3451, 2
        %v3584 = vrot.slane %v3452, 2
        %v3585 = vsel %vm1578, %v3583, %v3584
        %v3586 = vrot.slane %v3453, 2
        %v3587 = vrot.slane %v3454, 2
        %v3588 = vsel %vm1578, %v3586, %v3587
        %v3589 = vrot.slane %v3455, 2
        %v3590 = vrot.slane %v3456, 2
        %v3591 = vsel %vm1578, %v3589, %v3590
        %v3592 = vrot.slane %v3457, 2
        %v3593 = vrot.slane %v3458, 2
        %v3594 = vsel %vm1578, %v3592, %v3593
        %v3595 = vrot.slane %v3459, 2
        %v3596 = vrot.slane %v3460, 2
        %v3597 = vsel %vm1578, %v3595, %v3596
        %v3598 = vrot.slane %v3461, 2
        %v3599 = vrot.slane %v3462, 2
        %v3600 = vsel %vm1578, %v3598, %v3599
        %v3601 = vrot.slane %v3463, 2
        %v3602 = vrot.slane %v3464, 2
        %v3603 = vsel %vm1578, %v3601, %v3602
        %v3604 = vrot.slane %v3465, 2
        %v3605 = vrot.slane %v3466, 2
        %v3606 = vsel %vm1578, %v3604, %v3605
        %v3607 = vrot.slane %v3467, 2
        %v3608 = vrot.slane %v3468, 2
        %v3609 = vsel %vm1578, %v3607, %v3608
        %v3610 = vrot.slane %v3469, 2
        %v3611 = vrot.slane %v3470, 2
        %v3612 = vsel %vm1578, %v3610, %v3611
        %v3613 = vrot.slane %v3471, 2
        %v3614 = vrot.slane %v3472, 2
        %v3615 = vsel %vm1578, %v3613, %v3614
        %v3616 = vrot.slane %v3473, 2
        %v3617 = vrot.slane %v3474, 2
        %v3618 = vsel %vm1578, %v3616, %v3617
        %v3619 = vrot.slane %v3475, 2
        %v3620 = vrot.slane %v3476, 2
        %v3621 = vsel %vm1578, %v3619, %v3620
        %v3622 = vrot.slane %v3477, 2
        %v3623 = vrot.slane %v3478, 2
        %v3624 = vsel %vm1578, %v3622, %v3623
        %v3625 = vrot.slane %v3479, 2
        %v3626 = vrot.slane %v3480, 2
        %v3627 = vsel %vm1578, %v3625, %v3626
        %v3628 = vrot.slane %v3481, 2
        %v3629 = vrot.slane %v3482, 2
        %v3630 = vsel %vm1578, %v3628, %v3629
        %v3631 = vrot.slane %v3483, 2
        %v3632 = vrot.slane %v3484, 2
        %v3633 = vsel %vm1578, %v3631, %v3632
        %v3634 = vrot.slane %v3485, 2
        %v3635 = vrot.slane %v3486, 2
        %v3636 = vsel %vm1578, %v3634, %v3635
        %v3637 = vrot.slane %v3487, 2
        %v3638 = vrot.slane %v3488, 2
        %v3639 = vsel %vm1578, %v3637, %v3638
        %v3640 = vrot.slane %v3489, 2
        %v3641 = vrot.slane %v3490, 2
        %v3642 = vsel %vm1578, %v3640, %v3641
        %v3643 = vrot.slane %v3491, 2
        %v3644 = vrot.slane %v3492, 2
        %v3645 = vsel %vm1578, %v3643, %v3644
        %v3646 = vrot.slane %v3493, 2
        %v3647 = vrot.slane %v3494, 2
        %v3648 = vsel %vm1578, %v3646, %v3647
        %v3649 = vrot.slane %v3495, 2
        %v3650 = vrot.slane %v3496, 2
        %v3651 = vsel %vm1578, %v3649, %v3650
        %v3652 = vrot.slane %v3497, 2
        %v3653 = vrot.slane %v3498, 2
        %v3654 = vsel %vm1578, %v3652, %v3653
        %v3655 = vrot.slane %v3499, 2
        %v3656 = vrot.slane %v3500, 2
        %v3657 = vsel %vm1578, %v3655, %v3656
        %v3658 = vrot.slane %v3501, 2
        %v3659 = vrot.slane %v3502, 2
        %v3660 = vsel %vm1578, %v3658, %v3659
        %v3661 = vrot.slane %v3503, 2
        %v3662 = vrot.slane %v3504, 2
        %v3663 = vsel %vm1578, %v3661, %v3662
        %v3664 = vrot.slane %v3505, 2
        %v3665 = vrot.slane %v3506, 2
        %v3666 = vsel %vm1578, %v3664, %v3665
        %v3699 = vadd.f32 %v3403, %v3573
        %v3700 = vadd.f32 %v3404, %v3576
        %v3701 = vadd.f32 %v3405, %v3579
        %v3702 = vadd.f32 %v3406, %v3582
        %v3703 = vadd.f32 %v3407, %v3585
        %v3704 = vadd.f32 %v3408, %v3588
        %v3705 = vadd.f32 %v3409, %v3591
        %v3706 = vadd.f32 %v3410, %v3594
        %v3707 = vadd.f32 %v3411, %v3597
        %v3708 = vadd.f32 %v3412, %v3600
        %v3709 = vadd.f32 %v3413, %v3603
        %v3710 = vadd.f32 %v3414, %v3606
        %v3711 = vadd.f32 %v3415, %v3609
        %v3712 = vadd.f32 %v3416, %v3612
        %v3713 = vadd.f32 %v3417, %v3615
        %v3714 = vadd.f32 %v3418, %v3618
        %v3715 = vadd.f32 %v3419, %v3621
        %v3716 = vadd.f32 %v3420, %v3624
        %v3717 = vadd.f32 %v3421, %v3627
        %v3718 = vadd.f32 %v3422, %v3630
        %v3719 = vadd.f32 %v3423, %v3633
        %v3720 = vadd.f32 %v3424, %v3636
        %v3721 = vadd.f32 %v3425, %v3639
        %v3722 = vadd.f32 %v3426, %v3642
        %v3723 = vadd.f32 %v3427, %v3645
        %v3724 = vadd.f32 %v3428, %v3648
        %v3725 = vadd.f32 %v3429, %v3651
        %v3726 = vadd.f32 %v3430, %v3654
        %v3727 = vadd.f32 %v3431, %v3657
        %v3728 = vadd.f32 %v3432, %v3660
        %v3729 = vadd.f32 %v3433, %v3663
        %v3730 = vadd.f32 %v3434, %v3666
        %s3731 = scalar_lea.vmem [#allocation8], 12
        %v3732 = vld [vmem:[%s3731] sm:$0x1]
        %v3734 = vlaneseq
        %v3735 = vshrl.u32 %v3734, 7
        %v3736 = vsub.s32 0, %v3735
        %v3737 = vrot.slane %v3732, %v3736
        %v3739 = vmul.f32 %v976, %v3737
        %v3740 = vmul.f32 %v978, %v3737
        %v3741 = vmul.f32 %v980, %v3737
        %v3742 = vmul.f32 %v982, %v3737
        %v3743 = vmul.f32 %v984, %v3737
        %v3744 = vmul.f32 %v986, %v3737
        %v3745 = vmul.f32 %v988, %v3737
        %v3746 = vmul.f32 %v990, %v3737
        %v3747 = vmul.f32 %v996, %v3737
        %v3748 = vmul.f32 %v998, %v3737
        %v3749 = vmul.f32 %v1000, %v3737
        %v3750 = vmul.f32 %v1002, %v3737
        %v3751 = vmul.f32 %v1004, %v3737
        %v3752 = vmul.f32 %v1006, %v3737
        %v3753 = vmul.f32 %v1008, %v3737
        %v3754 = vmul.f32 %v1010, %v3737
        %v3755 = vmul.f32 %v1016, %v3737
        %v3756 = vmul.f32 %v1018, %v3737
        %v3757 = vmul.f32 %v1020, %v3737
        %v3758 = vmul.f32 %v1022, %v3737
        %v3759 = vmul.f32 %v1024, %v3737
        %v3760 = vmul.f32 %v1026, %v3737
        %v3761 = vmul.f32 %v1028, %v3737
        %v3762 = vmul.f32 %v1030, %v3737
        %v3763 = vmul.f32 %v1036, %v3737
        %v3764 = vmul.f32 %v1038, %v3737
        %v3765 = vmul.f32 %v1040, %v3737
        %v3766 = vmul.f32 %v1042, %v3737
        %v3767 = vmul.f32 %v1044, %v3737
        %v3768 = vmul.f32 %v1046, %v3737
        %v3769 = vmul.f32 %v1048, %v3737
        %v3770 = vmul.f32 %v1050, %v3737
        %v3771 = vadd.f32 %v3699, %v3739
        %v3772 = vadd.f32 %v3700, %v3740
        %v3773 = vadd.f32 %v3701, %v3741
        %v3774 = vadd.f32 %v3702, %v3742
        %v3775 = vadd.f32 %v3703, %v3743
        %v3776 = vadd.f32 %v3704, %v3744
        %v3777 = vadd.f32 %v3705, %v3745
        %v3778 = vadd.f32 %v3706, %v3746
        %v3779 = vadd.f32 %v3707, %v3747
        %v3780 = vadd.f32 %v3708, %v3748
        %v3781 = vadd.f32 %v3709, %v3749
        %v3782 = vadd.f32 %v3710, %v3750
        %v3783 = vadd.f32 %v3711, %v3751
        %v3784 = vadd.f32 %v3712, %v3752
        %v3785 = vadd.f32 %v3713, %v3753
        %v3786 = vadd.f32 %v3714, %v3754
        %v3787 = vadd.f32 %v3715, %v3755
        %v3788 = vadd.f32 %v3716, %v3756
        %v3789 = vadd.f32 %v3717, %v3757
        %v3790 = vadd.f32 %v3718, %v3758
        %v3791 = vadd.f32 %v3719, %v3759
        %v3792 = vadd.f32 %v3720, %v3760
        %v3793 = vadd.f32 %v3721, %v3761
        %v3794 = vadd.f32 %v3722, %v3762
        %v3795 = vadd.f32 %v3723, %v3763
        %v3796 = vadd.f32 %v3724, %v3764
        %v3797 = vadd.f32 %v3725, %v3765
        %v3798 = vadd.f32 %v3726, %v3766
        %v3799 = vadd.f32 %v3727, %v3767
        %v3800 = vadd.f32 %v3728, %v3768
        %v3801 = vadd.f32 %v3729, %v3769
        %v3802 = vadd.f32 %v3730, %v3770
        %s3803 = scalar_lea.vmem [#allocation8], 13
        %v3804 = vld [vmem:[%s3803] sm:$0x1]
        %v3806 = vlaneseq
        %v3807 = vshrl.u32 %v3806, 7
        %v3808 = vsub.s32 0, %v3807
        %v3809 = vrot.slane %v3804, %v3808
        %v3811 = vmul.f32 %v976, %v3809
        %v3812 = vmul.f32 %v977, %v3809
        %v3813 = vmul.f32 %v978, %v3809
        %v3814 = vmul.f32 %v979, %v3809
        %v3815 = vmul.f32 %v980, %v3809
        %v3816 = vmul.f32 %v981, %v3809
        %v3817 = vmul.f32 %v982, %v3809
        %v3818 = vmul.f32 %v983, %v3809
        %v3819 = vmul.f32 %v984, %v3809
        %v3820 = vmul.f32 %v985, %v3809
        %v3821 = vmul.f32 %v986, %v3809
        %v3822 = vmul.f32 %v987, %v3809
        %v3823 = vmul.f32 %v988, %v3809
        %v3824 = vmul.f32 %v989, %v3809
        %v3825 = vmul.f32 %v990, %v3809
        %v3826 = vmul.f32 %v991, %v3809
        %v3827 = vmul.f32 %v996, %v3809
        %v3828 = vmul.f32 %v997, %v3809
        %v3829 = vmul.f32 %v998, %v3809
        %v3830 = vmul.f32 %v999, %v3809
        %v3831 = vmul.f32 %v1000, %v3809
        %v3832 = vmul.f32 %v1001, %v3809
        %v3833 = vmul.f32 %v1002, %v3809
        %v3834 = vmul.f32 %v1003, %v3809
        %v3835 = vmul.f32 %v1004, %v3809
        %v3836 = vmul.f32 %v1005, %v3809
        %v3837 = vmul.f32 %v1006, %v3809
        %v3838 = vmul.f32 %v1007, %v3809
        %v3839 = vmul.f32 %v1008, %v3809
        %v3840 = vmul.f32 %v1009, %v3809
        %v3841 = vmul.f32 %v1010, %v3809
        %v3842 = vmul.f32 %v1011, %v3809
        %v3843 = vmul.f32 %v1016, %v3809
        %v3844 = vmul.f32 %v1017, %v3809
        %v3845 = vmul.f32 %v1018, %v3809
        %v3846 = vmul.f32 %v1019, %v3809
        %v3847 = vmul.f32 %v1020, %v3809
        %v3848 = vmul.f32 %v1021, %v3809
        %v3849 = vmul.f32 %v1022, %v3809
        %v3850 = vmul.f32 %v1023, %v3809
        %v3851 = vmul.f32 %v1024, %v3809
        %v3852 = vmul.f32 %v1025, %v3809
        %v3853 = vmul.f32 %v1026, %v3809
        %v3854 = vmul.f32 %v1027, %v3809
        %v3855 = vmul.f32 %v1028, %v3809
        %v3856 = vmul.f32 %v1029, %v3809
        %v3857 = vmul.f32 %v1030, %v3809
        %v3858 = vmul.f32 %v1031, %v3809
        %v3859 = vmul.f32 %v1036, %v3809
        %v3860 = vmul.f32 %v1037, %v3809
        %v3861 = vmul.f32 %v1038, %v3809
        %v3862 = vmul.f32 %v1039, %v3809
        %v3863 = vmul.f32 %v1040, %v3809
        %v3864 = vmul.f32 %v1041, %v3809
        %v3865 = vmul.f32 %v1042, %v3809
        %v3866 = vmul.f32 %v1043, %v3809
        %v3867 = vmul.f32 %v1044, %v3809
        %v3868 = vmul.f32 %v1045, %v3809
        %v3869 = vmul.f32 %v1046, %v3809
        %v3870 = vmul.f32 %v1047, %v3809
        %v3871 = vmul.f32 %v1048, %v3809
        %v3872 = vmul.f32 %v1049, %v3809
        %v3873 = vmul.f32 %v1050, %v3809
        %v3874 = vmul.f32 %v1051, %v3809
        %v3939 = vrot.slane %v3811, 1
        %v3940 = vrot.slane %v3812, 1
        %v3941 = vsel %vm1281, %v3939, %v3940
        %v3942 = vrot.slane %v3813, 1
        %v3943 = vrot.slane %v3814, 1
        %v3944 = vsel %vm1281, %v3942, %v3943
        %v3945 = vrot.slane %v3815, 1
        %v3946 = vrot.slane %v3816, 1
        %v3947 = vsel %vm1281, %v3945, %v3946
        %v3948 = vrot.slane %v3817, 1
        %v3949 = vrot.slane %v3818, 1
        %v3950 = vsel %vm1281, %v3948, %v3949
        %v3951 = vrot.slane %v3819, 1
        %v3952 = vrot.slane %v3820, 1
        %v3953 = vsel %vm1281, %v3951, %v3952
        %v3954 = vrot.slane %v3821, 1
        %v3955 = vrot.slane %v3822, 1
        %v3956 = vsel %vm1281, %v3954, %v3955
        %v3957 = vrot.slane %v3823, 1
        %v3958 = vrot.slane %v3824, 1
        %v3959 = vsel %vm1281, %v3957, %v3958
        %v3960 = vrot.slane %v3825, 1
        %v3961 = vrot.slane %v3826, 1
        %v3962 = vsel %vm1281, %v3960, %v3961
        %v3963 = vrot.slane %v3827, 1
        %v3964 = vrot.slane %v3828, 1
        %v3965 = vsel %vm1281, %v3963, %v3964
        %v3966 = vrot.slane %v3829, 1
        %v3967 = vrot.slane %v3830, 1
        %v3968 = vsel %vm1281, %v3966, %v3967
        %v3969 = vrot.slane %v3831, 1
        %v3970 = vrot.slane %v3832, 1
        %v3971 = vsel %vm1281, %v3969, %v3970
        %v3972 = vrot.slane %v3833, 1
        %v3973 = vrot.slane %v3834, 1
        %v3974 = vsel %vm1281, %v3972, %v3973
        %v3975 = vrot.slane %v3835, 1
        %v3976 = vrot.slane %v3836, 1
        %v3977 = vsel %vm1281, %v3975, %v3976
        %v3978 = vrot.slane %v3837, 1
        %v3979 = vrot.slane %v3838, 1
        %v3980 = vsel %vm1281, %v3978, %v3979
        %v3981 = vrot.slane %v3839, 1
        %v3982 = vrot.slane %v3840, 1
        %v3983 = vsel %vm1281, %v3981, %v3982
        %v3984 = vrot.slane %v3841, 1
        %v3985 = vrot.slane %v3842, 1
        %v3986 = vsel %vm1281, %v3984, %v3985
        %v3987 = vrot.slane %v3843, 1
        %v3988 = vrot.slane %v3844, 1
        %v3989 = vsel %vm1281, %v3987, %v3988
        %v3990 = vrot.slane %v3845, 1
        %v3991 = vrot.slane %v3846, 1
        %v3992 = vsel %vm1281, %v3990, %v3991
        %v3993 = vrot.slane %v3847, 1
        %v3994 = vrot.slane %v3848, 1
        %v3995 = vsel %vm1281, %v3993, %v3994
        %v3996 = vrot.slane %v3849, 1
        %v3997 = vrot.slane %v3850, 1
        %v3998 = vsel %vm1281, %v3996, %v3997
        %v3999 = vrot.slane %v3851, 1
        %v4000 = vrot.slane %v3852, 1
        %v4001 = vsel %vm1281, %v3999, %v4000
        %v4002 = vrot.slane %v3853, 1
        %v4003 = vrot.slane %v3854, 1
        %v4004 = vsel %vm1281, %v4002, %v4003
        %v4005 = vrot.slane %v3855, 1
        %v4006 = vrot.slane %v3856, 1
        %v4007 = vsel %vm1281, %v4005, %v4006
        %v4008 = vrot.slane %v3857, 1
        %v4009 = vrot.slane %v3858, 1
        %v4010 = vsel %vm1281, %v4008, %v4009
        %v4011 = vrot.slane %v3859, 1
        %v4012 = vrot.slane %v3860, 1
        %v4013 = vsel %vm1281, %v4011, %v4012
        %v4014 = vrot.slane %v3861, 1
        %v4015 = vrot.slane %v3862, 1
        %v4016 = vsel %vm1281, %v4014, %v4015
        %v4017 = vrot.slane %v3863, 1
        %v4018 = vrot.slane %v3864, 1
        %v4019 = vsel %vm1281, %v4017, %v4018
        %v4020 = vrot.slane %v3865, 1
        %v4021 = vrot.slane %v3866, 1
        %v4022 = vsel %vm1281, %v4020, %v4021
        %v4023 = vrot.slane %v3867, 1
        %v4024 = vrot.slane %v3868, 1
        %v4025 = vsel %vm1281, %v4023, %v4024
        %v4026 = vrot.slane %v3869, 1
        %v4027 = vrot.slane %v3870, 1
        %v4028 = vsel %vm1281, %v4026, %v4027
        %v4029 = vrot.slane %v3871, 1
        %v4030 = vrot.slane %v3872, 1
        %v4031 = vsel %vm1281, %v4029, %v4030
        %v4032 = vrot.slane %v3873, 1
        %v4033 = vrot.slane %v3874, 1
        %v4034 = vsel %vm1281, %v4032, %v4033
        %v4067 = vadd.f32 %v3771, %v3941
        %v4068 = vadd.f32 %v3772, %v3944
        %v4069 = vadd.f32 %v3773, %v3947
        %v4070 = vadd.f32 %v3774, %v3950
        %v4071 = vadd.f32 %v3775, %v3953
        %v4072 = vadd.f32 %v3776, %v3956
        %v4073 = vadd.f32 %v3777, %v3959
        %v4074 = vadd.f32 %v3778, %v3962
        %v4075 = vadd.f32 %v3779, %v3965
        %v4076 = vadd.f32 %v3780, %v3968
        %v4077 = vadd.f32 %v3781, %v3971
        %v4078 = vadd.f32 %v3782, %v3974
        %v4079 = vadd.f32 %v3783, %v3977
        %v4080 = vadd.f32 %v3784, %v3980
        %v4081 = vadd.f32 %v3785, %v3983
        %v4082 = vadd.f32 %v3786, %v3986
        %v4083 = vadd.f32 %v3787, %v3989
        %v4084 = vadd.f32 %v3788, %v3992
        %v4085 = vadd.f32 %v3789, %v3995
        %v4086 = vadd.f32 %v3790, %v3998
        %v4087 = vadd.f32 %v3791, %v4001
        %v4088 = vadd.f32 %v3792, %v4004
        %v4089 = vadd.f32 %v3793, %v4007
        %v4090 = vadd.f32 %v3794, %v4010
        %v4091 = vadd.f32 %v3795, %v4013
        %v4092 = vadd.f32 %v3796, %v4016
        %v4093 = vadd.f32 %v3797, %v4019
        %v4094 = vadd.f32 %v3798, %v4022
        %v4095 = vadd.f32 %v3799, %v4025
        %v4096 = vadd.f32 %v3800, %v4028
        %v4097 = vadd.f32 %v3801, %v4031
        %v4098 = vadd.f32 %v3802, %v4034
        %s4099 = scalar_lea.vmem [#allocation8], 14
        %v4100 = vld [vmem:[%s4099] sm:$0x1]
        %v4102 = vlaneseq
        %v4103 = vshrl.u32 %v4102, 7
        %v4104 = vsub.s32 0, %v4103
        %v4105 = vrot.slane %v4100, %v4104
        %v4107 = vmul.f32 %v976, %v4105
        %v4108 = vmul.f32 %v977, %v4105
        %v4109 = vmul.f32 %v978, %v4105
        %v4110 = vmul.f32 %v979, %v4105
        %v4111 = vmul.f32 %v980, %v4105
        %v4112 = vmul.f32 %v981, %v4105
        %v4113 = vmul.f32 %v982, %v4105
        %v4114 = vmul.f32 %v983, %v4105
        %v4115 = vmul.f32 %v984, %v4105
        %v4116 = vmul.f32 %v985, %v4105
        %v4117 = vmul.f32 %v986, %v4105
        %v4118 = vmul.f32 %v987, %v4105
        %v4119 = vmul.f32 %v988, %v4105
        %v4120 = vmul.f32 %v989, %v4105
        %v4121 = vmul.f32 %v990, %v4105
        %v4122 = vmul.f32 %v991, %v4105
        %v4123 = vmul.f32 %v996, %v4105
        %v4124 = vmul.f32 %v997, %v4105
        %v4125 = vmul.f32 %v998, %v4105
        %v4126 = vmul.f32 %v999, %v4105
        %v4127 = vmul.f32 %v1000, %v4105
        %v4128 = vmul.f32 %v1001, %v4105
        %v4129 = vmul.f32 %v1002, %v4105
        %v4130 = vmul.f32 %v1003, %v4105
        %v4131 = vmul.f32 %v1004, %v4105
        %v4132 = vmul.f32 %v1005, %v4105
        %v4133 = vmul.f32 %v1006, %v4105
        %v4134 = vmul.f32 %v1007, %v4105
        %v4135 = vmul.f32 %v1008, %v4105
        %v4136 = vmul.f32 %v1009, %v4105
        %v4137 = vmul.f32 %v1010, %v4105
        %v4138 = vmul.f32 %v1011, %v4105
        %v4139 = vmul.f32 %v1016, %v4105
        %v4140 = vmul.f32 %v1017, %v4105
        %v4141 = vmul.f32 %v1018, %v4105
        %v4142 = vmul.f32 %v1019, %v4105
        %v4143 = vmul.f32 %v1020, %v4105
        %v4144 = vmul.f32 %v1021, %v4105
        %v4145 = vmul.f32 %v1022, %v4105
        %v4146 = vmul.f32 %v1023, %v4105
        %v4147 = vmul.f32 %v1024, %v4105
        %v4148 = vmul.f32 %v1025, %v4105
        %v4149 = vmul.f32 %v1026, %v4105
        %v4150 = vmul.f32 %v1027, %v4105
        %v4151 = vmul.f32 %v1028, %v4105
        %v4152 = vmul.f32 %v1029, %v4105
        %v4153 = vmul.f32 %v1030, %v4105
        %v4154 = vmul.f32 %v1031, %v4105
        %v4155 = vmul.f32 %v1036, %v4105
        %v4156 = vmul.f32 %v1037, %v4105
        %v4157 = vmul.f32 %v1038, %v4105
        %v4158 = vmul.f32 %v1039, %v4105
        %v4159 = vmul.f32 %v1040, %v4105
        %v4160 = vmul.f32 %v1041, %v4105
        %v4161 = vmul.f32 %v1042, %v4105
        %v4162 = vmul.f32 %v1043, %v4105
        %v4163 = vmul.f32 %v1044, %v4105
        %v4164 = vmul.f32 %v1045, %v4105
        %v4165 = vmul.f32 %v1046, %v4105
        %v4166 = vmul.f32 %v1047, %v4105
        %v4167 = vmul.f32 %v1048, %v4105
        %v4168 = vmul.f32 %v1049, %v4105
        %v4169 = vmul.f32 %v1050, %v4105
        %v4170 = vmul.f32 %v1051, %v4105
        %v4235 = vrot.slane %v4107, 2
        %v4236 = vrot.slane %v4108, 2
        %v4237 = vsel %vm1578, %v4235, %v4236
        %v4238 = vrot.slane %v4109, 2
        %v4239 = vrot.slane %v4110, 2
        %v4240 = vsel %vm1578, %v4238, %v4239
        %v4241 = vrot.slane %v4111, 2
        %v4242 = vrot.slane %v4112, 2
        %v4243 = vsel %vm1578, %v4241, %v4242
        %v4244 = vrot.slane %v4113, 2
        %v4245 = vrot.slane %v4114, 2
        %v4246 = vsel %vm1578, %v4244, %v4245
        %v4247 = vrot.slane %v4115, 2
        %v4248 = vrot.slane %v4116, 2
        %v4249 = vsel %vm1578, %v4247, %v4248
        %v4250 = vrot.slane %v4117, 2
        %v4251 = vrot.slane %v4118, 2
        %v4252 = vsel %vm1578, %v4250, %v4251
        %v4253 = vrot.slane %v4119, 2
        %v4254 = vrot.slane %v4120, 2
        %v4255 = vsel %vm1578, %v4253, %v4254
        %v4256 = vrot.slane %v4121, 2
        %v4257 = vrot.slane %v4122, 2
        %v4258 = vsel %vm1578, %v4256, %v4257
        %v4259 = vrot.slane %v4123, 2
        %v4260 = vrot.slane %v4124, 2
        %v4261 = vsel %vm1578, %v4259, %v4260
        %v4262 = vrot.slane %v4125, 2
        %v4263 = vrot.slane %v4126, 2
        %v4264 = vsel %vm1578, %v4262, %v4263
        %v4265 = vrot.slane %v4127, 2
        %v4266 = vrot.slane %v4128, 2
        %v4267 = vsel %vm1578, %v4265, %v4266
        %v4268 = vrot.slane %v4129, 2
        %v4269 = vrot.slane %v4130, 2
        %v4270 = vsel %vm1578, %v4268, %v4269
        %v4271 = vrot.slane %v4131, 2
        %v4272 = vrot.slane %v4132, 2
        %v4273 = vsel %vm1578, %v4271, %v4272
        %v4274 = vrot.slane %v4133, 2
        %v4275 = vrot.slane %v4134, 2
        %v4276 = vsel %vm1578, %v4274, %v4275
        %v4277 = vrot.slane %v4135, 2
        %v4278 = vrot.slane %v4136, 2
        %v4279 = vsel %vm1578, %v4277, %v4278
        %v4280 = vrot.slane %v4137, 2
        %v4281 = vrot.slane %v4138, 2
        %v4282 = vsel %vm1578, %v4280, %v4281
        %v4283 = vrot.slane %v4139, 2
        %v4284 = vrot.slane %v4140, 2
        %v4285 = vsel %vm1578, %v4283, %v4284
        %v4286 = vrot.slane %v4141, 2
        %v4287 = vrot.slane %v4142, 2
        %v4288 = vsel %vm1578, %v4286, %v4287
        %v4289 = vrot.slane %v4143, 2
        %v4290 = vrot.slane %v4144, 2
        %v4291 = vsel %vm1578, %v4289, %v4290
        %v4292 = vrot.slane %v4145, 2
        %v4293 = vrot.slane %v4146, 2
        %v4294 = vsel %vm1578, %v4292, %v4293
        %v4295 = vrot.slane %v4147, 2
        %v4296 = vrot.slane %v4148, 2
        %v4297 = vsel %vm1578, %v4295, %v4296
        %v4298 = vrot.slane %v4149, 2
        %v4299 = vrot.slane %v4150, 2
        %v4300 = vsel %vm1578, %v4298, %v4299
        %v4301 = vrot.slane %v4151, 2
        %v4302 = vrot.slane %v4152, 2
        %v4303 = vsel %vm1578, %v4301, %v4302
        %v4304 = vrot.slane %v4153, 2
        %v4305 = vrot.slane %v4154, 2
        %v4306 = vsel %vm1578, %v4304, %v4305
        %v4307 = vrot.slane %v4155, 2
        %v4308 = vrot.slane %v4156, 2
        %v4309 = vsel %vm1578, %v4307, %v4308
        %v4310 = vrot.slane %v4157, 2
        %v4311 = vrot.slane %v4158, 2
        %v4312 = vsel %vm1578, %v4310, %v4311
        %v4313 = vrot.slane %v4159, 2
        %v4314 = vrot.slane %v4160, 2
        %v4315 = vsel %vm1578, %v4313, %v4314
        %v4316 = vrot.slane %v4161, 2
        %v4317 = vrot.slane %v4162, 2
        %v4318 = vsel %vm1578, %v4316, %v4317
        %v4319 = vrot.slane %v4163, 2
        %v4320 = vrot.slane %v4164, 2
        %v4321 = vsel %vm1578, %v4319, %v4320
        %v4322 = vrot.slane %v4165, 2
        %v4323 = vrot.slane %v4166, 2
        %v4324 = vsel %vm1578, %v4322, %v4323
        %v4325 = vrot.slane %v4167, 2
        %v4326 = vrot.slane %v4168, 2
        %v4327 = vsel %vm1578, %v4325, %v4326
        %v4328 = vrot.slane %v4169, 2
        %v4329 = vrot.slane %v4170, 2
        %v4330 = vsel %vm1578, %v4328, %v4329
        %v4363 = vadd.f32 %v4067, %v4237
        %v4364 = vadd.f32 %v4068, %v4240
        %v4365 = vadd.f32 %v4069, %v4243
        %v4366 = vadd.f32 %v4070, %v4246
        %v4367 = vadd.f32 %v4071, %v4249
        %v4368 = vadd.f32 %v4072, %v4252
        %v4369 = vadd.f32 %v4073, %v4255
        %v4370 = vadd.f32 %v4074, %v4258
        %v4371 = vadd.f32 %v4075, %v4261
        %v4372 = vadd.f32 %v4076, %v4264
        %v4373 = vadd.f32 %v4077, %v4267
        %v4374 = vadd.f32 %v4078, %v4270
        %v4375 = vadd.f32 %v4079, %v4273
        %v4376 = vadd.f32 %v4080, %v4276
        %v4377 = vadd.f32 %v4081, %v4279
        %v4378 = vadd.f32 %v4082, %v4282
        %v4379 = vadd.f32 %v4083, %v4285
        %v4380 = vadd.f32 %v4084, %v4288
        %v4381 = vadd.f32 %v4085, %v4291
        %v4382 = vadd.f32 %v4086, %v4294
        %v4383 = vadd.f32 %v4087, %v4297
        %v4384 = vadd.f32 %v4088, %v4300
        %v4385 = vadd.f32 %v4089, %v4303
        %v4386 = vadd.f32 %v4090, %v4306
        %v4387 = vadd.f32 %v4091, %v4309
        %v4388 = vadd.f32 %v4092, %v4312
        %v4389 = vadd.f32 %v4093, %v4315
        %v4390 = vadd.f32 %v4094, %v4318
        %v4391 = vadd.f32 %v4095, %v4321
        %v4392 = vadd.f32 %v4096, %v4324
        %v4393 = vadd.f32 %v4097, %v4327
        %v4394 = vadd.f32 %v4098, %v4330
        %s4395 = scalar_lea.vmem [#allocation8], 15
        %v4396 = vld [vmem:[%s4395] sm:$0x1]
        %v4398 = vlaneseq
        %v4399 = vshrl.u32 %v4398, 7
        %v4400 = vsub.s32 0, %v4399
        %v4401 = vrot.slane %v4396, %v4400
        %v4403 = vmul.f32 %v978, %v4401
        %v4404 = vmul.f32 %v980, %v4401
        %v4405 = vmul.f32 %v982, %v4401
        %v4406 = vmul.f32 %v984, %v4401
        %v4407 = vmul.f32 %v986, %v4401
        %v4408 = vmul.f32 %v988, %v4401
        %v4409 = vmul.f32 %v990, %v4401
        %v4410 = vmul.f32 %v992, %v4401
        %v4411 = vmul.f32 %v998, %v4401
        %v4412 = vmul.f32 %v1000, %v4401
        %v4413 = vmul.f32 %v1002, %v4401
        %v4414 = vmul.f32 %v1004, %v4401
        %v4415 = vmul.f32 %v1006, %v4401
        %v4416 = vmul.f32 %v1008, %v4401
        %v4417 = vmul.f32 %v1010, %v4401
        %v4418 = vmul.f32 %v1012, %v4401
        %v4419 = vmul.f32 %v1018, %v4401
        %v4420 = vmul.f32 %v1020, %v4401
        %v4421 = vmul.f32 %v1022, %v4401
        %v4422 = vmul.f32 %v1024, %v4401
        %v4423 = vmul.f32 %v1026, %v4401
        %v4424 = vmul.f32 %v1028, %v4401
        %v4425 = vmul.f32 %v1030, %v4401
        %v4426 = vmul.f32 %v1032, %v4401
        %v4427 = vmul.f32 %v1038, %v4401
        %v4428 = vmul.f32 %v1040, %v4401
        %v4429 = vmul.f32 %v1042, %v4401
        %v4430 = vmul.f32 %v1044, %v4401
        %v4431 = vmul.f32 %v1046, %v4401
        %v4432 = vmul.f32 %v1048, %v4401
        %v4433 = vmul.f32 %v1050, %v4401
        %v4434 = vmul.f32 %v1052, %v4401
        %v4435 = vadd.f32 %v4363, %v4403
        %v4436 = vadd.f32 %v4364, %v4404
        %v4437 = vadd.f32 %v4365, %v4405
        %v4438 = vadd.f32 %v4366, %v4406
        %v4439 = vadd.f32 %v4367, %v4407
        %v4440 = vadd.f32 %v4368, %v4408
        %v4441 = vadd.f32 %v4369, %v4409
        %v4442 = vadd.f32 %v4370, %v4410
        %v4443 = vadd.f32 %v4371, %v4411
        %v4444 = vadd.f32 %v4372, %v4412
        %v4445 = vadd.f32 %v4373, %v4413
        %v4446 = vadd.f32 %v4374, %v4414
        %v4447 = vadd.f32 %v4375, %v4415
        %v4448 = vadd.f32 %v4376, %v4416
        %v4449 = vadd.f32 %v4377, %v4417
        %v4450 = vadd.f32 %v4378, %v4418
        %v4451 = vadd.f32 %v4379, %v4419
        %v4452 = vadd.f32 %v4380, %v4420
        %v4453 = vadd.f32 %v4381, %v4421
        %v4454 = vadd.f32 %v4382, %v4422
        %v4455 = vadd.f32 %v4383, %v4423
        %v4456 = vadd.f32 %v4384, %v4424
        %v4457 = vadd.f32 %v4385, %v4425
        %v4458 = vadd.f32 %v4386, %v4426
        %v4459 = vadd.f32 %v4387, %v4427
        %v4460 = vadd.f32 %v4388, %v4428
        %v4461 = vadd.f32 %v4389, %v4429
        %v4462 = vadd.f32 %v4390, %v4430
        %v4463 = vadd.f32 %v4391, %v4431
        %v4464 = vadd.f32 %v4392, %v4432
        %v4465 = vadd.f32 %v4393, %v4433
        %v4466 = vadd.f32 %v4394, %v4434
        %s4467 = scalar_lea.vmem [#allocation8], 16
        %v4468 = vld [vmem:[%s4467] sm:$0x1]
        %v4470 = vlaneseq
        %v4471 = vshrl.u32 %v4470, 7
        %v4472 = vsub.s32 0, %v4471
        %v4473 = vrot.slane %v4468, %v4472
        %v4475 = vmul.f32 %v978, %v4473
        %v4476 = vmul.f32 %v979, %v4473
        %v4477 = vmul.f32 %v980, %v4473
        %v4478 = vmul.f32 %v981, %v4473
        %v4479 = vmul.f32 %v982, %v4473
        %v4480 = vmul.f32 %v983, %v4473
        %v4481 = vmul.f32 %v984, %v4473
        %v4482 = vmul.f32 %v985, %v4473
        %v4483 = vmul.f32 %v986, %v4473
        %v4484 = vmul.f32 %v987, %v4473
        %v4485 = vmul.f32 %v988, %v4473
        %v4486 = vmul.f32 %v989, %v4473
        %v4487 = vmul.f32 %v990, %v4473
        %v4488 = vmul.f32 %v991, %v4473
        %v4489 = vmul.f32 %v992, %v4473
        %v4490 = vmul.f32 %v993, %v4473
        %v4491 = vmul.f32 %v998, %v4473
        %v4492 = vmul.f32 %v999, %v4473
        %v4493 = vmul.f32 %v1000, %v4473
        %v4494 = vmul.f32 %v1001, %v4473
        %v4495 = vmul.f32 %v1002, %v4473
        %v4496 = vmul.f32 %v1003, %v4473
        %v4497 = vmul.f32 %v1004, %v4473
        %v4498 = vmul.f32 %v1005, %v4473
        %v4499 = vmul.f32 %v1006, %v4473
        %v4500 = vmul.f32 %v1007, %v4473
        %v4501 = vmul.f32 %v1008, %v4473
        %v4502 = vmul.f32 %v1009, %v4473
        %v4503 = vmul.f32 %v1010, %v4473
        %v4504 = vmul.f32 %v1011, %v4473
        %v4505 = vmul.f32 %v1012, %v4473
        %v4506 = vmul.f32 %v1013, %v4473
        %v4507 = vmul.f32 %v1018, %v4473
        %v4508 = vmul.f32 %v1019, %v4473
        %v4509 = vmul.f32 %v1020, %v4473
        %v4510 = vmul.f32 %v1021, %v4473
        %v4511 = vmul.f32 %v1022, %v4473
        %v4512 = vmul.f32 %v1023, %v4473
        %v4513 = vmul.f32 %v1024, %v4473
        %v4514 = vmul.f32 %v1025, %v4473
        %v4515 = vmul.f32 %v1026, %v4473
        %v4516 = vmul.f32 %v1027, %v4473
        %v4517 = vmul.f32 %v1028, %v4473
        %v4518 = vmul.f32 %v1029, %v4473
        %v4519 = vmul.f32 %v1030, %v4473
        %v4520 = vmul.f32 %v1031, %v4473
        %v4521 = vmul.f32 %v1032, %v4473
        %v4522 = vmul.f32 %v1033, %v4473
        %v4523 = vmul.f32 %v1038, %v4473
        %v4524 = vmul.f32 %v1039, %v4473
        %v4525 = vmul.f32 %v1040, %v4473
        %v4526 = vmul.f32 %v1041, %v4473
        %v4527 = vmul.f32 %v1042, %v4473
        %v4528 = vmul.f32 %v1043, %v4473
        %v4529 = vmul.f32 %v1044, %v4473
        %v4530 = vmul.f32 %v1045, %v4473
        %v4531 = vmul.f32 %v1046, %v4473
        %v4532 = vmul.f32 %v1047, %v4473
        %v4533 = vmul.f32 %v1048, %v4473
        %v4534 = vmul.f32 %v1049, %v4473
        %v4535 = vmul.f32 %v1050, %v4473
        %v4536 = vmul.f32 %v1051, %v4473
        %v4537 = vmul.f32 %v1052, %v4473
        %v4538 = vmul.f32 %v1053, %v4473
        %v4603 = vrot.slane %v4475, 1
        %v4604 = vrot.slane %v4476, 1
        %v4605 = vsel %vm1281, %v4603, %v4604
        %v4606 = vrot.slane %v4477, 1
        %v4607 = vrot.slane %v4478, 1
        %v4608 = vsel %vm1281, %v4606, %v4607
        %v4609 = vrot.slane %v4479, 1
        %v4610 = vrot.slane %v4480, 1
        %v4611 = vsel %vm1281, %v4609, %v4610
        %v4612 = vrot.slane %v4481, 1
        %v4613 = vrot.slane %v4482, 1
        %v4614 = vsel %vm1281, %v4612, %v4613
        %v4615 = vrot.slane %v4483, 1
        %v4616 = vrot.slane %v4484, 1
        %v4617 = vsel %vm1281, %v4615, %v4616
        %v4618 = vrot.slane %v4485, 1
        %v4619 = vrot.slane %v4486, 1
        %v4620 = vsel %vm1281, %v4618, %v4619
        %v4621 = vrot.slane %v4487, 1
        %v4622 = vrot.slane %v4488, 1
        %v4623 = vsel %vm1281, %v4621, %v4622
        %v4624 = vrot.slane %v4489, 1
        %v4625 = vrot.slane %v4490, 1
        %v4626 = vsel %vm1281, %v4624, %v4625
        %v4627 = vrot.slane %v4491, 1
        %v4628 = vrot.slane %v4492, 1
        %v4629 = vsel %vm1281, %v4627, %v4628
        %v4630 = vrot.slane %v4493, 1
        %v4631 = vrot.slane %v4494, 1
        %v4632 = vsel %vm1281, %v4630, %v4631
        %v4633 = vrot.slane %v4495, 1
        %v4634 = vrot.slane %v4496, 1
        %v4635 = vsel %vm1281, %v4633, %v4634
        %v4636 = vrot.slane %v4497, 1
        %v4637 = vrot.slane %v4498, 1
        %v4638 = vsel %vm1281, %v4636, %v4637
        %v4639 = vrot.slane %v4499, 1
        %v4640 = vrot.slane %v4500, 1
        %v4641 = vsel %vm1281, %v4639, %v4640
        %v4642 = vrot.slane %v4501, 1
        %v4643 = vrot.slane %v4502, 1
        %v4644 = vsel %vm1281, %v4642, %v4643
        %v4645 = vrot.slane %v4503, 1
        %v4646 = vrot.slane %v4504, 1
        %v4647 = vsel %vm1281, %v4645, %v4646
        %v4648 = vrot.slane %v4505, 1
        %v4649 = vrot.slane %v4506, 1
        %v4650 = vsel %vm1281, %v4648, %v4649
        %v4651 = vrot.slane %v4507, 1
        %v4652 = vrot.slane %v4508, 1
        %v4653 = vsel %vm1281, %v4651, %v4652
        %v4654 = vrot.slane %v4509, 1
        %v4655 = vrot.slane %v4510, 1
        %v4656 = vsel %vm1281, %v4654, %v4655
        %v4657 = vrot.slane %v4511, 1
        %v4658 = vrot.slane %v4512, 1
        %v4659 = vsel %vm1281, %v4657, %v4658
        %v4660 = vrot.slane %v4513, 1
        %v4661 = vrot.slane %v4514, 1
        %v4662 = vsel %vm1281, %v4660, %v4661
        %v4663 = vrot.slane %v4515, 1
        %v4664 = vrot.slane %v4516, 1
        %v4665 = vsel %vm1281, %v4663, %v4664
        %v4666 = vrot.slane %v4517, 1
        %v4667 = vrot.slane %v4518, 1
        %v4668 = vsel %vm1281, %v4666, %v4667
        %v4669 = vrot.slane %v4519, 1
        %v4670 = vrot.slane %v4520, 1
        %v4671 = vsel %vm1281, %v4669, %v4670
        %v4672 = vrot.slane %v4521, 1
        %v4673 = vrot.slane %v4522, 1
        %v4674 = vsel %vm1281, %v4672, %v4673
        %v4675 = vrot.slane %v4523, 1
        %v4676 = vrot.slane %v4524, 1
        %v4677 = vsel %vm1281, %v4675, %v4676
        %v4678 = vrot.slane %v4525, 1
        %v4679 = vrot.slane %v4526, 1
        %v4680 = vsel %vm1281, %v4678, %v4679
        %v4681 = vrot.slane %v4527, 1
        %v4682 = vrot.slane %v4528, 1
        %v4683 = vsel %vm1281, %v4681, %v4682
        %v4684 = vrot.slane %v4529, 1
        %v4685 = vrot.slane %v4530, 1
        %v4686 = vsel %vm1281, %v4684, %v4685
        %v4687 = vrot.slane %v4531, 1
        %v4688 = vrot.slane %v4532, 1
        %v4689 = vsel %vm1281, %v4687, %v4688
        %v4690 = vrot.slane %v4533, 1
        %v4691 = vrot.slane %v4534, 1
        %v4692 = vsel %vm1281, %v4690, %v4691
        %v4693 = vrot.slane %v4535, 1
        %v4694 = vrot.slane %v4536, 1
        %v4695 = vsel %vm1281, %v4693, %v4694
        %v4696 = vrot.slane %v4537, 1
        %v4697 = vrot.slane %v4538, 1
        %v4698 = vsel %vm1281, %v4696, %v4697
        %v4731 = vadd.f32 %v4435, %v4605
        %v4732 = vadd.f32 %v4436, %v4608
        %v4733 = vadd.f32 %v4437, %v4611
        %v4734 = vadd.f32 %v4438, %v4614
        %v4735 = vadd.f32 %v4439, %v4617
        %v4736 = vadd.f32 %v4440, %v4620
        %v4737 = vadd.f32 %v4441, %v4623
        %v4738 = vadd.f32 %v4442, %v4626
        %v4739 = vadd.f32 %v4443, %v4629
        %v4740 = vadd.f32 %v4444, %v4632
        %v4741 = vadd.f32 %v4445, %v4635
        %v4742 = vadd.f32 %v4446, %v4638
        %v4743 = vadd.f32 %v4447, %v4641
        %v4744 = vadd.f32 %v4448, %v4644
        %v4745 = vadd.f32 %v4449, %v4647
        %v4746 = vadd.f32 %v4450, %v4650
        %v4747 = vadd.f32 %v4451, %v4653
        %v4748 = vadd.f32 %v4452, %v4656
        %v4749 = vadd.f32 %v4453, %v4659
        %v4750 = vadd.f32 %v4454, %v4662
        %v4751 = vadd.f32 %v4455, %v4665
        %v4752 = vadd.f32 %v4456, %v4668
        %v4753 = vadd.f32 %v4457, %v4671
        %v4754 = vadd.f32 %v4458, %v4674
        %v4755 = vadd.f32 %v4459, %v4677
        %v4756 = vadd.f32 %v4460, %v4680
        %v4757 = vadd.f32 %v4461, %v4683
        %v4758 = vadd.f32 %v4462, %v4686
        %v4759 = vadd.f32 %v4463, %v4689
        %v4760 = vadd.f32 %v4464, %v4692
        %v4761 = vadd.f32 %v4465, %v4695
        %v4762 = vadd.f32 %v4466, %v4698
        %s4763 = scalar_lea.vmem [#allocation8], 17
        %v4764 = vld [vmem:[%s4763] sm:$0x1]
        %v4766 = vlaneseq
        %v4767 = vshrl.u32 %v4766, 7
        %v4768 = vsub.s32 0, %v4767
        %v4769 = vrot.slane %v4764, %v4768
        %v4771 = vmul.f32 %v978, %v4769
        %v4772 = vmul.f32 %v979, %v4769
        %v4773 = vmul.f32 %v980, %v4769
        %v4774 = vmul.f32 %v981, %v4769
        %v4775 = vmul.f32 %v982, %v4769
        %v4776 = vmul.f32 %v983, %v4769
        %v4777 = vmul.f32 %v984, %v4769
        %v4778 = vmul.f32 %v985, %v4769
        %v4779 = vmul.f32 %v986, %v4769
        %v4780 = vmul.f32 %v987, %v4769
        %v4781 = vmul.f32 %v988, %v4769
        %v4782 = vmul.f32 %v989, %v4769
        %v4783 = vmul.f32 %v990, %v4769
        %v4784 = vmul.f32 %v991, %v4769
        %v4785 = vmul.f32 %v992, %v4769
        %v4786 = vmul.f32 %v993, %v4769
        %v4787 = vmul.f32 %v998, %v4769
        %v4788 = vmul.f32 %v999, %v4769
        %v4789 = vmul.f32 %v1000, %v4769
        %v4790 = vmul.f32 %v1001, %v4769
        %v4791 = vmul.f32 %v1002, %v4769
        %v4792 = vmul.f32 %v1003, %v4769
        %v4793 = vmul.f32 %v1004, %v4769
        %v4794 = vmul.f32 %v1005, %v4769
        %v4795 = vmul.f32 %v1006, %v4769
        %v4796 = vmul.f32 %v1007, %v4769
        %v4797 = vmul.f32 %v1008, %v4769
        %v4798 = vmul.f32 %v1009, %v4769
        %v4799 = vmul.f32 %v1010, %v4769
        %v4800 = vmul.f32 %v1011, %v4769
        %v4801 = vmul.f32 %v1012, %v4769
        %v4802 = vmul.f32 %v1013, %v4769
        %v4803 = vmul.f32 %v1018, %v4769
        %v4804 = vmul.f32 %v1019, %v4769
        %v4805 = vmul.f32 %v1020, %v4769
        %v4806 = vmul.f32 %v1021, %v4769
        %v4807 = vmul.f32 %v1022, %v4769
        %v4808 = vmul.f32 %v1023, %v4769
        %v4809 = vmul.f32 %v1024, %v4769
        %v4810 = vmul.f32 %v1025, %v4769
        %v4811 = vmul.f32 %v1026, %v4769
        %v4812 = vmul.f32 %v1027, %v4769
        %v4813 = vmul.f32 %v1028, %v4769
        %v4814 = vmul.f32 %v1029, %v4769
        %v4815 = vmul.f32 %v1030, %v4769
        %v4816 = vmul.f32 %v1031, %v4769
        %v4817 = vmul.f32 %v1032, %v4769
        %v4818 = vmul.f32 %v1033, %v4769
        %v4819 = vmul.f32 %v1038, %v4769
        %v4820 = vmul.f32 %v1039, %v4769
        %v4821 = vmul.f32 %v1040, %v4769
        %v4822 = vmul.f32 %v1041, %v4769
        %v4823 = vmul.f32 %v1042, %v4769
        %v4824 = vmul.f32 %v1043, %v4769
        %v4825 = vmul.f32 %v1044, %v4769
        %v4826 = vmul.f32 %v1045, %v4769
        %v4827 = vmul.f32 %v1046, %v4769
        %v4828 = vmul.f32 %v1047, %v4769
        %v4829 = vmul.f32 %v1048, %v4769
        %v4830 = vmul.f32 %v1049, %v4769
        %v4831 = vmul.f32 %v1050, %v4769
        %v4832 = vmul.f32 %v1051, %v4769
        %v4833 = vmul.f32 %v1052, %v4769
        %v4834 = vmul.f32 %v1053, %v4769
        %v4899 = vrot.slane %v4771, 2
        %v4900 = vrot.slane %v4772, 2
        %v4901 = vsel %vm1578, %v4899, %v4900
        %v4902 = vrot.slane %v4773, 2
        %v4903 = vrot.slane %v4774, 2
        %v4904 = vsel %vm1578, %v4902, %v4903
        %v4905 = vrot.slane %v4775, 2
        %v4906 = vrot.slane %v4776, 2
        %v4907 = vsel %vm1578, %v4905, %v4906
        %v4908 = vrot.slane %v4777, 2
        %v4909 = vrot.slane %v4778, 2
        %v4910 = vsel %vm1578, %v4908, %v4909
        %v4911 = vrot.slane %v4779, 2
        %v4912 = vrot.slane %v4780, 2
        %v4913 = vsel %vm1578, %v4911, %v4912
        %v4914 = vrot.slane %v4781, 2
        %v4915 = vrot.slane %v4782, 2
        %v4916 = vsel %vm1578, %v4914, %v4915
        %v4917 = vrot.slane %v4783, 2
        %v4918 = vrot.slane %v4784, 2
        %v4919 = vsel %vm1578, %v4917, %v4918
        %v4920 = vrot.slane %v4785, 2
        %v4921 = vrot.slane %v4786, 2
        %v4922 = vsel %vm1578, %v4920, %v4921
        %v4923 = vrot.slane %v4787, 2
        %v4924 = vrot.slane %v4788, 2
        %v4925 = vsel %vm1578, %v4923, %v4924
        %v4926 = vrot.slane %v4789, 2
        %v4927 = vrot.slane %v4790, 2
        %v4928 = vsel %vm1578, %v4926, %v4927
        %v4929 = vrot.slane %v4791, 2
        %v4930 = vrot.slane %v4792, 2
        %v4931 = vsel %vm1578, %v4929, %v4930
        %v4932 = vrot.slane %v4793, 2
        %v4933 = vrot.slane %v4794, 2
        %v4934 = vsel %vm1578, %v4932, %v4933
        %v4935 = vrot.slane %v4795, 2
        %v4936 = vrot.slane %v4796, 2
        %v4937 = vsel %vm1578, %v4935, %v4936
        %v4938 = vrot.slane %v4797, 2
        %v4939 = vrot.slane %v4798, 2
        %v4940 = vsel %vm1578, %v4938, %v4939
        %v4941 = vrot.slane %v4799, 2
        %v4942 = vrot.slane %v4800, 2
        %v4943 = vsel %vm1578, %v4941, %v4942
        %v4944 = vrot.slane %v4801, 2
        %v4945 = vrot.slane %v4802, 2
        %v4946 = vsel %vm1578, %v4944, %v4945
        %v4947 = vrot.slane %v4803, 2
        %v4948 = vrot.slane %v4804, 2
        %v4949 = vsel %vm1578, %v4947, %v4948
        %v4950 = vrot.slane %v4805, 2
        %v4951 = vrot.slane %v4806, 2
        %v4952 = vsel %vm1578, %v4950, %v4951
        %v4953 = vrot.slane %v4807, 2
        %v4954 = vrot.slane %v4808, 2
        %v4955 = vsel %vm1578, %v4953, %v4954
        %v4956 = vrot.slane %v4809, 2
        %v4957 = vrot.slane %v4810, 2
        %v4958 = vsel %vm1578, %v4956, %v4957
        %v4959 = vrot.slane %v4811, 2
        %v4960 = vrot.slane %v4812, 2
        %v4961 = vsel %vm1578, %v4959, %v4960
        %v4962 = vrot.slane %v4813, 2
        %v4963 = vrot.slane %v4814, 2
        %v4964 = vsel %vm1578, %v4962, %v4963
        %v4965 = vrot.slane %v4815, 2
        %v4966 = vrot.slane %v4816, 2
        %v4967 = vsel %vm1578, %v4965, %v4966
        %v4968 = vrot.slane %v4817, 2
        %v4969 = vrot.slane %v4818, 2
        %v4970 = vsel %vm1578, %v4968, %v4969
        %v4971 = vrot.slane %v4819, 2
        %v4972 = vrot.slane %v4820, 2
        %v4973 = vsel %vm1578, %v4971, %v4972
        %v4974 = vrot.slane %v4821, 2
        %v4975 = vrot.slane %v4822, 2
        %v4976 = vsel %vm1578, %v4974, %v4975
        %v4977 = vrot.slane %v4823, 2
        %v4978 = vrot.slane %v4824, 2
        %v4979 = vsel %vm1578, %v4977, %v4978
        %v4980 = vrot.slane %v4825, 2
        %v4981 = vrot.slane %v4826, 2
        %v4982 = vsel %vm1578, %v4980, %v4981
        %v4983 = vrot.slane %v4827, 2
        %v4984 = vrot.slane %v4828, 2
        %v4985 = vsel %vm1578, %v4983, %v4984
        %v4986 = vrot.slane %v4829, 2
        %v4987 = vrot.slane %v4830, 2
        %v4988 = vsel %vm1578, %v4986, %v4987
        %v4989 = vrot.slane %v4831, 2
        %v4990 = vrot.slane %v4832, 2
        %v4991 = vsel %vm1578, %v4989, %v4990
        %v4992 = vrot.slane %v4833, 2
        %v4993 = vrot.slane %v4834, 2
        %v4994 = vsel %vm1578, %v4992, %v4993
        %v5027 = vadd.f32 %v4731, %v4901
        %v5028 = vadd.f32 %v4732, %v4904
        %v5029 = vadd.f32 %v4733, %v4907
        %v5030 = vadd.f32 %v4734, %v4910
        %v5031 = vadd.f32 %v4735, %v4913
        %v5032 = vadd.f32 %v4736, %v4916
        %v5033 = vadd.f32 %v4737, %v4919
        %v5034 = vadd.f32 %v4738, %v4922
        %v5035 = vadd.f32 %v4739, %v4925
        %v5036 = vadd.f32 %v4740, %v4928
        %v5037 = vadd.f32 %v4741, %v4931
        %v5038 = vadd.f32 %v4742, %v4934
        %v5039 = vadd.f32 %v4743, %v4937
        %v5040 = vadd.f32 %v4744, %v4940
        %v5041 = vadd.f32 %v4745, %v4943
        %v5042 = vadd.f32 %v4746, %v4946
        %v5043 = vadd.f32 %v4747, %v4949
        %v5044 = vadd.f32 %v4748, %v4952
        %v5045 = vadd.f32 %v4749, %v4955
        %v5046 = vadd.f32 %v4750, %v4958
        %v5047 = vadd.f32 %v4751, %v4961
        %v5048 = vadd.f32 %v4752, %v4964
        %v5049 = vadd.f32 %v4753, %v4967
        %v5050 = vadd.f32 %v4754, %v4970
        %v5051 = vadd.f32 %v4755, %v4973
        %v5052 = vadd.f32 %v4756, %v4976
        %v5053 = vadd.f32 %v4757, %v4979
        %v5054 = vadd.f32 %v4758, %v4982
        %v5055 = vadd.f32 %v4759, %v4985
        %v5056 = vadd.f32 %v4760, %v4988
        %v5057 = vadd.f32 %v4761, %v4991
        %v5058 = vadd.f32 %v4762, %v4994
        %s5059 = scalar_lea.vmem [#allocation8], 18
        %v5060 = vld [vmem:[%s5059] sm:$0x1]
        %v5062 = vlaneseq
        %v5063 = vshrl.u32 %v5062, 7
        %v5064 = vsub.s32 0, %v5063
        %v5065 = vrot.slane %v5060, %v5064
        %v5067 = vmul.f32 %v994, %v5065
        %v5068 = vmul.f32 %v996, %v5065
        %v5069 = vmul.f32 %v998, %v5065
        %v5070 = vmul.f32 %v1000, %v5065
        %v5071 = vmul.f32 %v1002, %v5065
        %v5072 = vmul.f32 %v1004, %v5065
        %v5073 = vmul.f32 %v1006, %v5065
        %v5074 = vmul.f32 %v1008, %v5065
        %v5075 = vmul.f32 %v1014, %v5065
        %v5076 = vmul.f32 %v1016, %v5065
        %v5077 = vmul.f32 %v1018, %v5065
        %v5078 = vmul.f32 %v1020, %v5065
        %v5079 = vmul.f32 %v1022, %v5065
        %v5080 = vmul.f32 %v1024, %v5065
        %v5081 = vmul.f32 %v1026, %v5065
        %v5082 = vmul.f32 %v1028, %v5065
        %v5083 = vmul.f32 %v1034, %v5065
        %v5084 = vmul.f32 %v1036, %v5065
        %v5085 = vmul.f32 %v1038, %v5065
        %v5086 = vmul.f32 %v1040, %v5065
        %v5087 = vmul.f32 %v1042, %v5065
        %v5088 = vmul.f32 %v1044, %v5065
        %v5089 = vmul.f32 %v1046, %v5065
        %v5090 = vmul.f32 %v1048, %v5065
        %v5091 = vmul.f32 %v1054, %v5065
        %v5092 = vmul.f32 %v1056, %v5065
        %v5093 = vmul.f32 %v1058, %v5065
        %v5094 = vmul.f32 %v1060, %v5065
        %v5095 = vmul.f32 %v1062, %v5065
        %v5096 = vmul.f32 %v1064, %v5065
        %v5097 = vmul.f32 %v1066, %v5065
        %v5098 = vmul.f32 %v1068, %v5065
        %v5099 = vadd.f32 %v5027, %v5067
        %v5100 = vadd.f32 %v5028, %v5068
        %v5101 = vadd.f32 %v5029, %v5069
        %v5102 = vadd.f32 %v5030, %v5070
        %v5103 = vadd.f32 %v5031, %v5071
        %v5104 = vadd.f32 %v5032, %v5072
        %v5105 = vadd.f32 %v5033, %v5073
        %v5106 = vadd.f32 %v5034, %v5074
        %v5107 = vadd.f32 %v5035, %v5075
        %v5108 = vadd.f32 %v5036, %v5076
        %v5109 = vadd.f32 %v5037, %v5077
        %v5110 = vadd.f32 %v5038, %v5078
        %v5111 = vadd.f32 %v5039, %v5079
        %v5112 = vadd.f32 %v5040, %v5080
        %v5113 = vadd.f32 %v5041, %v5081
        %v5114 = vadd.f32 %v5042, %v5082
        %v5115 = vadd.f32 %v5043, %v5083
        %v5116 = vadd.f32 %v5044, %v5084
        %v5117 = vadd.f32 %v5045, %v5085
        %v5118 = vadd.f32 %v5046, %v5086
        %v5119 = vadd.f32 %v5047, %v5087
        %v5120 = vadd.f32 %v5048, %v5088
        %v5121 = vadd.f32 %v5049, %v5089
        %v5122 = vadd.f32 %v5050, %v5090
        %v5123 = vadd.f32 %v5051, %v5091
        %v5124 = vadd.f32 %v5052, %v5092
        %v5125 = vadd.f32 %v5053, %v5093
        %v5126 = vadd.f32 %v5054, %v5094
        %v5127 = vadd.f32 %v5055, %v5095
        %v5128 = vadd.f32 %v5056, %v5096
        %v5129 = vadd.f32 %v5057, %v5097
        %v5130 = vadd.f32 %v5058, %v5098
        %s5131 = scalar_lea.vmem [#allocation8], 19
        %v5132 = vld [vmem:[%s5131] sm:$0x1]
        %v5134 = vlaneseq
        %v5135 = vshrl.u32 %v5134, 7
        %v5136 = vsub.s32 0, %v5135
        %v5137 = vrot.slane %v5132, %v5136
        %v5139 = vmul.f32 %v994, %v5137
        %v5140 = vmul.f32 %v995, %v5137
        %v5141 = vmul.f32 %v996, %v5137
        %v5142 = vmul.f32 %v997, %v5137
        %v5143 = vmul.f32 %v998, %v5137
        %v5144 = vmul.f32 %v999, %v5137
        %v5145 = vmul.f32 %v1000, %v5137
        %v5146 = vmul.f32 %v1001, %v5137
        %v5147 = vmul.f32 %v1002, %v5137
        %v5148 = vmul.f32 %v1003, %v5137
        %v5149 = vmul.f32 %v1004, %v5137
        %v5150 = vmul.f32 %v1005, %v5137
        %v5151 = vmul.f32 %v1006, %v5137
        %v5152 = vmul.f32 %v1007, %v5137
        %v5153 = vmul.f32 %v1008, %v5137
        %v5154 = vmul.f32 %v1009, %v5137
        %v5155 = vmul.f32 %v1014, %v5137
        %v5156 = vmul.f32 %v1015, %v5137
        %v5157 = vmul.f32 %v1016, %v5137
        %v5158 = vmul.f32 %v1017, %v5137
        %v5159 = vmul.f32 %v1018, %v5137
        %v5160 = vmul.f32 %v1019, %v5137
        %v5161 = vmul.f32 %v1020, %v5137
        %v5162 = vmul.f32 %v1021, %v5137
        %v5163 = vmul.f32 %v1022, %v5137
        %v5164 = vmul.f32 %v1023, %v5137
        %v5165 = vmul.f32 %v1024, %v5137
        %v5166 = vmul.f32 %v1025, %v5137
        %v5167 = vmul.f32 %v1026, %v5137
        %v5168 = vmul.f32 %v1027, %v5137
        %v5169 = vmul.f32 %v1028, %v5137
        %v5170 = vmul.f32 %v1029, %v5137
        %v5171 = vmul.f32 %v1034, %v5137
        %v5172 = vmul.f32 %v1035, %v5137
        %v5173 = vmul.f32 %v1036, %v5137
        %v5174 = vmul.f32 %v1037, %v5137
        %v5175 = vmul.f32 %v1038, %v5137
        %v5176 = vmul.f32 %v1039, %v5137
        %v5177 = vmul.f32 %v1040, %v5137
        %v5178 = vmul.f32 %v1041, %v5137
        %v5179 = vmul.f32 %v1042, %v5137
        %v5180 = vmul.f32 %v1043, %v5137
        %v5181 = vmul.f32 %v1044, %v5137
        %v5182 = vmul.f32 %v1045, %v5137
        %v5183 = vmul.f32 %v1046, %v5137
        %v5184 = vmul.f32 %v1047, %v5137
        %v5185 = vmul.f32 %v1048, %v5137
        %v5186 = vmul.f32 %v1049, %v5137
        %v5187 = vmul.f32 %v1054, %v5137
        %v5188 = vmul.f32 %v1055, %v5137
        %v5189 = vmul.f32 %v1056, %v5137
        %v5190 = vmul.f32 %v1057, %v5137
        %v5191 = vmul.f32 %v1058, %v5137
        %v5192 = vmul.f32 %v1059, %v5137
        %v5193 = vmul.f32 %v1060, %v5137
        %v5194 = vmul.f32 %v1061, %v5137
        %v5195 = vmul.f32 %v1062, %v5137
        %v5196 = vmul.f32 %v1063, %v5137
        %v5197 = vmul.f32 %v1064, %v5137
        %v5198 = vmul.f32 %v1065, %v5137
        %v5199 = vmul.f32 %v1066, %v5137
        %v5200 = vmul.f32 %v1067, %v5137
        %v5201 = vmul.f32 %v1068, %v5137
        %v5202 = vmul.f32 %v1069, %v5137
        %v5267 = vrot.slane %v5139, 1
        %v5268 = vrot.slane %v5140, 1
        %v5269 = vsel %vm1281, %v5267, %v5268
        %v5270 = vrot.slane %v5141, 1
        %v5271 = vrot.slane %v5142, 1
        %v5272 = vsel %vm1281, %v5270, %v5271
        %v5273 = vrot.slane %v5143, 1
        %v5274 = vrot.slane %v5144, 1
        %v5275 = vsel %vm1281, %v5273, %v5274
        %v5276 = vrot.slane %v5145, 1
        %v5277 = vrot.slane %v5146, 1
        %v5278 = vsel %vm1281, %v5276, %v5277
        %v5279 = vrot.slane %v5147, 1
        %v5280 = vrot.slane %v5148, 1
        %v5281 = vsel %vm1281, %v5279, %v5280
        %v5282 = vrot.slane %v5149, 1
        %v5283 = vrot.slane %v5150, 1
        %v5284 = vsel %vm1281, %v5282, %v5283
        %v5285 = vrot.slane %v5151, 1
        %v5286 = vrot.slane %v5152, 1
        %v5287 = vsel %vm1281, %v5285, %v5286
        %v5288 = vrot.slane %v5153, 1
        %v5289 = vrot.slane %v5154, 1
        %v5290 = vsel %vm1281, %v5288, %v5289
        %v5291 = vrot.slane %v5155, 1
        %v5292 = vrot.slane %v5156, 1
        %v5293 = vsel %vm1281, %v5291, %v5292
        %v5294 = vrot.slane %v5157, 1
        %v5295 = vrot.slane %v5158, 1
        %v5296 = vsel %vm1281, %v5294, %v5295
        %v5297 = vrot.slane %v5159, 1
        %v5298 = vrot.slane %v5160, 1
        %v5299 = vsel %vm1281, %v5297, %v5298
        %v5300 = vrot.slane %v5161, 1
        %v5301 = vrot.slane %v5162, 1
        %v5302 = vsel %vm1281, %v5300, %v5301
        %v5303 = vrot.slane %v5163, 1
        %v5304 = vrot.slane %v5164, 1
        %v5305 = vsel %vm1281, %v5303, %v5304
        %v5306 = vrot.slane %v5165, 1
        %v5307 = vrot.slane %v5166, 1
        %v5308 = vsel %vm1281, %v5306, %v5307
        %v5309 = vrot.slane %v5167, 1
        %v5310 = vrot.slane %v5168, 1
        %v5311 = vsel %vm1281, %v5309, %v5310
        %v5312 = vrot.slane %v5169, 1
        %v5313 = vrot.slane %v5170, 1
        %v5314 = vsel %vm1281, %v5312, %v5313
        %v5315 = vrot.slane %v5171, 1
        %v5316 = vrot.slane %v5172, 1
        %v5317 = vsel %vm1281, %v5315, %v5316
        %v5318 = vrot.slane %v5173, 1
        %v5319 = vrot.slane %v5174, 1
        %v5320 = vsel %vm1281, %v5318, %v5319
        %v5321 = vrot.slane %v5175, 1
        %v5322 = vrot.slane %v5176, 1
        %v5323 = vsel %vm1281, %v5321, %v5322
        %v5324 = vrot.slane %v5177, 1
        %v5325 = vrot.slane %v5178, 1
        %v5326 = vsel %vm1281, %v5324, %v5325
        %v5327 = vrot.slane %v5179, 1
        %v5328 = vrot.slane %v5180, 1
        %v5329 = vsel %vm1281, %v5327, %v5328
        %v5330 = vrot.slane %v5181, 1
        %v5331 = vrot.slane %v5182, 1
        %v5332 = vsel %vm1281, %v5330, %v5331
        %v5333 = vrot.slane %v5183, 1
        %v5334 = vrot.slane %v5184, 1
        %v5335 = vsel %vm1281, %v5333, %v5334
        %v5336 = vrot.slane %v5185, 1
        %v5337 = vrot.slane %v5186, 1
        %v5338 = vsel %vm1281, %v5336, %v5337
        %v5339 = vrot.slane %v5187, 1
        %v5340 = vrot.slane %v5188, 1
        %v5341 = vsel %vm1281, %v5339, %v5340
        %v5342 = vrot.slane %v5189, 1
        %v5343 = vrot.slane %v5190, 1
        %v5344 = vsel %vm1281, %v5342, %v5343
        %v5345 = vrot.slane %v5191, 1
        %v5346 = vrot.slane %v5192, 1
        %v5347 = vsel %vm1281, %v5345, %v5346
        %v5348 = vrot.slane %v5193, 1
        %v5349 = vrot.slane %v5194, 1
        %v5350 = vsel %vm1281, %v5348, %v5349
        %v5351 = vrot.slane %v5195, 1
        %v5352 = vrot.slane %v5196, 1
        %v5353 = vsel %vm1281, %v5351, %v5352
        %v5354 = vrot.slane %v5197, 1
        %v5355 = vrot.slane %v5198, 1
        %v5356 = vsel %vm1281, %v5354, %v5355
        %v5357 = vrot.slane %v5199, 1
        %v5358 = vrot.slane %v5200, 1
        %v5359 = vsel %vm1281, %v5357, %v5358
        %v5360 = vrot.slane %v5201, 1
        %v5361 = vrot.slane %v5202, 1
        %v5362 = vsel %vm1281, %v5360, %v5361
        %v5395 = vadd.f32 %v5099, %v5269
        %v5396 = vadd.f32 %v5100, %v5272
        %v5397 = vadd.f32 %v5101, %v5275
        %v5398 = vadd.f32 %v5102, %v5278
        %v5399 = vadd.f32 %v5103, %v5281
        %v5400 = vadd.f32 %v5104, %v5284
        %v5401 = vadd.f32 %v5105, %v5287
        %v5402 = vadd.f32 %v5106, %v5290
        %v5403 = vadd.f32 %v5107, %v5293
        %v5404 = vadd.f32 %v5108, %v5296
        %v5405 = vadd.f32 %v5109, %v5299
        %v5406 = vadd.f32 %v5110, %v5302
        %v5407 = vadd.f32 %v5111, %v5305
        %v5408 = vadd.f32 %v5112, %v5308
        %v5409 = vadd.f32 %v5113, %v5311
        %v5410 = vadd.f32 %v5114, %v5314
        %v5411 = vadd.f32 %v5115, %v5317
        %v5412 = vadd.f32 %v5116, %v5320
        %v5413 = vadd.f32 %v5117, %v5323
        %v5414 = vadd.f32 %v5118, %v5326
        %v5415 = vadd.f32 %v5119, %v5329
        %v5416 = vadd.f32 %v5120, %v5332
        %v5417 = vadd.f32 %v5121, %v5335
        %v5418 = vadd.f32 %v5122, %v5338
        %v5419 = vadd.f32 %v5123, %v5341
        %v5420 = vadd.f32 %v5124, %v5344
        %v5421 = vadd.f32 %v5125, %v5347
        %v5422 = vadd.f32 %v5126, %v5350
        %v5423 = vadd.f32 %v5127, %v5353
        %v5424 = vadd.f32 %v5128, %v5356
        %v5425 = vadd.f32 %v5129, %v5359
        %v5426 = vadd.f32 %v5130, %v5362
        %s5427 = scalar_lea.vmem [#allocation8], 20
        %v5428 = vld [vmem:[%s5427] sm:$0x1]
        %v5430 = vlaneseq
        %v5431 = vshrl.u32 %v5430, 7
        %v5432 = vsub.s32 0, %v5431
        %v5433 = vrot.slane %v5428, %v5432
        %v5435 = vmul.f32 %v994, %v5433
        %v5436 = vmul.f32 %v995, %v5433
        %v5437 = vmul.f32 %v996, %v5433
        %v5438 = vmul.f32 %v997, %v5433
        %v5439 = vmul.f32 %v998, %v5433
        %v5440 = vmul.f32 %v999, %v5433
        %v5441 = vmul.f32 %v1000, %v5433
        %v5442 = vmul.f32 %v1001, %v5433
        %v5443 = vmul.f32 %v1002, %v5433
        %v5444 = vmul.f32 %v1003, %v5433
        %v5445 = vmul.f32 %v1004, %v5433
        %v5446 = vmul.f32 %v1005, %v5433
        %v5447 = vmul.f32 %v1006, %v5433
        %v5448 = vmul.f32 %v1007, %v5433
        %v5449 = vmul.f32 %v1008, %v5433
        %v5450 = vmul.f32 %v1009, %v5433
        %v5451 = vmul.f32 %v1014, %v5433
        %v5452 = vmul.f32 %v1015, %v5433
        %v5453 = vmul.f32 %v1016, %v5433
        %v5454 = vmul.f32 %v1017, %v5433
        %v5455 = vmul.f32 %v1018, %v5433
        %v5456 = vmul.f32 %v1019, %v5433
        %v5457 = vmul.f32 %v1020, %v5433
        %v5458 = vmul.f32 %v1021, %v5433
        %v5459 = vmul.f32 %v1022, %v5433
        %v5460 = vmul.f32 %v1023, %v5433
        %v5461 = vmul.f32 %v1024, %v5433
        %v5462 = vmul.f32 %v1025, %v5433
        %v5463 = vmul.f32 %v1026, %v5433
        %v5464 = vmul.f32 %v1027, %v5433
        %v5465 = vmul.f32 %v1028, %v5433
        %v5466 = vmul.f32 %v1029, %v5433
        %v5467 = vmul.f32 %v1034, %v5433
        %v5468 = vmul.f32 %v1035, %v5433
        %v5469 = vmul.f32 %v1036, %v5433
        %v5470 = vmul.f32 %v1037, %v5433
        %v5471 = vmul.f32 %v1038, %v5433
        %v5472 = vmul.f32 %v1039, %v5433
        %v5473 = vmul.f32 %v1040, %v5433
        %v5474 = vmul.f32 %v1041, %v5433
        %v5475 = vmul.f32 %v1042, %v5433
        %v5476 = vmul.f32 %v1043, %v5433
        %v5477 = vmul.f32 %v1044, %v5433
        %v5478 = vmul.f32 %v1045, %v5433
        %v5479 = vmul.f32 %v1046, %v5433
        %v5480 = vmul.f32 %v1047, %v5433
        %v5481 = vmul.f32 %v1048, %v5433
        %v5482 = vmul.f32 %v1049, %v5433
        %v5483 = vmul.f32 %v1054, %v5433
        %v5484 = vmul.f32 %v1055, %v5433
        %v5485 = vmul.f32 %v1056, %v5433
        %v5486 = vmul.f32 %v1057, %v5433
        %v5487 = vmul.f32 %v1058, %v5433
        %v5488 = vmul.f32 %v1059, %v5433
        %v5489 = vmul.f32 %v1060, %v5433
        %v5490 = vmul.f32 %v1061, %v5433
        %v5491 = vmul.f32 %v1062, %v5433
        %v5492 = vmul.f32 %v1063, %v5433
        %v5493 = vmul.f32 %v1064, %v5433
        %v5494 = vmul.f32 %v1065, %v5433
        %v5495 = vmul.f32 %v1066, %v5433
        %v5496 = vmul.f32 %v1067, %v5433
        %v5497 = vmul.f32 %v1068, %v5433
        %v5498 = vmul.f32 %v1069, %v5433
        %v5563 = vrot.slane %v5435, 2
        %v5564 = vrot.slane %v5436, 2
        %v5565 = vsel %vm1578, %v5563, %v5564
        %v5566 = vrot.slane %v5437, 2
        %v5567 = vrot.slane %v5438, 2
        %v5568 = vsel %vm1578, %v5566, %v5567
        %v5569 = vrot.slane %v5439, 2
        %v5570 = vrot.slane %v5440, 2
        %v5571 = vsel %vm1578, %v5569, %v5570
        %v5572 = vrot.slane %v5441, 2
        %v5573 = vrot.slane %v5442, 2
        %v5574 = vsel %vm1578, %v5572, %v5573
        %v5575 = vrot.slane %v5443, 2
        %v5576 = vrot.slane %v5444, 2
        %v5577 = vsel %vm1578, %v5575, %v5576
        %v5578 = vrot.slane %v5445, 2
        %v5579 = vrot.slane %v5446, 2
        %v5580 = vsel %vm1578, %v5578, %v5579
        %v5581 = vrot.slane %v5447, 2
        %v5582 = vrot.slane %v5448, 2
        %v5583 = vsel %vm1578, %v5581, %v5582
        %v5584 = vrot.slane %v5449, 2
        %v5585 = vrot.slane %v5450, 2
        %v5586 = vsel %vm1578, %v5584, %v5585
        %v5587 = vrot.slane %v5451, 2
        %v5588 = vrot.slane %v5452, 2
        %v5589 = vsel %vm1578, %v5587, %v5588
        %v5590 = vrot.slane %v5453, 2
        %v5591 = vrot.slane %v5454, 2
        %v5592 = vsel %vm1578, %v5590, %v5591
        %v5593 = vrot.slane %v5455, 2
        %v5594 = vrot.slane %v5456, 2
        %v5595 = vsel %vm1578, %v5593, %v5594
        %v5596 = vrot.slane %v5457, 2
        %v5597 = vrot.slane %v5458, 2
        %v5598 = vsel %vm1578, %v5596, %v5597
        %v5599 = vrot.slane %v5459, 2
        %v5600 = vrot.slane %v5460, 2
        %v5601 = vsel %vm1578, %v5599, %v5600
        %v5602 = vrot.slane %v5461, 2
        %v5603 = vrot.slane %v5462, 2
        %v5604 = vsel %vm1578, %v5602, %v5603
        %v5605 = vrot.slane %v5463, 2
        %v5606 = vrot.slane %v5464, 2
        %v5607 = vsel %vm1578, %v5605, %v5606
        %v5608 = vrot.slane %v5465, 2
        %v5609 = vrot.slane %v5466, 2
        %v5610 = vsel %vm1578, %v5608, %v5609
        %v5611 = vrot.slane %v5467, 2
        %v5612 = vrot.slane %v5468, 2
        %v5613 = vsel %vm1578, %v5611, %v5612
        %v5614 = vrot.slane %v5469, 2
        %v5615 = vrot.slane %v5470, 2
        %v5616 = vsel %vm1578, %v5614, %v5615
        %v5617 = vrot.slane %v5471, 2
        %v5618 = vrot.slane %v5472, 2
        %v5619 = vsel %vm1578, %v5617, %v5618
        %v5620 = vrot.slane %v5473, 2
        %v5621 = vrot.slane %v5474, 2
        %v5622 = vsel %vm1578, %v5620, %v5621
        %v5623 = vrot.slane %v5475, 2
        %v5624 = vrot.slane %v5476, 2
        %v5625 = vsel %vm1578, %v5623, %v5624
        %v5626 = vrot.slane %v5477, 2
        %v5627 = vrot.slane %v5478, 2
        %v5628 = vsel %vm1578, %v5626, %v5627
        %v5629 = vrot.slane %v5479, 2
        %v5630 = vrot.slane %v5480, 2
        %v5631 = vsel %vm1578, %v5629, %v5630
        %v5632 = vrot.slane %v5481, 2
        %v5633 = vrot.slane %v5482, 2
        %v5634 = vsel %vm1578, %v5632, %v5633
        %v5635 = vrot.slane %v5483, 2
        %v5636 = vrot.slane %v5484, 2
        %v5637 = vsel %vm1578, %v5635, %v5636
        %v5638 = vrot.slane %v5485, 2
        %v5639 = vrot.slane %v5486, 2
        %v5640 = vsel %vm1578, %v5638, %v5639
        %v5641 = vrot.slane %v5487, 2
        %v5642 = vrot.slane %v5488, 2
        %v5643 = vsel %vm1578, %v5641, %v5642
        %v5644 = vrot.slane %v5489, 2
        %v5645 = vrot.slane %v5490, 2
        %v5646 = vsel %vm1578, %v5644, %v5645
        %v5647 = vrot.slane %v5491, 2
        %v5648 = vrot.slane %v5492, 2
        %v5649 = vsel %vm1578, %v5647, %v5648
        %v5650 = vrot.slane %v5493, 2
        %v5651 = vrot.slane %v5494, 2
        %v5652 = vsel %vm1578, %v5650, %v5651
        %v5653 = vrot.slane %v5495, 2
        %v5654 = vrot.slane %v5496, 2
        %v5655 = vsel %vm1578, %v5653, %v5654
        %v5656 = vrot.slane %v5497, 2
        %v5657 = vrot.slane %v5498, 2
        %v5658 = vsel %vm1578, %v5656, %v5657
        %v5691 = vadd.f32 %v5395, %v5565
        %v5692 = vadd.f32 %v5396, %v5568
        %v5693 = vadd.f32 %v5397, %v5571
        %v5694 = vadd.f32 %v5398, %v5574
        %v5695 = vadd.f32 %v5399, %v5577
        %v5696 = vadd.f32 %v5400, %v5580
        %v5697 = vadd.f32 %v5401, %v5583
        %v5698 = vadd.f32 %v5402, %v5586
        %v5699 = vadd.f32 %v5403, %v5589
        %v5700 = vadd.f32 %v5404, %v5592
        %v5701 = vadd.f32 %v5405, %v5595
        %v5702 = vadd.f32 %v5406, %v5598
        %v5703 = vadd.f32 %v5407, %v5601
        %v5704 = vadd.f32 %v5408, %v5604
        %v5705 = vadd.f32 %v5409, %v5607
        %v5706 = vadd.f32 %v5410, %v5610
        %v5707 = vadd.f32 %v5411, %v5613
        %v5708 = vadd.f32 %v5412, %v5616
        %v5709 = vadd.f32 %v5413, %v5619
        %v5710 = vadd.f32 %v5414, %v5622
        %v5711 = vadd.f32 %v5415, %v5625
        %v5712 = vadd.f32 %v5416, %v5628
        %v5713 = vadd.f32 %v5417, %v5631
        %v5714 = vadd.f32 %v5418, %v5634
        %v5715 = vadd.f32 %v5419, %v5637
        %v5716 = vadd.f32 %v5420, %v5640
        %v5717 = vadd.f32 %v5421, %v5643
        %v5718 = vadd.f32 %v5422, %v5646
        %v5719 = vadd.f32 %v5423, %v5649
        %v5720 = vadd.f32 %v5424, %v5652
        %v5721 = vadd.f32 %v5425, %v5655
        %v5722 = vadd.f32 %v5426, %v5658
        %s5723 = scalar_lea.vmem [#allocation8], 21
        %v5724 = vld [vmem:[%s5723] sm:$0x1]
        %v5726 = vlaneseq
        %v5727 = vshrl.u32 %v5726, 7
        %v5728 = vsub.s32 0, %v5727
        %v5729 = vrot.slane %v5724, %v5728
        %v5731 = vmul.f32 %v996, %v5729
        %v5732 = vmul.f32 %v998, %v5729
        %v5733 = vmul.f32 %v1000, %v5729
        %v5734 = vmul.f32 %v1002, %v5729
        %v5735 = vmul.f32 %v1004, %v5729
        %v5736 = vmul.f32 %v1006, %v5729
        %v5737 = vmul.f32 %v1008, %v5729
        %v5738 = vmul.f32 %v1010, %v5729
        %v5739 = vmul.f32 %v1016, %v5729
        %v5740 = vmul.f32 %v1018, %v5729
        %v5741 = vmul.f32 %v1020, %v5729
        %v5742 = vmul.f32 %v1022, %v5729
        %v5743 = vmul.f32 %v1024, %v5729
        %v5744 = vmul.f32 %v1026, %v5729
        %v5745 = vmul.f32 %v1028, %v5729
        %v5746 = vmul.f32 %v1030, %v5729
        %v5747 = vmul.f32 %v1036, %v5729
        %v5748 = vmul.f32 %v1038, %v5729
        %v5749 = vmul.f32 %v1040, %v5729
        %v5750 = vmul.f32 %v1042, %v5729
        %v5751 = vmul.f32 %v1044, %v5729
        %v5752 = vmul.f32 %v1046, %v5729
        %v5753 = vmul.f32 %v1048, %v5729
        %v5754 = vmul.f32 %v1050, %v5729
        %v5755 = vmul.f32 %v1056, %v5729
        %v5756 = vmul.f32 %v1058, %v5729
        %v5757 = vmul.f32 %v1060, %v5729
        %v5758 = vmul.f32 %v1062, %v5729
        %v5759 = vmul.f32 %v1064, %v5729
        %v5760 = vmul.f32 %v1066, %v5729
        %v5761 = vmul.f32 %v1068, %v5729
        %v5762 = vmul.f32 %v1070, %v5729
        %v5763 = vadd.f32 %v5691, %v5731
        %v5764 = vadd.f32 %v5692, %v5732
        %v5765 = vadd.f32 %v5693, %v5733
        %v5766 = vadd.f32 %v5694, %v5734
        %v5767 = vadd.f32 %v5695, %v5735
        %v5768 = vadd.f32 %v5696, %v5736
        %v5769 = vadd.f32 %v5697, %v5737
        %v5770 = vadd.f32 %v5698, %v5738
        %v5771 = vadd.f32 %v5699, %v5739
        %v5772 = vadd.f32 %v5700, %v5740
        %v5773 = vadd.f32 %v5701, %v5741
        %v5774 = vadd.f32 %v5702, %v5742
        %v5775 = vadd.f32 %v5703, %v5743
        %v5776 = vadd.f32 %v5704, %v5744
        %v5777 = vadd.f32 %v5705, %v5745
        %v5778 = vadd.f32 %v5706, %v5746
        %v5779 = vadd.f32 %v5707, %v5747
        %v5780 = vadd.f32 %v5708, %v5748
        %v5781 = vadd.f32 %v5709, %v5749
        %v5782 = vadd.f32 %v5710, %v5750
        %v5783 = vadd.f32 %v5711, %v5751
        %v5784 = vadd.f32 %v5712, %v5752
        %v5785 = vadd.f32 %v5713, %v5753
        %v5786 = vadd.f32 %v5714, %v5754
        %v5787 = vadd.f32 %v5715, %v5755
        %v5788 = vadd.f32 %v5716, %v5756
        %v5789 = vadd.f32 %v5717, %v5757
        %v5790 = vadd.f32 %v5718, %v5758
        %v5791 = vadd.f32 %v5719, %v5759
        %v5792 = vadd.f32 %v5720, %v5760
        %v5793 = vadd.f32 %v5721, %v5761
        %v5794 = vadd.f32 %v5722, %v5762
        %s5795 = scalar_lea.vmem [#allocation8], 22
        %v5796 = vld [vmem:[%s5795] sm:$0x1]
        %v5798 = vlaneseq
        %v5799 = vshrl.u32 %v5798, 7
        %v5800 = vsub.s32 0, %v5799
        %v5801 = vrot.slane %v5796, %v5800
        %v5803 = vmul.f32 %v996, %v5801
        %v5804 = vmul.f32 %v997, %v5801
        %v5805 = vmul.f32 %v998, %v5801
        %v5806 = vmul.f32 %v999, %v5801
        %v5807 = vmul.f32 %v1000, %v5801
        %v5808 = vmul.f32 %v1001, %v5801
        %v5809 = vmul.f32 %v1002, %v5801
        %v5810 = vmul.f32 %v1003, %v5801
        %v5811 = vmul.f32 %v1004, %v5801
        %v5812 = vmul.f32 %v1005, %v5801
        %v5813 = vmul.f32 %v1006, %v5801
        %v5814 = vmul.f32 %v1007, %v5801
        %v5815 = vmul.f32 %v1008, %v5801
        %v5816 = vmul.f32 %v1009, %v5801
        %v5817 = vmul.f32 %v1010, %v5801
        %v5818 = vmul.f32 %v1011, %v5801
        %v5819 = vmul.f32 %v1016, %v5801
        %v5820 = vmul.f32 %v1017, %v5801
        %v5821 = vmul.f32 %v1018, %v5801
        %v5822 = vmul.f32 %v1019, %v5801
        %v5823 = vmul.f32 %v1020, %v5801
        %v5824 = vmul.f32 %v1021, %v5801
        %v5825 = vmul.f32 %v1022, %v5801
        %v5826 = vmul.f32 %v1023, %v5801
        %v5827 = vmul.f32 %v1024, %v5801
        %v5828 = vmul.f32 %v1025, %v5801
        %v5829 = vmul.f32 %v1026, %v5801
        %v5830 = vmul.f32 %v1027, %v5801
        %v5831 = vmul.f32 %v1028, %v5801
        %v5832 = vmul.f32 %v1029, %v5801
        %v5833 = vmul.f32 %v1030, %v5801
        %v5834 = vmul.f32 %v1031, %v5801
        %v5835 = vmul.f32 %v1036, %v5801
        %v5836 = vmul.f32 %v1037, %v5801
        %v5837 = vmul.f32 %v1038, %v5801
        %v5838 = vmul.f32 %v1039, %v5801
        %v5839 = vmul.f32 %v1040, %v5801
        %v5840 = vmul.f32 %v1041, %v5801
        %v5841 = vmul.f32 %v1042, %v5801
        %v5842 = vmul.f32 %v1043, %v5801
        %v5843 = vmul.f32 %v1044, %v5801
        %v5844 = vmul.f32 %v1045, %v5801
        %v5845 = vmul.f32 %v1046, %v5801
        %v5846 = vmul.f32 %v1047, %v5801
        %v5847 = vmul.f32 %v1048, %v5801
        %v5848 = vmul.f32 %v1049, %v5801
        %v5849 = vmul.f32 %v1050, %v5801
        %v5850 = vmul.f32 %v1051, %v5801
        %v5851 = vmul.f32 %v1056, %v5801
        %v5852 = vmul.f32 %v1057, %v5801
        %v5853 = vmul.f32 %v1058, %v5801
        %v5854 = vmul.f32 %v1059, %v5801
        %v5855 = vmul.f32 %v1060, %v5801
        %v5856 = vmul.f32 %v1061, %v5801
        %v5857 = vmul.f32 %v1062, %v5801
        %v5858 = vmul.f32 %v1063, %v5801
        %v5859 = vmul.f32 %v1064, %v5801
        %v5860 = vmul.f32 %v1065, %v5801
        %v5861 = vmul.f32 %v1066, %v5801
        %v5862 = vmul.f32 %v1067, %v5801
        %v5863 = vmul.f32 %v1068, %v5801
        %v5864 = vmul.f32 %v1069, %v5801
        %v5865 = vmul.f32 %v1070, %v5801
        %v5866 = vmul.f32 %v1071, %v5801
        %v5931 = vrot.slane %v5803, 1
        %v5932 = vrot.slane %v5804, 1
        %v5933 = vsel %vm1281, %v5931, %v5932
        %v5934 = vrot.slane %v5805, 1
        %v5935 = vrot.slane %v5806, 1
        %v5936 = vsel %vm1281, %v5934, %v5935
        %v5937 = vrot.slane %v5807, 1
        %v5938 = vrot.slane %v5808, 1
        %v5939 = vsel %vm1281, %v5937, %v5938
        %v5940 = vrot.slane %v5809, 1
        %v5941 = vrot.slane %v5810, 1
        %v5942 = vsel %vm1281, %v5940, %v5941
        %v5943 = vrot.slane %v5811, 1
        %v5944 = vrot.slane %v5812, 1
        %v5945 = vsel %vm1281, %v5943, %v5944
        %v5946 = vrot.slane %v5813, 1
        %v5947 = vrot.slane %v5814, 1
        %v5948 = vsel %vm1281, %v5946, %v5947
        %v5949 = vrot.slane %v5815, 1
        %v5950 = vrot.slane %v5816, 1
        %v5951 = vsel %vm1281, %v5949, %v5950
        %v5952 = vrot.slane %v5817, 1
        %v5953 = vrot.slane %v5818, 1
        %v5954 = vsel %vm1281, %v5952, %v5953
        %v5955 = vrot.slane %v5819, 1
        %v5956 = vrot.slane %v5820, 1
        %v5957 = vsel %vm1281, %v5955, %v5956
        %v5958 = vrot.slane %v5821, 1
        %v5959 = vrot.slane %v5822, 1
        %v5960 = vsel %vm1281, %v5958, %v5959
        %v5961 = vrot.slane %v5823, 1
        %v5962 = vrot.slane %v5824, 1
        %v5963 = vsel %vm1281, %v5961, %v5962
        %v5964 = vrot.slane %v5825, 1
        %v5965 = vrot.slane %v5826, 1
        %v5966 = vsel %vm1281, %v5964, %v5965
        %v5967 = vrot.slane %v5827, 1
        %v5968 = vrot.slane %v5828, 1
        %v5969 = vsel %vm1281, %v5967, %v5968
        %v5970 = vrot.slane %v5829, 1
        %v5971 = vrot.slane %v5830, 1
        %v5972 = vsel %vm1281, %v5970, %v5971
        %v5973 = vrot.slane %v5831, 1
        %v5974 = vrot.slane %v5832, 1
        %v5975 = vsel %vm1281, %v5973, %v5974
        %v5976 = vrot.slane %v5833, 1
        %v5977 = vrot.slane %v5834, 1
        %v5978 = vsel %vm1281, %v5976, %v5977
        %v5979 = vrot.slane %v5835, 1
        %v5980 = vrot.slane %v5836, 1
        %v5981 = vsel %vm1281, %v5979, %v5980
        %v5982 = vrot.slane %v5837, 1
        %v5983 = vrot.slane %v5838, 1
        %v5984 = vsel %vm1281, %v5982, %v5983
        %v5985 = vrot.slane %v5839, 1
        %v5986 = vrot.slane %v5840, 1
        %v5987 = vsel %vm1281, %v5985, %v5986
        %v5988 = vrot.slane %v5841, 1
        %v5989 = vrot.slane %v5842, 1
        %v5990 = vsel %vm1281, %v5988, %v5989
        %v5991 = vrot.slane %v5843, 1
        %v5992 = vrot.slane %v5844, 1
        %v5993 = vsel %vm1281, %v5991, %v5992
        %v5994 = vrot.slane %v5845, 1
        %v5995 = vrot.slane %v5846, 1
        %v5996 = vsel %vm1281, %v5994, %v5995
        %v5997 = vrot.slane %v5847, 1
        %v5998 = vrot.slane %v5848, 1
        %v5999 = vsel %vm1281, %v5997, %v5998
        %v6000 = vrot.slane %v5849, 1
        %v6001 = vrot.slane %v5850, 1
        %v6002 = vsel %vm1281, %v6000, %v6001
        %v6003 = vrot.slane %v5851, 1
        %v6004 = vrot.slane %v5852, 1
        %v6005 = vsel %vm1281, %v6003, %v6004
        %v6006 = vrot.slane %v5853, 1
        %v6007 = vrot.slane %v5854, 1
        %v6008 = vsel %vm1281, %v6006, %v6007
        %v6009 = vrot.slane %v5855, 1
        %v6010 = vrot.slane %v5856, 1
        %v6011 = vsel %vm1281, %v6009, %v6010
        %v6012 = vrot.slane %v5857, 1
        %v6013 = vrot.slane %v5858, 1
        %v6014 = vsel %vm1281, %v6012, %v6013
        %v6015 = vrot.slane %v5859, 1
        %v6016 = vrot.slane %v5860, 1
        %v6017 = vsel %vm1281, %v6015, %v6016
        %v6018 = vrot.slane %v5861, 1
        %v6019 = vrot.slane %v5862, 1
        %v6020 = vsel %vm1281, %v6018, %v6019
        %v6021 = vrot.slane %v5863, 1
        %v6022 = vrot.slane %v5864, 1
        %v6023 = vsel %vm1281, %v6021, %v6022
        %v6024 = vrot.slane %v5865, 1
        %v6025 = vrot.slane %v5866, 1
        %v6026 = vsel %vm1281, %v6024, %v6025
        %v6059 = vadd.f32 %v5763, %v5933
        %v6060 = vadd.f32 %v5764, %v5936
        %v6061 = vadd.f32 %v5765, %v5939
        %v6062 = vadd.f32 %v5766, %v5942
        %v6063 = vadd.f32 %v5767, %v5945
        %v6064 = vadd.f32 %v5768, %v5948
        %v6065 = vadd.f32 %v5769, %v5951
        %v6066 = vadd.f32 %v5770, %v5954
        %v6067 = vadd.f32 %v5771, %v5957
        %v6068 = vadd.f32 %v5772, %v5960
        %v6069 = vadd.f32 %v5773, %v5963
        %v6070 = vadd.f32 %v5774, %v5966
        %v6071 = vadd.f32 %v5775, %v5969
        %v6072 = vadd.f32 %v5776, %v5972
        %v6073 = vadd.f32 %v5777, %v5975
        %v6074 = vadd.f32 %v5778, %v5978
        %v6075 = vadd.f32 %v5779, %v5981
        %v6076 = vadd.f32 %v5780, %v5984
        %v6077 = vadd.f32 %v5781, %v5987
        %v6078 = vadd.f32 %v5782, %v5990
        %v6079 = vadd.f32 %v5783, %v5993
        %v6080 = vadd.f32 %v5784, %v5996
        %v6081 = vadd.f32 %v5785, %v5999
        %v6082 = vadd.f32 %v5786, %v6002
        %v6083 = vadd.f32 %v5787, %v6005
        %v6084 = vadd.f32 %v5788, %v6008
        %v6085 = vadd.f32 %v5789, %v6011
        %v6086 = vadd.f32 %v5790, %v6014
        %v6087 = vadd.f32 %v5791, %v6017
        %v6088 = vadd.f32 %v5792, %v6020
        %v6089 = vadd.f32 %v5793, %v6023
        %v6090 = vadd.f32 %v5794, %v6026
        %s6091 = scalar_lea.vmem [#allocation8], 23
        %v6092 = vld [vmem:[%s6091] sm:$0x1]
        %v6094 = vlaneseq
        %v6095 = vshrl.u32 %v6094, 7
        %v6096 = vsub.s32 0, %v6095
        %v6097 = vrot.slane %v6092, %v6096
        %v6099 = vmul.f32 %v996, %v6097
        %v6100 = vmul.f32 %v997, %v6097
        %v6101 = vmul.f32 %v998, %v6097
        %v6102 = vmul.f32 %v999, %v6097
        %v6103 = vmul.f32 %v1000, %v6097
        %v6104 = vmul.f32 %v1001, %v6097
        %v6105 = vmul.f32 %v1002, %v6097
        %v6106 = vmul.f32 %v1003, %v6097
        %v6107 = vmul.f32 %v1004, %v6097
        %v6108 = vmul.f32 %v1005, %v6097
        %v6109 = vmul.f32 %v1006, %v6097
        %v6110 = vmul.f32 %v1007, %v6097
        %v6111 = vmul.f32 %v1008, %v6097
        %v6112 = vmul.f32 %v1009, %v6097
        %v6113 = vmul.f32 %v1010, %v6097
        %v6114 = vmul.f32 %v1011, %v6097
        %v6115 = vmul.f32 %v1016, %v6097
        %v6116 = vmul.f32 %v1017, %v6097
        %v6117 = vmul.f32 %v1018, %v6097
        %v6118 = vmul.f32 %v1019, %v6097
        %v6119 = vmul.f32 %v1020, %v6097
        %v6120 = vmul.f32 %v1021, %v6097
        %v6121 = vmul.f32 %v1022, %v6097
        %v6122 = vmul.f32 %v1023, %v6097
        %v6123 = vmul.f32 %v1024, %v6097
        %v6124 = vmul.f32 %v1025, %v6097
        %v6125 = vmul.f32 %v1026, %v6097
        %v6126 = vmul.f32 %v1027, %v6097
        %v6127 = vmul.f32 %v1028, %v6097
        %v6128 = vmul.f32 %v1029, %v6097
        %v6129 = vmul.f32 %v1030, %v6097
        %v6130 = vmul.f32 %v1031, %v6097
        %v6131 = vmul.f32 %v1036, %v6097
        %v6132 = vmul.f32 %v1037, %v6097
        %v6133 = vmul.f32 %v1038, %v6097
        %v6134 = vmul.f32 %v1039, %v6097
        %v6135 = vmul.f32 %v1040, %v6097
        %v6136 = vmul.f32 %v1041, %v6097
        %v6137 = vmul.f32 %v1042, %v6097
        %v6138 = vmul.f32 %v1043, %v6097
        %v6139 = vmul.f32 %v1044, %v6097
        %v6140 = vmul.f32 %v1045, %v6097
        %v6141 = vmul.f32 %v1046, %v6097
        %v6142 = vmul.f32 %v1047, %v6097
        %v6143 = vmul.f32 %v1048, %v6097
        %v6144 = vmul.f32 %v1049, %v6097
        %v6145 = vmul.f32 %v1050, %v6097
        %v6146 = vmul.f32 %v1051, %v6097
        %v6147 = vmul.f32 %v1056, %v6097
        %v6148 = vmul.f32 %v1057, %v6097
        %v6149 = vmul.f32 %v1058, %v6097
        %v6150 = vmul.f32 %v1059, %v6097
        %v6151 = vmul.f32 %v1060, %v6097
        %v6152 = vmul.f32 %v1061, %v6097
        %v6153 = vmul.f32 %v1062, %v6097
        %v6154 = vmul.f32 %v1063, %v6097
        %v6155 = vmul.f32 %v1064, %v6097
        %v6156 = vmul.f32 %v1065, %v6097
        %v6157 = vmul.f32 %v1066, %v6097
        %v6158 = vmul.f32 %v1067, %v6097
        %v6159 = vmul.f32 %v1068, %v6097
        %v6160 = vmul.f32 %v1069, %v6097
        %v6161 = vmul.f32 %v1070, %v6097
        %v6162 = vmul.f32 %v1071, %v6097
        %v6227 = vrot.slane %v6099, 2
        %v6228 = vrot.slane %v6100, 2
        %v6229 = vsel %vm1578, %v6227, %v6228
        %v6230 = vrot.slane %v6101, 2
        %v6231 = vrot.slane %v6102, 2
        %v6232 = vsel %vm1578, %v6230, %v6231
        %v6233 = vrot.slane %v6103, 2
        %v6234 = vrot.slane %v6104, 2
        %v6235 = vsel %vm1578, %v6233, %v6234
        %v6236 = vrot.slane %v6105, 2
        %v6237 = vrot.slane %v6106, 2
        %v6238 = vsel %vm1578, %v6236, %v6237
        %v6239 = vrot.slane %v6107, 2
        %v6240 = vrot.slane %v6108, 2
        %v6241 = vsel %vm1578, %v6239, %v6240
        %v6242 = vrot.slane %v6109, 2
        %v6243 = vrot.slane %v6110, 2
        %v6244 = vsel %vm1578, %v6242, %v6243
        %v6245 = vrot.slane %v6111, 2
        %v6246 = vrot.slane %v6112, 2
        %v6247 = vsel %vm1578, %v6245, %v6246
        %v6248 = vrot.slane %v6113, 2
        %v6249 = vrot.slane %v6114, 2
        %v6250 = vsel %vm1578, %v6248, %v6249
        %v6251 = vrot.slane %v6115, 2
        %v6252 = vrot.slane %v6116, 2
        %v6253 = vsel %vm1578, %v6251, %v6252
        %v6254 = vrot.slane %v6117, 2
        %v6255 = vrot.slane %v6118, 2
        %v6256 = vsel %vm1578, %v6254, %v6255
        %v6257 = vrot.slane %v6119, 2
        %v6258 = vrot.slane %v6120, 2
        %v6259 = vsel %vm1578, %v6257, %v6258
        %v6260 = vrot.slane %v6121, 2
        %v6261 = vrot.slane %v6122, 2
        %v6262 = vsel %vm1578, %v6260, %v6261
        %v6263 = vrot.slane %v6123, 2
        %v6264 = vrot.slane %v6124, 2
        %v6265 = vsel %vm1578, %v6263, %v6264
        %v6266 = vrot.slane %v6125, 2
        %v6267 = vrot.slane %v6126, 2
        %v6268 = vsel %vm1578, %v6266, %v6267
        %v6269 = vrot.slane %v6127, 2
        %v6270 = vrot.slane %v6128, 2
        %v6271 = vsel %vm1578, %v6269, %v6270
        %v6272 = vrot.slane %v6129, 2
        %v6273 = vrot.slane %v6130, 2
        %v6274 = vsel %vm1578, %v6272, %v6273
        %v6275 = vrot.slane %v6131, 2
        %v6276 = vrot.slane %v6132, 2
        %v6277 = vsel %vm1578, %v6275, %v6276
        %v6278 = vrot.slane %v6133, 2
        %v6279 = vrot.slane %v6134, 2
        %v6280 = vsel %vm1578, %v6278, %v6279
        %v6281 = vrot.slane %v6135, 2
        %v6282 = vrot.slane %v6136, 2
        %v6283 = vsel %vm1578, %v6281, %v6282
        %v6284 = vrot.slane %v6137, 2
        %v6285 = vrot.slane %v6138, 2
        %v6286 = vsel %vm1578, %v6284, %v6285
        %v6287 = vrot.slane %v6139, 2
        %v6288 = vrot.slane %v6140, 2
        %v6289 = vsel %vm1578, %v6287, %v6288
        %v6290 = vrot.slane %v6141, 2
        %v6291 = vrot.slane %v6142, 2
        %v6292 = vsel %vm1578, %v6290, %v6291
        %v6293 = vrot.slane %v6143, 2
        %v6294 = vrot.slane %v6144, 2
        %v6295 = vsel %vm1578, %v6293, %v6294
        %v6296 = vrot.slane %v6145, 2
        %v6297 = vrot.slane %v6146, 2
        %v6298 = vsel %vm1578, %v6296, %v6297
        %v6299 = vrot.slane %v6147, 2
        %v6300 = vrot.slane %v6148, 2
        %v6301 = vsel %vm1578, %v6299, %v6300
        %v6302 = vrot.slane %v6149, 2
        %v6303 = vrot.slane %v6150, 2
        %v6304 = vsel %vm1578, %v6302, %v6303
        %v6305 = vrot.slane %v6151, 2
        %v6306 = vrot.slane %v6152, 2
        %v6307 = vsel %vm1578, %v6305, %v6306
        %v6308 = vrot.slane %v6153, 2
        %v6309 = vrot.slane %v6154, 2
        %v6310 = vsel %vm1578, %v6308, %v6309
        %v6311 = vrot.slane %v6155, 2
        %v6312 = vrot.slane %v6156, 2
        %v6313 = vsel %vm1578, %v6311, %v6312
        %v6314 = vrot.slane %v6157, 2
        %v6315 = vrot.slane %v6158, 2
        %v6316 = vsel %vm1578, %v6314, %v6315
        %v6317 = vrot.slane %v6159, 2
        %v6318 = vrot.slane %v6160, 2
        %v6319 = vsel %vm1578, %v6317, %v6318
        %v6320 = vrot.slane %v6161, 2
        %v6321 = vrot.slane %v6162, 2
        %v6322 = vsel %vm1578, %v6320, %v6321
        %v6355 = vadd.f32 %v6059, %v6229
        %v6356 = vadd.f32 %v6060, %v6232
        %v6357 = vadd.f32 %v6061, %v6235
        %v6358 = vadd.f32 %v6062, %v6238
        %v6359 = vadd.f32 %v6063, %v6241
        %v6360 = vadd.f32 %v6064, %v6244
        %v6361 = vadd.f32 %v6065, %v6247
        %v6362 = vadd.f32 %v6066, %v6250
        %v6363 = vadd.f32 %v6067, %v6253
        %v6364 = vadd.f32 %v6068, %v6256
        %v6365 = vadd.f32 %v6069, %v6259
        %v6366 = vadd.f32 %v6070, %v6262
        %v6367 = vadd.f32 %v6071, %v6265
        %v6368 = vadd.f32 %v6072, %v6268
        %v6369 = vadd.f32 %v6073, %v6271
        %v6370 = vadd.f32 %v6074, %v6274
        %v6371 = vadd.f32 %v6075, %v6277
        %v6372 = vadd.f32 %v6076, %v6280
        %v6373 = vadd.f32 %v6077, %v6283
        %v6374 = vadd.f32 %v6078, %v6286
        %v6375 = vadd.f32 %v6079, %v6289
        %v6376 = vadd.f32 %v6080, %v6292
        %v6377 = vadd.f32 %v6081, %v6295
        %v6378 = vadd.f32 %v6082, %v6298
        %v6379 = vadd.f32 %v6083, %v6301
        %v6380 = vadd.f32 %v6084, %v6304
        %v6381 = vadd.f32 %v6085, %v6307
        %v6382 = vadd.f32 %v6086, %v6310
        %v6383 = vadd.f32 %v6087, %v6313
        %v6384 = vadd.f32 %v6088, %v6316
        %v6385 = vadd.f32 %v6089, %v6319
        %v6386 = vadd.f32 %v6090, %v6322
        %s6387 = scalar_lea.vmem [#allocation8], 24
        %v6388 = vld [vmem:[%s6387] sm:$0x1]
        %v6390 = vlaneseq
        %v6391 = vshrl.u32 %v6390, 7
        %v6392 = vsub.s32 0, %v6391
        %v6393 = vrot.slane %v6388, %v6392
        %v6395 = vmul.f32 %v998, %v6393
        %v6396 = vmul.f32 %v1000, %v6393
        %v6397 = vmul.f32 %v1002, %v6393
        %v6398 = vmul.f32 %v1004, %v6393
        %v6399 = vmul.f32 %v1006, %v6393
        %v6400 = vmul.f32 %v1008, %v6393
        %v6401 = vmul.f32 %v1010, %v6393
        %v6402 = vmul.f32 %v1012, %v6393
        %v6403 = vmul.f32 %v1018, %v6393
        %v6404 = vmul.f32 %v1020, %v6393
        %v6405 = vmul.f32 %v1022, %v6393
        %v6406 = vmul.f32 %v1024, %v6393
        %v6407 = vmul.f32 %v1026, %v6393
        %v6408 = vmul.f32 %v1028, %v6393
        %v6409 = vmul.f32 %v1030, %v6393
        %v6410 = vmul.f32 %v1032, %v6393
        %v6411 = vmul.f32 %v1038, %v6393
        %v6412 = vmul.f32 %v1040, %v6393
        %v6413 = vmul.f32 %v1042, %v6393
        %v6414 = vmul.f32 %v1044, %v6393
        %v6415 = vmul.f32 %v1046, %v6393
        %v6416 = vmul.f32 %v1048, %v6393
        %v6417 = vmul.f32 %v1050, %v6393
        %v6418 = vmul.f32 %v1052, %v6393
        %v6419 = vmul.f32 %v1058, %v6393
        %v6420 = vmul.f32 %v1060, %v6393
        %v6421 = vmul.f32 %v1062, %v6393
        %v6422 = vmul.f32 %v1064, %v6393
        %v6423 = vmul.f32 %v1066, %v6393
        %v6424 = vmul.f32 %v1068, %v6393
        %v6425 = vmul.f32 %v1070, %v6393
        %v6426 = vmul.f32 %v1072, %v6393
        %v6427 = vadd.f32 %v6355, %v6395
        %v6428 = vadd.f32 %v6356, %v6396
        %v6429 = vadd.f32 %v6357, %v6397
        %v6430 = vadd.f32 %v6358, %v6398
        %v6431 = vadd.f32 %v6359, %v6399
        %v6432 = vadd.f32 %v6360, %v6400
        %v6433 = vadd.f32 %v6361, %v6401
        %v6434 = vadd.f32 %v6362, %v6402
        %v6435 = vadd.f32 %v6363, %v6403
        %v6436 = vadd.f32 %v6364, %v6404
        %v6437 = vadd.f32 %v6365, %v6405
        %v6438 = vadd.f32 %v6366, %v6406
        %v6439 = vadd.f32 %v6367, %v6407
        %v6440 = vadd.f32 %v6368, %v6408
        %v6441 = vadd.f32 %v6369, %v6409
        %v6442 = vadd.f32 %v6370, %v6410
        %v6443 = vadd.f32 %v6371, %v6411
        %v6444 = vadd.f32 %v6372, %v6412
        %v6445 = vadd.f32 %v6373, %v6413
        %v6446 = vadd.f32 %v6374, %v6414
        %v6447 = vadd.f32 %v6375, %v6415
        %v6448 = vadd.f32 %v6376, %v6416
        %v6449 = vadd.f32 %v6377, %v6417
        %v6450 = vadd.f32 %v6378, %v6418
        %v6451 = vadd.f32 %v6379, %v6419
        %v6452 = vadd.f32 %v6380, %v6420
        %v6453 = vadd.f32 %v6381, %v6421
        %v6454 = vadd.f32 %v6382, %v6422
        %v6455 = vadd.f32 %v6383, %v6423
        %v6456 = vadd.f32 %v6384, %v6424
        %v6457 = vadd.f32 %v6385, %v6425
        %v6458 = vadd.f32 %v6386, %v6426
        %s6459 = scalar_lea.vmem [#allocation8], 25
        %v6460 = vld [vmem:[%s6459] sm:$0x1]
        %v6462 = vlaneseq
        %v6463 = vshrl.u32 %v6462, 7
        %v6464 = vsub.s32 0, %v6463
        %v6465 = vrot.slane %v6460, %v6464
        %v6467 = vmul.f32 %v998, %v6465
        %v6468 = vmul.f32 %v999, %v6465
        %v6469 = vmul.f32 %v1000, %v6465
        %v6470 = vmul.f32 %v1001, %v6465
        %v6471 = vmul.f32 %v1002, %v6465
        %v6472 = vmul.f32 %v1003, %v6465
        %v6473 = vmul.f32 %v1004, %v6465
        %v6474 = vmul.f32 %v1005, %v6465
        %v6475 = vmul.f32 %v1006, %v6465
        %v6476 = vmul.f32 %v1007, %v6465
        %v6477 = vmul.f32 %v1008, %v6465
        %v6478 = vmul.f32 %v1009, %v6465
        %v6479 = vmul.f32 %v1010, %v6465
        %v6480 = vmul.f32 %v1011, %v6465
        %v6481 = vmul.f32 %v1012, %v6465
        %v6482 = vmul.f32 %v1013, %v6465
        %v6483 = vmul.f32 %v1018, %v6465
        %v6484 = vmul.f32 %v1019, %v6465
        %v6485 = vmul.f32 %v1020, %v6465
        %v6486 = vmul.f32 %v1021, %v6465
        %v6487 = vmul.f32 %v1022, %v6465
        %v6488 = vmul.f32 %v1023, %v6465
        %v6489 = vmul.f32 %v1024, %v6465
        %v6490 = vmul.f32 %v1025, %v6465
        %v6491 = vmul.f32 %v1026, %v6465
        %v6492 = vmul.f32 %v1027, %v6465
        %v6493 = vmul.f32 %v1028, %v6465
        %v6494 = vmul.f32 %v1029, %v6465
        %v6495 = vmul.f32 %v1030, %v6465
        %v6496 = vmul.f32 %v1031, %v6465
        %v6497 = vmul.f32 %v1032, %v6465
        %v6498 = vmul.f32 %v1033, %v6465
        %v6499 = vmul.f32 %v1038, %v6465
        %v6500 = vmul.f32 %v1039, %v6465
        %v6501 = vmul.f32 %v1040, %v6465
        %v6502 = vmul.f32 %v1041, %v6465
        %v6503 = vmul.f32 %v1042, %v6465
        %v6504 = vmul.f32 %v1043, %v6465
        %v6505 = vmul.f32 %v1044, %v6465
        %v6506 = vmul.f32 %v1045, %v6465
        %v6507 = vmul.f32 %v1046, %v6465
        %v6508 = vmul.f32 %v1047, %v6465
        %v6509 = vmul.f32 %v1048, %v6465
        %v6510 = vmul.f32 %v1049, %v6465
        %v6511 = vmul.f32 %v1050, %v6465
        %v6512 = vmul.f32 %v1051, %v6465
        %v6513 = vmul.f32 %v1052, %v6465
        %v6514 = vmul.f32 %v1053, %v6465
        %v6515 = vmul.f32 %v1058, %v6465
        %v6516 = vmul.f32 %v1059, %v6465
        %v6517 = vmul.f32 %v1060, %v6465
        %v6518 = vmul.f32 %v1061, %v6465
        %v6519 = vmul.f32 %v1062, %v6465
        %v6520 = vmul.f32 %v1063, %v6465
        %v6521 = vmul.f32 %v1064, %v6465
        %v6522 = vmul.f32 %v1065, %v6465
        %v6523 = vmul.f32 %v1066, %v6465
        %v6524 = vmul.f32 %v1067, %v6465
        %v6525 = vmul.f32 %v1068, %v6465
        %v6526 = vmul.f32 %v1069, %v6465
        %v6527 = vmul.f32 %v1070, %v6465
        %v6528 = vmul.f32 %v1071, %v6465
        %v6529 = vmul.f32 %v1072, %v6465
        %v6530 = vmul.f32 %v1073, %v6465
        %v6595 = vrot.slane %v6467, 1
        %v6596 = vrot.slane %v6468, 1
        %v6597 = vsel %vm1281, %v6595, %v6596
        %v6598 = vrot.slane %v6469, 1
        %v6599 = vrot.slane %v6470, 1
        %v6600 = vsel %vm1281, %v6598, %v6599
        %v6601 = vrot.slane %v6471, 1
        %v6602 = vrot.slane %v6472, 1
        %v6603 = vsel %vm1281, %v6601, %v6602
        %v6604 = vrot.slane %v6473, 1
        %v6605 = vrot.slane %v6474, 1
        %v6606 = vsel %vm1281, %v6604, %v6605
        %v6607 = vrot.slane %v6475, 1
        %v6608 = vrot.slane %v6476, 1
        %v6609 = vsel %vm1281, %v6607, %v6608
        %v6610 = vrot.slane %v6477, 1
        %v6611 = vrot.slane %v6478, 1
        %v6612 = vsel %vm1281, %v6610, %v6611
        %v6613 = vrot.slane %v6479, 1
        %v6614 = vrot.slane %v6480, 1
        %v6615 = vsel %vm1281, %v6613, %v6614
        %v6616 = vrot.slane %v6481, 1
        %v6617 = vrot.slane %v6482, 1
        %v6618 = vsel %vm1281, %v6616, %v6617
        %v6619 = vrot.slane %v6483, 1
        %v6620 = vrot.slane %v6484, 1
        %v6621 = vsel %vm1281, %v6619, %v6620
        %v6622 = vrot.slane %v6485, 1
        %v6623 = vrot.slane %v6486, 1
        %v6624 = vsel %vm1281, %v6622, %v6623
        %v6625 = vrot.slane %v6487, 1
        %v6626 = vrot.slane %v6488, 1
        %v6627 = vsel %vm1281, %v6625, %v6626
        %v6628 = vrot.slane %v6489, 1
        %v6629 = vrot.slane %v6490, 1
        %v6630 = vsel %vm1281, %v6628, %v6629
        %v6631 = vrot.slane %v6491, 1
        %v6632 = vrot.slane %v6492, 1
        %v6633 = vsel %vm1281, %v6631, %v6632
        %v6634 = vrot.slane %v6493, 1
        %v6635 = vrot.slane %v6494, 1
        %v6636 = vsel %vm1281, %v6634, %v6635
        %v6637 = vrot.slane %v6495, 1
        %v6638 = vrot.slane %v6496, 1
        %v6639 = vsel %vm1281, %v6637, %v6638
        %v6640 = vrot.slane %v6497, 1
        %v6641 = vrot.slane %v6498, 1
        %v6642 = vsel %vm1281, %v6640, %v6641
        %v6643 = vrot.slane %v6499, 1
        %v6644 = vrot.slane %v6500, 1
        %v6645 = vsel %vm1281, %v6643, %v6644
        %v6646 = vrot.slane %v6501, 1
        %v6647 = vrot.slane %v6502, 1
        %v6648 = vsel %vm1281, %v6646, %v6647
        %v6649 = vrot.slane %v6503, 1
        %v6650 = vrot.slane %v6504, 1
        %v6651 = vsel %vm1281, %v6649, %v6650
        %v6652 = vrot.slane %v6505, 1
        %v6653 = vrot.slane %v6506, 1
        %v6654 = vsel %vm1281, %v6652, %v6653
        %v6655 = vrot.slane %v6507, 1
        %v6656 = vrot.slane %v6508, 1
        %v6657 = vsel %vm1281, %v6655, %v6656
        %v6658 = vrot.slane %v6509, 1
        %v6659 = vrot.slane %v6510, 1
        %v6660 = vsel %vm1281, %v6658, %v6659
        %v6661 = vrot.slane %v6511, 1
        %v6662 = vrot.slane %v6512, 1
        %v6663 = vsel %vm1281, %v6661, %v6662
        %v6664 = vrot.slane %v6513, 1
        %v6665 = vrot.slane %v6514, 1
        %v6666 = vsel %vm1281, %v6664, %v6665
        %v6667 = vrot.slane %v6515, 1
        %v6668 = vrot.slane %v6516, 1
        %v6669 = vsel %vm1281, %v6667, %v6668
        %v6670 = vrot.slane %v6517, 1
        %v6671 = vrot.slane %v6518, 1
        %v6672 = vsel %vm1281, %v6670, %v6671
        %v6673 = vrot.slane %v6519, 1
        %v6674 = vrot.slane %v6520, 1
        %v6675 = vsel %vm1281, %v6673, %v6674
        %v6676 = vrot.slane %v6521, 1
        %v6677 = vrot.slane %v6522, 1
        %v6678 = vsel %vm1281, %v6676, %v6677
        %v6679 = vrot.slane %v6523, 1
        %v6680 = vrot.slane %v6524, 1
        %v6681 = vsel %vm1281, %v6679, %v6680
        %v6682 = vrot.slane %v6525, 1
        %v6683 = vrot.slane %v6526, 1
        %v6684 = vsel %vm1281, %v6682, %v6683
        %v6685 = vrot.slane %v6527, 1
        %v6686 = vrot.slane %v6528, 1
        %v6687 = vsel %vm1281, %v6685, %v6686
        %v6688 = vrot.slane %v6529, 1
        %v6689 = vrot.slane %v6530, 1
        %v6690 = vsel %vm1281, %v6688, %v6689
        %v6723 = vadd.f32 %v6427, %v6597
        %v6724 = vadd.f32 %v6428, %v6600
        %v6725 = vadd.f32 %v6429, %v6603
        %v6726 = vadd.f32 %v6430, %v6606
        %v6727 = vadd.f32 %v6431, %v6609
        %v6728 = vadd.f32 %v6432, %v6612
        %v6729 = vadd.f32 %v6433, %v6615
        %v6730 = vadd.f32 %v6434, %v6618
        %v6731 = vadd.f32 %v6435, %v6621
        %v6732 = vadd.f32 %v6436, %v6624
        %v6733 = vadd.f32 %v6437, %v6627
        %v6734 = vadd.f32 %v6438, %v6630
        %v6735 = vadd.f32 %v6439, %v6633
        %v6736 = vadd.f32 %v6440, %v6636
        %v6737 = vadd.f32 %v6441, %v6639
        %v6738 = vadd.f32 %v6442, %v6642
        %v6739 = vadd.f32 %v6443, %v6645
        %v6740 = vadd.f32 %v6444, %v6648
        %v6741 = vadd.f32 %v6445, %v6651
        %v6742 = vadd.f32 %v6446, %v6654
        %v6743 = vadd.f32 %v6447, %v6657
        %v6744 = vadd.f32 %v6448, %v6660
        %v6745 = vadd.f32 %v6449, %v6663
        %v6746 = vadd.f32 %v6450, %v6666
        %v6747 = vadd.f32 %v6451, %v6669
        %v6748 = vadd.f32 %v6452, %v6672
        %v6749 = vadd.f32 %v6453, %v6675
        %v6750 = vadd.f32 %v6454, %v6678
        %v6751 = vadd.f32 %v6455, %v6681
        %v6752 = vadd.f32 %v6456, %v6684
        %v6753 = vadd.f32 %v6457, %v6687
        %v6754 = vadd.f32 %v6458, %v6690
        %s6755 = scalar_lea.vmem [#allocation8], 26
        %v6756 = vld [vmem:[%s6755] sm:$0x1]
        %v6758 = vlaneseq
        %v6759 = vshrl.u32 %v6758, 7
        %v6760 = vsub.s32 0, %v6759
        %v6761 = vrot.slane %v6756, %v6760
        %v6763 = vmul.f32 %v998, %v6761
        %v6764 = vmul.f32 %v999, %v6761
        %v6765 = vmul.f32 %v1000, %v6761
        %v6766 = vmul.f32 %v1001, %v6761
        %v6767 = vmul.f32 %v1002, %v6761
        %v6768 = vmul.f32 %v1003, %v6761
        %v6769 = vmul.f32 %v1004, %v6761
        %v6770 = vmul.f32 %v1005, %v6761
        %v6771 = vmul.f32 %v1006, %v6761
        %v6772 = vmul.f32 %v1007, %v6761
        %v6773 = vmul.f32 %v1008, %v6761
        %v6774 = vmul.f32 %v1009, %v6761
        %v6775 = vmul.f32 %v1010, %v6761
        %v6776 = vmul.f32 %v1011, %v6761
        %v6777 = vmul.f32 %v1012, %v6761
        %v6778 = vmul.f32 %v1013, %v6761
        %v6779 = vmul.f32 %v1018, %v6761
        %v6780 = vmul.f32 %v1019, %v6761
        %v6781 = vmul.f32 %v1020, %v6761
        %v6782 = vmul.f32 %v1021, %v6761
        %v6783 = vmul.f32 %v1022, %v6761
        %v6784 = vmul.f32 %v1023, %v6761
        %v6785 = vmul.f32 %v1024, %v6761
        %v6786 = vmul.f32 %v1025, %v6761
        %v6787 = vmul.f32 %v1026, %v6761
        %v6788 = vmul.f32 %v1027, %v6761
        %v6789 = vmul.f32 %v1028, %v6761
        %v6790 = vmul.f32 %v1029, %v6761
        %v6791 = vmul.f32 %v1030, %v6761
        %v6792 = vmul.f32 %v1031, %v6761
        %v6793 = vmul.f32 %v1032, %v6761
        %v6794 = vmul.f32 %v1033, %v6761
        %v6795 = vmul.f32 %v1038, %v6761
        %v6796 = vmul.f32 %v1039, %v6761
        %v6797 = vmul.f32 %v1040, %v6761
        %v6798 = vmul.f32 %v1041, %v6761
        %v6799 = vmul.f32 %v1042, %v6761
        %v6800 = vmul.f32 %v1043, %v6761
        %v6801 = vmul.f32 %v1044, %v6761
        %v6802 = vmul.f32 %v1045, %v6761
        %v6803 = vmul.f32 %v1046, %v6761
        %v6804 = vmul.f32 %v1047, %v6761
        %v6805 = vmul.f32 %v1048, %v6761
        %v6806 = vmul.f32 %v1049, %v6761
        %v6807 = vmul.f32 %v1050, %v6761
        %v6808 = vmul.f32 %v1051, %v6761
        %v6809 = vmul.f32 %v1052, %v6761
        %v6810 = vmul.f32 %v1053, %v6761
        %v6811 = vmul.f32 %v1058, %v6761
        %v6812 = vmul.f32 %v1059, %v6761
        %v6813 = vmul.f32 %v1060, %v6761
        %v6814 = vmul.f32 %v1061, %v6761
        %v6815 = vmul.f32 %v1062, %v6761
        %v6816 = vmul.f32 %v1063, %v6761
        %v6817 = vmul.f32 %v1064, %v6761
        %v6818 = vmul.f32 %v1065, %v6761
        %v6819 = vmul.f32 %v1066, %v6761
        %v6820 = vmul.f32 %v1067, %v6761
        %v6821 = vmul.f32 %v1068, %v6761
        %v6822 = vmul.f32 %v1069, %v6761
        %v6823 = vmul.f32 %v1070, %v6761
        %v6824 = vmul.f32 %v1071, %v6761
        %v6825 = vmul.f32 %v1072, %v6761
        %v6826 = vmul.f32 %v1073, %v6761
        %v6891 = vrot.slane %v6763, 2
        %v6892 = vrot.slane %v6764, 2
        %v6893 = vsel %vm1578, %v6891, %v6892
        %v6894 = vrot.slane %v6765, 2
        %v6895 = vrot.slane %v6766, 2
        %v6896 = vsel %vm1578, %v6894, %v6895
        %v6897 = vrot.slane %v6767, 2
        %v6898 = vrot.slane %v6768, 2
        %v6899 = vsel %vm1578, %v6897, %v6898
        %v6900 = vrot.slane %v6769, 2
        %v6901 = vrot.slane %v6770, 2
        %v6902 = vsel %vm1578, %v6900, %v6901
        %v6903 = vrot.slane %v6771, 2
        %v6904 = vrot.slane %v6772, 2
        %v6905 = vsel %vm1578, %v6903, %v6904
        %v6906 = vrot.slane %v6773, 2
        %v6907 = vrot.slane %v6774, 2
        %v6908 = vsel %vm1578, %v6906, %v6907
        %v6909 = vrot.slane %v6775, 2
        %v6910 = vrot.slane %v6776, 2
        %v6911 = vsel %vm1578, %v6909, %v6910
        %v6912 = vrot.slane %v6777, 2
        %v6913 = vrot.slane %v6778, 2
        %v6914 = vsel %vm1578, %v6912, %v6913
        %v6915 = vrot.slane %v6779, 2
        %v6916 = vrot.slane %v6780, 2
        %v6917 = vsel %vm1578, %v6915, %v6916
        %v6918 = vrot.slane %v6781, 2
        %v6919 = vrot.slane %v6782, 2
        %v6920 = vsel %vm1578, %v6918, %v6919
        %v6921 = vrot.slane %v6783, 2
        %v6922 = vrot.slane %v6784, 2
        %v6923 = vsel %vm1578, %v6921, %v6922
        %v6924 = vrot.slane %v6785, 2
        %v6925 = vrot.slane %v6786, 2
        %v6926 = vsel %vm1578, %v6924, %v6925
        %v6927 = vrot.slane %v6787, 2
        %v6928 = vrot.slane %v6788, 2
        %v6929 = vsel %vm1578, %v6927, %v6928
        %v6930 = vrot.slane %v6789, 2
        %v6931 = vrot.slane %v6790, 2
        %v6932 = vsel %vm1578, %v6930, %v6931
        %v6933 = vrot.slane %v6791, 2
        %v6934 = vrot.slane %v6792, 2
        %v6935 = vsel %vm1578, %v6933, %v6934
        %v6936 = vrot.slane %v6793, 2
        %v6937 = vrot.slane %v6794, 2
        %v6938 = vsel %vm1578, %v6936, %v6937
        %v6939 = vrot.slane %v6795, 2
        %v6940 = vrot.slane %v6796, 2
        %v6941 = vsel %vm1578, %v6939, %v6940
        %v6942 = vrot.slane %v6797, 2
        %v6943 = vrot.slane %v6798, 2
        %v6944 = vsel %vm1578, %v6942, %v6943
        %v6945 = vrot.slane %v6799, 2
        %v6946 = vrot.slane %v6800, 2
        %v6947 = vsel %vm1578, %v6945, %v6946
        %v6948 = vrot.slane %v6801, 2
        %v6949 = vrot.slane %v6802, 2
        %v6950 = vsel %vm1578, %v6948, %v6949
        %v6951 = vrot.slane %v6803, 2
        %v6952 = vrot.slane %v6804, 2
        %v6953 = vsel %vm1578, %v6951, %v6952
        %v6954 = vrot.slane %v6805, 2
        %v6955 = vrot.slane %v6806, 2
        %v6956 = vsel %vm1578, %v6954, %v6955
        %v6957 = vrot.slane %v6807, 2
        %v6958 = vrot.slane %v6808, 2
        %v6959 = vsel %vm1578, %v6957, %v6958
        %v6960 = vrot.slane %v6809, 2
        %v6961 = vrot.slane %v6810, 2
        %v6962 = vsel %vm1578, %v6960, %v6961
        %v6963 = vrot.slane %v6811, 2
        %v6964 = vrot.slane %v6812, 2
        %v6965 = vsel %vm1578, %v6963, %v6964
        %v6966 = vrot.slane %v6813, 2
        %v6967 = vrot.slane %v6814, 2
        %v6968 = vsel %vm1578, %v6966, %v6967
        %v6969 = vrot.slane %v6815, 2
        %v6970 = vrot.slane %v6816, 2
        %v6971 = vsel %vm1578, %v6969, %v6970
        %v6972 = vrot.slane %v6817, 2
        %v6973 = vrot.slane %v6818, 2
        %v6974 = vsel %vm1578, %v6972, %v6973
        %v6975 = vrot.slane %v6819, 2
        %v6976 = vrot.slane %v6820, 2
        %v6977 = vsel %vm1578, %v6975, %v6976
        %v6978 = vrot.slane %v6821, 2
        %v6979 = vrot.slane %v6822, 2
        %v6980 = vsel %vm1578, %v6978, %v6979
        %v6981 = vrot.slane %v6823, 2
        %v6982 = vrot.slane %v6824, 2
        %v6983 = vsel %vm1578, %v6981, %v6982
        %v6984 = vrot.slane %v6825, 2
        %v6985 = vrot.slane %v6826, 2
        %v6986 = vsel %vm1578, %v6984, %v6985
        %v7019 = vadd.f32 %v6723, %v6893
        %v7020 = vadd.f32 %v6724, %v6896
        %v7021 = vadd.f32 %v6725, %v6899
        %v7022 = vadd.f32 %v6726, %v6902
        %v7023 = vadd.f32 %v6727, %v6905
        %v7024 = vadd.f32 %v6728, %v6908
        %v7025 = vadd.f32 %v6729, %v6911
        %v7026 = vadd.f32 %v6730, %v6914
        %v7027 = vadd.f32 %v6731, %v6917
        %v7028 = vadd.f32 %v6732, %v6920
        %v7029 = vadd.f32 %v6733, %v6923
        %v7030 = vadd.f32 %v6734, %v6926
        %v7031 = vadd.f32 %v6735, %v6929
        %v7032 = vadd.f32 %v6736, %v6932
        %v7033 = vadd.f32 %v6737, %v6935
        %v7034 = vadd.f32 %v6738, %v6938
        %v7035 = vadd.f32 %v6739, %v6941
        %v7036 = vadd.f32 %v6740, %v6944
        %v7037 = vadd.f32 %v6741, %v6947
        %v7038 = vadd.f32 %v6742, %v6950
        %v7039 = vadd.f32 %v6743, %v6953
        %v7040 = vadd.f32 %v6744, %v6956
        %v7041 = vadd.f32 %v6745, %v6959
        %v7042 = vadd.f32 %v6746, %v6962
        %v7043 = vadd.f32 %v6747, %v6965
        %v7044 = vadd.f32 %v6748, %v6968
        %v7045 = vadd.f32 %v6749, %v6971
        %v7046 = vadd.f32 %v6750, %v6974
        %v7047 = vadd.f32 %v6751, %v6977
        %v7048 = vadd.f32 %v6752, %v6980
        %v7049 = vadd.f32 %v6753, %v6983
        %v7050 = vadd.f32 %v6754, %v6986
        %v7051 = vld [vmem:[%s4] sm:$0x1]
        %v7053 = vlaneseq
        %v7054 = vshrl.u32 %v7053, 7
        %v7055 = vsub.s32 0, %v7054
        %v7056 = vrot.slane %v7051, %v7055
        %v7058 = vadd.f32 %v7019, %v7056
        %v7059 = vadd.f32 %v7020, %v7056
        %v7060 = vadd.f32 %v7021, %v7056
        %v7061 = vadd.f32 %v7022, %v7056
        %v7062 = vadd.f32 %v7023, %v7056
        %v7063 = vadd.f32 %v7024, %v7056
        %v7064 = vadd.f32 %v7025, %v7056
        %v7065 = vadd.f32 %v7026, %v7056
        %v7066 = vadd.f32 %v7027, %v7056
        %v7067 = vadd.f32 %v7028, %v7056
        %v7068 = vadd.f32 %v7029, %v7056
        %v7069 = vadd.f32 %v7030, %v7056
        %v7070 = vadd.f32 %v7031, %v7056
        %v7071 = vadd.f32 %v7032, %v7056
        %v7072 = vadd.f32 %v7033, %v7056
        %v7073 = vadd.f32 %v7034, %v7056
        %v7074 = vadd.f32 %v7035, %v7056
        %v7075 = vadd.f32 %v7036, %v7056
        %v7076 = vadd.f32 %v7037, %v7056
        %v7077 = vadd.f32 %v7038, %v7056
        %v7078 = vadd.f32 %v7039, %v7056
        %v7079 = vadd.f32 %v7040, %v7056
        %v7080 = vadd.f32 %v7041, %v7056
        %v7081 = vadd.f32 %v7042, %v7056
        %v7082 = vadd.f32 %v7043, %v7056
        %v7083 = vadd.f32 %v7044, %v7056
        %v7084 = vadd.f32 %v7045, %v7056
        %v7085 = vadd.f32 %v7046, %v7056
        %v7086 = vadd.f32 %v7047, %v7056
        %v7087 = vadd.f32 %v7048, %v7056
        %v7088 = vadd.f32 %v7049, %v7056
        %v7089 = vadd.f32 %v7050, %v7056
        %v7090 = vmul.f32 %v7058, 0.5
        %v7091 = vmul.f32 %v7059, 0.5
        %v7092 = vmul.f32 %v7060, 0.5
        %v7093 = vmul.f32 %v7061, 0.5
        %v7094 = vmul.f32 %v7062, 0.5
        %v7095 = vmul.f32 %v7063, 0.5
        %v7096 = vmul.f32 %v7064, 0.5
        %v7097 = vmul.f32 %v7065, 0.5
        %v7098 = vmul.f32 %v7066, 0.5
        %v7099 = vmul.f32 %v7067, 0.5
        %v7100 = vmul.f32 %v7068, 0.5
        %v7101 = vmul.f32 %v7069, 0.5
        %v7102 = vmul.f32 %v7070, 0.5
        %v7103 = vmul.f32 %v7071, 0.5
        %v7104 = vmul.f32 %v7072, 0.5
        %v7105 = vmul.f32 %v7073, 0.5
        %v7106 = vmul.f32 %v7074, 0.5
        %v7107 = vmul.f32 %v7075, 0.5
        %v7108 = vmul.f32 %v7076, 0.5
        %v7109 = vmul.f32 %v7077, 0.5
        %v7110 = vmul.f32 %v7078, 0.5
        %v7111 = vmul.f32 %v7079, 0.5
        %v7112 = vmul.f32 %v7080, 0.5
        %v7113 = vmul.f32 %v7081, 0.5
        %v7114 = vmul.f32 %v7082, 0.5
        %v7115 = vmul.f32 %v7083, 0.5
        %v7116 = vmul.f32 %v7084, 0.5
        %v7117 = vmul.f32 %v7085, 0.5
        %v7118 = vmul.f32 %v7086, 0.5
        %v7119 = vmul.f32 %v7087, 0.5
        %v7120 = vmul.f32 %v7088, 0.5
        %v7121 = vmul.f32 %v7089, 0.5
        %v7122 = vmul.f32 %v7058, 0.044715
        %v7123 = vmul.f32 %v7059, 0.044715
        %v7124 = vmul.f32 %v7060, 0.044715
        %v7125 = vmul.f32 %v7061, 0.044715
        %v7126 = vmul.f32 %v7062, 0.044715
        %v7127 = vmul.f32 %v7063, 0.044715
        %v7128 = vmul.f32 %v7064, 0.044715
        %v7129 = vmul.f32 %v7065, 0.044715
        %v7130 = vmul.f32 %v7066, 0.044715
        %v7131 = vmul.f32 %v7067, 0.044715
        %v7132 = vmul.f32 %v7068, 0.044715
        %v7133 = vmul.f32 %v7069, 0.044715
        %v7134 = vmul.f32 %v7070, 0.044715
        %v7135 = vmul.f32 %v7071, 0.044715
        %v7136 = vmul.f32 %v7072, 0.044715
        %v7137 = vmul.f32 %v7073, 0.044715
        %v7138 = vmul.f32 %v7074, 0.044715
        %v7139 = vmul.f32 %v7075, 0.044715
        %v7140 = vmul.f32 %v7076, 0.044715
        %v7141 = vmul.f32 %v7077, 0.044715
        %v7142 = vmul.f32 %v7078, 0.044715
        %v7143 = vmul.f32 %v7079, 0.044715
        %v7144 = vmul.f32 %v7080, 0.044715
        %v7145 = vmul.f32 %v7081, 0.044715
        %v7146 = vmul.f32 %v7082, 0.044715
        %v7147 = vmul.f32 %v7083, 0.044715
        %v7148 = vmul.f32 %v7084, 0.044715
        %v7149 = vmul.f32 %v7085, 0.044715
        %v7150 = vmul.f32 %v7086, 0.044715
        %v7151 = vmul.f32 %v7087, 0.044715
        %v7152 = vmul.f32 %v7088, 0.044715
        %v7153 = vmul.f32 %v7089, 0.044715
        %v7154 = vmul.f32 %v7122, %v7058
        %v7155 = vmul.f32 %v7123, %v7059
        %v7156 = vmul.f32 %v7124, %v7060
        %v7157 = vmul.f32 %v7125, %v7061
        %v7158 = vmul.f32 %v7126, %v7062
        %v7159 = vmul.f32 %v7127, %v7063
        %v7160 = vmul.f32 %v7128, %v7064
        %v7161 = vmul.f32 %v7129, %v7065
        %v7162 = vmul.f32 %v7130, %v7066
        %v7163 = vmul.f32 %v7131, %v7067
        %v7164 = vmul.f32 %v7132, %v7068
        %v7165 = vmul.f32 %v7133, %v7069
        %v7166 = vmul.f32 %v7134, %v7070
        %v7167 = vmul.f32 %v7135, %v7071
        %v7168 = vmul.f32 %v7136, %v7072
        %v7169 = vmul.f32 %v7137, %v7073
        %v7170 = vmul.f32 %v7138, %v7074
        %v7171 = vmul.f32 %v7139, %v7075
        %v7172 = vmul.f32 %v7140, %v7076
        %v7173 = vmul.f32 %v7141, %v7077
        %v7174 = vmul.f32 %v7142, %v7078
        %v7175 = vmul.f32 %v7143, %v7079
        %v7176 = vmul.f32 %v7144, %v7080
        %v7177 = vmul.f32 %v7145, %v7081
        %v7178 = vmul.f32 %v7146, %v7082
        %v7179 = vmul.f32 %v7147, %v7083
        %v7180 = vmul.f32 %v7148, %v7084
        %v7181 = vmul.f32 %v7149, %v7085
        %v7182 = vmul.f32 %v7150, %v7086
        %v7183 = vmul.f32 %v7151, %v7087
        %v7184 = vmul.f32 %v7152, %v7088
        %v7185 = vmul.f32 %v7153, %v7089
        %v7186 = vmul.f32 %v7154, %v7058
        %v7187 = vmul.f32 %v7155, %v7059
        %v7188 = vmul.f32 %v7156, %v7060
        %v7189 = vmul.f32 %v7157, %v7061
        %v7190 = vmul.f32 %v7158, %v7062
        %v7191 = vmul.f32 %v7159, %v7063
        %v7192 = vmul.f32 %v7160, %v7064
        %v7193 = vmul.f32 %v7161, %v7065
        %v7194 = vmul.f32 %v7162, %v7066
        %v7195 = vmul.f32 %v7163, %v7067
        %v7196 = vmul.f32 %v7164, %v7068
        %v7197 = vmul.f32 %v7165, %v7069
        %v7198 = vmul.f32 %v7166, %v7070
        %v7199 = vmul.f32 %v7167, %v7071
        %v7200 = vmul.f32 %v7168, %v7072
        %v7201 = vmul.f32 %v7169, %v7073
        %v7202 = vmul.f32 %v7170, %v7074
        %v7203 = vmul.f32 %v7171, %v7075
        %v7204 = vmul.f32 %v7172, %v7076
        %v7205 = vmul.f32 %v7173, %v7077
        %v7206 = vmul.f32 %v7174, %v7078
        %v7207 = vmul.f32 %v7175, %v7079
        %v7208 = vmul.f32 %v7176, %v7080
        %v7209 = vmul.f32 %v7177, %v7081
        %v7210 = vmul.f32 %v7178, %v7082
        %v7211 = vmul.f32 %v7179, %v7083
        %v7212 = vmul.f32 %v7180, %v7084
        %v7213 = vmul.f32 %v7181, %v7085
        %v7214 = vmul.f32 %v7182, %v7086
        %v7215 = vmul.f32 %v7183, %v7087
        %v7216 = vmul.f32 %v7184, %v7088
        %v7217 = vmul.f32 %v7185, %v7089
        %v7218 = vadd.f32 %v7058, %v7186
        %v7219 = vadd.f32 %v7059, %v7187
        %v7220 = vadd.f32 %v7060, %v7188
        %v7221 = vadd.f32 %v7061, %v7189
        %v7222 = vadd.f32 %v7062, %v7190
        %v7223 = vadd.f32 %v7063, %v7191
        %v7224 = vadd.f32 %v7064, %v7192
        %v7225 = vadd.f32 %v7065, %v7193
        %v7226 = vadd.f32 %v7066, %v7194
        %v7227 = vadd.f32 %v7067, %v7195
        %v7228 = vadd.f32 %v7068, %v7196
        %v7229 = vadd.f32 %v7069, %v7197
        %v7230 = vadd.f32 %v7070, %v7198
        %v7231 = vadd.f32 %v7071, %v7199
        %v7232 = vadd.f32 %v7072, %v7200
        %v7233 = vadd.f32 %v7073, %v7201
        %v7234 = vadd.f32 %v7074, %v7202
        %v7235 = vadd.f32 %v7075, %v7203
        %v7236 = vadd.f32 %v7076, %v7204
        %v7237 = vadd.f32 %v7077, %v7205
        %v7238 = vadd.f32 %v7078, %v7206
        %v7239 = vadd.f32 %v7079, %v7207
        %v7240 = vadd.f32 %v7080, %v7208
        %v7241 = vadd.f32 %v7081, %v7209
        %v7242 = vadd.f32 %v7082, %v7210
        %v7243 = vadd.f32 %v7083, %v7211
        %v7244 = vadd.f32 %v7084, %v7212
        %v7245 = vadd.f32 %v7085, %v7213
        %v7246 = vadd.f32 %v7086, %v7214
        %v7247 = vadd.f32 %v7087, %v7215
        %v7248 = vadd.f32 %v7088, %v7216
        %v7249 = vadd.f32 %v7089, %v7217
        %v7250 = vmul.f32 %v7218, 0.7978846
        %v7251 = vmul.f32 %v7219, 0.7978846
        %v7252 = vmul.f32 %v7220, 0.7978846
        %v7253 = vmul.f32 %v7221, 0.7978846
        %v7254 = vmul.f32 %v7222, 0.7978846
        %v7255 = vmul.f32 %v7223, 0.7978846
        %v7256 = vmul.f32 %v7224, 0.7978846
        %v7257 = vmul.f32 %v7225, 0.7978846
        %v7258 = vmul.f32 %v7226, 0.7978846
        %v7259 = vmul.f32 %v7227, 0.7978846
        %v7260 = vmul.f32 %v7228, 0.7978846
        %v7261 = vmul.f32 %v7229, 0.7978846
        %v7262 = vmul.f32 %v7230, 0.7978846
        %v7263 = vmul.f32 %v7231, 0.7978846
        %v7264 = vmul.f32 %v7232, 0.7978846
        %v7265 = vmul.f32 %v7233, 0.7978846
        %v7266 = vmul.f32 %v7234, 0.7978846
        %v7267 = vmul.f32 %v7235, 0.7978846
        %v7268 = vmul.f32 %v7236, 0.7978846
        %v7269 = vmul.f32 %v7237, 0.7978846
        %v7270 = vmul.f32 %v7238, 0.7978846
        %v7271 = vmul.f32 %v7239, 0.7978846
        %v7272 = vmul.f32 %v7240, 0.7978846
        %v7273 = vmul.f32 %v7241, 0.7978846
        %v7274 = vmul.f32 %v7242, 0.7978846
        %v7275 = vmul.f32 %v7243, 0.7978846
        %v7276 = vmul.f32 %v7244, 0.7978846
        %v7277 = vmul.f32 %v7245, 0.7978846
        %v7278 = vmul.f32 %v7246, 0.7978846
        %v7279 = vmul.f32 %v7247, 0.7978846
        %v7280 = vmul.f32 %v7248, 0.7978846
        %v7281 = vmul.f32 %v7249, 0.7978846
        %v7282 = vtanh.pop %v7250
        %v7283 = vtanh.pop %v7251
        %v7284 = vtanh.pop %v7252
        %v7285 = vtanh.pop %v7253
        %v7286 = vtanh.pop %v7254
        %v7287 = vtanh.pop %v7255
        %v7288 = vtanh.pop %v7256
        %v7289 = vtanh.pop %v7257
        %v7290 = vtanh.pop %v7258
        %v7291 = vtanh.pop %v7259
        %v7292 = vtanh.pop %v7260
        %v7293 = vtanh.pop %v7261
        %v7294 = vtanh.pop %v7262
        %v7295 = vtanh.pop %v7263
        %v7296 = vtanh.pop %v7264
        %v7297 = vtanh.pop %v7265
        %v7298 = vtanh.pop %v7266
        %v7299 = vtanh.pop %v7267
        %v7300 = vtanh.pop %v7268
        %v7301 = vtanh.pop %v7269
        %v7302 = vtanh.pop %v7270
        %v7303 = vtanh.pop %v7271
        %v7304 = vtanh.pop %v7272
        %v7305 = vtanh.pop %v7273
        %v7306 = vtanh.pop %v7274
        %v7307 = vtanh.pop %v7275
        %v7308 = vtanh.pop %v7276
        %v7309 = vtanh.pop %v7277
        %v7310 = vtanh.pop %v7278
        %v7311 = vtanh.pop %v7279
        %v7312 = vtanh.pop %v7280
        %v7313 = vtanh.pop %v7281
        %v7314 = vadd.f32 %v7282, 1.0
        %v7315 = vadd.f32 %v7283, 1.0
        %v7316 = vadd.f32 %v7284, 1.0
        %v7317 = vadd.f32 %v7285, 1.0
        %v7318 = vadd.f32 %v7286, 1.0
        %v7319 = vadd.f32 %v7287, 1.0
        %v7320 = vadd.f32 %v7288, 1.0
        %v7321 = vadd.f32 %v7289, 1.0
        %v7322 = vadd.f32 %v7290, 1.0
        %v7323 = vadd.f32 %v7291, 1.0
        %v7324 = vadd.f32 %v7292, 1.0
        %v7325 = vadd.f32 %v7293, 1.0
        %v7326 = vadd.f32 %v7294, 1.0
        %v7327 = vadd.f32 %v7295, 1.0
        %v7328 = vadd.f32 %v7296, 1.0
        %v7329 = vadd.f32 %v7297, 1.0
        %v7330 = vadd.f32 %v7298, 1.0
        %v7331 = vadd.f32 %v7299, 1.0
        %v7332 = vadd.f32 %v7300, 1.0
        %v7333 = vadd.f32 %v7301, 1.0
        %v7334 = vadd.f32 %v7302, 1.0
        %v7335 = vadd.f32 %v7303, 1.0
        %v7336 = vadd.f32 %v7304, 1.0
        %v7337 = vadd.f32 %v7305, 1.0
        %v7338 = vadd.f32 %v7306, 1.0
        %v7339 = vadd.f32 %v7307, 1.0
        %v7340 = vadd.f32 %v7308, 1.0
        %v7341 = vadd.f32 %v7309, 1.0
        %v7342 = vadd.f32 %v7310, 1.0
        %v7343 = vadd.f32 %v7311, 1.0
        %v7344 = vadd.f32 %v7312, 1.0
        %v7345 = vadd.f32 %v7313, 1.0
        %v7346 = vmul.f32 %v7090, %v7314
        %v7347 = vmul.f32 %v7091, %v7315
        %v7348 = vmul.f32 %v7092, %v7316
        %v7349 = vmul.f32 %v7093, %v7317
        %v7350 = vmul.f32 %v7094, %v7318
        %v7351 = vmul.f32 %v7095, %v7319
        %v7352 = vmul.f32 %v7096, %v7320
        %v7353 = vmul.f32 %v7097, %v7321
        %v7354 = vmul.f32 %v7098, %v7322
        %v7355 = vmul.f32 %v7099, %v7323
        %v7356 = vmul.f32 %v7100, %v7324
        %v7357 = vmul.f32 %v7101, %v7325
        %v7358 = vmul.f32 %v7102, %v7326
        %v7359 = vmul.f32 %v7103, %v7327
        %v7360 = vmul.f32 %v7104, %v7328
        %v7361 = vmul.f32 %v7105, %v7329
        %v7362 = vmul.f32 %v7106, %v7330
        %v7363 = vmul.f32 %v7107, %v7331
        %v7364 = vmul.f32 %v7108, %v7332
        %v7365 = vmul.f32 %v7109, %v7333
        %v7366 = vmul.f32 %v7110, %v7334
        %v7367 = vmul.f32 %v7111, %v7335
        %v7368 = vmul.f32 %v7112, %v7336
        %v7369 = vmul.f32 %v7113, %v7337
        %v7370 = vmul.f32 %v7114, %v7338
        %v7371 = vmul.f32 %v7115, %v7339
        %v7372 = vmul.f32 %v7116, %v7340
        %v7373 = vmul.f32 %v7117, %v7341
        %v7374 = vmul.f32 %v7118, %v7342
        %v7375 = vmul.f32 %v7119, %v7343
        %v7376 = vmul.f32 %v7120, %v7344
        %v7377 = vmul.f32 %v7121, %v7345
        %v7378 = vld [vmem:[#allocation9] sm:$0xff]
        %v7379 = vld [vmem:[#allocation9 + $0x8] sm:$0xff]
        %v7380 = vld [vmem:[#allocation9 + $0x10] sm:$0xff]
        %v7381 = vld [vmem:[#allocation9 + $0x18] sm:$0xff]
        %v7382 = vld [vmem:[#allocation9 + $0x20] sm:$0xff]
        %v7383 = vld [vmem:[#allocation9 + $0x28] sm:$0xff]
        %v7384 = vld [vmem:[#allocation9 + $0x30] sm:$0xff]
        %v7385 = vld [vmem:[#allocation9 + $0x38] sm:$0xff]
        %v7386 = vld [vmem:[#allocation9 + $0x40] sm:$0xff]
        %v7387 = vld [vmem:[#allocation9 + $0x48] sm:$0xff]
        %v7388 = vld [vmem:[#allocation9 + $0x50] sm:$0xff]
        %v7389 = vld [vmem:[#allocation9 + $0x58] sm:$0xff]
        %v7390 = vld [vmem:[#allocation9 + $0x60] sm:$0xff]
        %v7391 = vld [vmem:[#allocation9 + $0x68] sm:$0xff]
        %v7392 = vld [vmem:[#allocation9 + $0x70] sm:$0xff]
        %v7393 = vld [vmem:[#allocation9 + $0x78] sm:$0xff]
        %v7394 = vld [vmem:[%s6] sm:$0x1]
        %v7396 = vlaneseq
        %v7397 = vshrl.u32 %v7396, 7
        %v7398 = vsub.s32 0, %v7397
        %v7399 = vrot.slane %v7394, %v7398
        %7401 = vmatprep.subr.mxu0 0.0
        %7402 = vmatpush1.msra.mxu0 %v7393
        %7403 = vmatprep.subr.mxu0 0.0
        %7404 = vmatpush1.msra.mxu0 %v7392
        %7405 = vmatprep.subr.mxu0 0.0
        %7406 = vmatpush1.msra.mxu0 %v7391
        %7407 = vmatprep.subr.mxu0 0.0
        %7408 = vmatpush1.msra.mxu0 %v7390
        %7409 = vmatprep.subr.mxu0 0.0
        %7410 = vmatpush1.msra.mxu0 %v7389
        %7411 = vmatprep.subr.mxu0 0.0
        %7412 = vmatpush1.msra.mxu0 %v7388
        %7413 = vmatprep.subr.mxu0 0.0
        %7414 = vmatpush1.msra.mxu0 %v7387
        %7415 = vmatprep.subr.mxu0 0.0
        %7416 = vmatpush1.msra.mxu0 %v7386
        %7417 = vmatprep.subr.mxu0 0.0
        %7418 = vmatpush1.msra.mxu0 %v7385
        %7419 = vmatprep.subr.mxu0 0.0
        %7420 = vmatpush1.msra.mxu0 %v7384
        %7421 = vmatprep.subr.mxu0 0.0
        %7422 = vmatpush1.msra.mxu0 %v7383
        %7423 = vmatprep.subr.mxu0 0.0
        %7424 = vmatpush1.msra.mxu0 %v7382
        %7425 = vmatprep.subr.mxu0 0.0
        %7426 = vmatpush1.msra.mxu0 %v7381
        %7427 = vmatprep.subr.mxu0 0.0
        %7428 = vmatpush1.msra.mxu0 %v7380
        %7429 = vmatprep.subr.mxu0 0.0
        %7430 = vmatpush1.msra.mxu0 %v7379
        %7431 = vmatprep.subr.mxu0 0.0
        %7432 = vmatpush1.msra.mxu0 %v7378
        %7433 = vmatprep.subr.mxu0 0.0
        %7434 = vmatpush2.msra.mxu0 0.0
        %7435 = vmatprep.subr.mxu0 0.0
        %7436 = vmatpush2.msra.mxu0 0.0
        %7437 = vmatprep.subr.mxu0 0.0
        %7438 = vmatpush2.msra.mxu0 0.0
        %7439 = vmatprep.subr.mxu0 0.0
        %7440 = vmatpush2.msra.mxu0 0.0
        %7441 = vmatprep.subr.mxu0 0.0
        %7442 = vmatpush2.msra.mxu0 0.0
        %7443 = vmatprep.subr.mxu0 0.0
        %7444 = vmatpush2.msra.mxu0 0.0
        %7445 = vmatprep.subr.mxu0 0.0
        %7446 = vmatpush2.msra.mxu0 0.0
        %7447 = vmatprep.subr.mxu0 0.0
        %7448 = vmatpush2.msra.mxu0 0.0
        %7449 = vmatprep.subr.mxu0 0.0
        %7450 = vmatpush2.msra.mxu0 0.0
        %7451 = vmatprep.subr.mxu0 0.0
        %7452 = vmatpush2.msra.mxu0 0.0
        %7453 = vmatprep.subr.mxu0 0.0
        %7454 = vmatpush2.msra.mxu0 0.0
        %7455 = vmatprep.subr.mxu0 0.0
        %7456 = vmatpush2.msra.mxu0 0.0
        %7457 = vmatprep.subr.mxu0 0.0
        %7458 = vmatpush2.msra.mxu0 0.0
        %7459 = vmatprep.subr.mxu0 0.0
        %7460 = vmatpush2.msra.mxu0 0.0
        %7461 = vmatprep.subr.mxu0 0.0
        %7462 = vmatpush2.msra.mxu0 0.0
        %7463 = vmatprep.subr.mxu0 0.0
        %7464 = vmatpush2.msra.mxu0 0.0
        %7465 = vmatprep.mubr.f32.mxu0 0.0
        %7466 = vmatmul.mubr.f32.gmra.mxu0 %v7346
        %v7467 = vpop.f32.mrf.mxu0
        %v7468 = vadd.f32 %v7399, %v7467
        %v7469 = vpop.f32.mrf.mxu0
        %7470 = vmatprep.mubr.f32.mxu0 0.0
        %7471 = vmatmul.mubr.f32.gmra.mxu0 %v7347
        %v7472 = vpop.f32.mrf.mxu0
        %v7473 = vadd.f32 %v7399, %v7472
        %v7474 = vpop.f32.mrf.mxu0
        %7475 = vmatprep.mubr.f32.mxu0 0.0
        %7476 = vmatmul.mubr.f32.gmra.mxu0 %v7348
        %v7477 = vpop.f32.mrf.mxu0
        %v7478 = vadd.f32 %v7399, %v7477
        %v7479 = vpop.f32.mrf.mxu0
        %7480 = vmatprep.mubr.f32.mxu0 0.0
        %7481 = vmatmul.mubr.f32.gmra.mxu0 %v7349
        %v7482 = vpop.f32.mrf.mxu0
        %v7483 = vadd.f32 %v7399, %v7482
        %v7484 = vpop.f32.mrf.mxu0
        %7485 = vmatprep.mubr.f32.mxu0 0.0
        %7486 = vmatmul.mubr.f32.gmra.mxu0 %v7350
        %v7487 = vpop.f32.mrf.mxu0
        %v7488 = vadd.f32 %v7399, %v7487
        %v7489 = vpop.f32.mrf.mxu0
        %7490 = vmatprep.mubr.f32.mxu0 0.0
        %7491 = vmatmul.mubr.f32.gmra.mxu0 %v7351
        %v7492 = vpop.f32.mrf.mxu0
        %v7493 = vadd.f32 %v7399, %v7492
        %v7494 = vpop.f32.mrf.mxu0
        %7495 = vmatprep.mubr.f32.mxu0 0.0
        %7496 = vmatmul.mubr.f32.gmra.mxu0 %v7352
        %v7497 = vpop.f32.mrf.mxu0
        %v7498 = vadd.f32 %v7399, %v7497
        %v7499 = vpop.f32.mrf.mxu0
        %7500 = vmatprep.mubr.f32.mxu0 0.0
        %7501 = vmatmul.mubr.f32.gmra.mxu0 %v7353
        %v7502 = vpop.f32.mrf.mxu0
        %v7503 = vadd.f32 %v7399, %v7502
        %v7504 = vpop.f32.mrf.mxu0
        %7505 = vmatprep.mubr.f32.mxu0 0.0
        %7506 = vmatmul.mubr.f32.gmra.mxu0 %v7354
        %v7507 = vpop.f32.mrf.mxu0
        %v7508 = vadd.f32 %v7399, %v7507
        %v7509 = vpop.f32.mrf.mxu0
        %7510 = vmatprep.mubr.f32.mxu0 0.0
        %7511 = vmatmul.mubr.f32.gmra.mxu0 %v7355
        %v7512 = vpop.f32.mrf.mxu0
        %v7513 = vadd.f32 %v7399, %v7512
        %v7514 = vpop.f32.mrf.mxu0
        %7515 = vmatprep.mubr.f32.mxu0 0.0
        %7516 = vmatmul.mubr.f32.gmra.mxu0 %v7356
        %v7517 = vpop.f32.mrf.mxu0
        %v7518 = vadd.f32 %v7399, %v7517
        %v7519 = vpop.f32.mrf.mxu0
        %7520 = vmatprep.mubr.f32.mxu0 0.0
        %7521 = vmatmul.mubr.f32.gmra.mxu0 %v7357
        %v7522 = vpop.f32.mrf.mxu0
        %v7523 = vadd.f32 %v7399, %v7522
        %v7524 = vpop.f32.mrf.mxu0
        %7525 = vmatprep.mubr.f32.mxu0 0.0
        %7526 = vmatmul.mubr.f32.gmra.mxu0 %v7358
        %v7527 = vpop.f32.mrf.mxu0
        %v7528 = vadd.f32 %v7399, %v7527
        %v7529 = vpop.f32.mrf.mxu0
        %7530 = vmatprep.mubr.f32.mxu0 0.0
        %7531 = vmatmul.mubr.f32.gmra.mxu0 %v7359
        %v7532 = vpop.f32.mrf.mxu0
        %v7533 = vadd.f32 %v7399, %v7532
        %v7534 = vpop.f32.mrf.mxu0
        %7535 = vmatprep.mubr.f32.mxu0 0.0
        %7536 = vmatmul.mubr.f32.gmra.mxu0 %v7360
        %v7537 = vpop.f32.mrf.mxu0
        %v7538 = vadd.f32 %v7399, %v7537
        %v7539 = vpop.f32.mrf.mxu0
        %7540 = vmatprep.mubr.f32.mxu0 0.0
        %7541 = vmatmul.mubr.f32.gmra.mxu0 %v7361
        %v7542 = vpop.f32.mrf.mxu0
        %v7543 = vadd.f32 %v7399, %v7542
        %v7544 = vpop.f32.mrf.mxu0
        %7545 = vmatprep.mubr.f32.mxu0 0.0
        %7546 = vmatmul.mubr.f32.gmra.mxu0 %v7362
        %v7547 = vpop.f32.mrf.mxu0
        %v7548 = vadd.f32 %v7399, %v7547
        %v7549 = vpop.f32.mrf.mxu0
        %7550 = vmatprep.mubr.f32.mxu0 0.0
        %7551 = vmatmul.mubr.f32.gmra.mxu0 %v7363
        %v7552 = vpop.f32.mrf.mxu0
        %v7553 = vadd.f32 %v7399, %v7552
        %v7554 = vpop.f32.mrf.mxu0
        %7555 = vmatprep.mubr.f32.mxu0 0.0
        %7556 = vmatmul.mubr.f32.gmra.mxu0 %v7364
        %v7557 = vpop.f32.mrf.mxu0
        %v7558 = vadd.f32 %v7399, %v7557
        %v7559 = vpop.f32.mrf.mxu0
        %7560 = vmatprep.mubr.f32.mxu0 0.0
        %7561 = vmatmul.mubr.f32.gmra.mxu0 %v7365
        %v7562 = vpop.f32.mrf.mxu0
        %v7563 = vadd.f32 %v7399, %v7562
        %v7564 = vpop.f32.mrf.mxu0
        %7565 = vmatprep.mubr.f32.mxu0 0.0
        %7566 = vmatmul.mubr.f32.gmra.mxu0 %v7366
        %v7567 = vpop.f32.mrf.mxu0
        %v7568 = vadd.f32 %v7399, %v7567
        %v7569 = vpop.f32.mrf.mxu0
        %7570 = vmatprep.mubr.f32.mxu0 0.0
        %7571 = vmatmul.mubr.f32.gmra.mxu0 %v7367
        %v7572 = vpop.f32.mrf.mxu0
        %v7573 = vadd.f32 %v7399, %v7572
        %v7574 = vpop.f32.mrf.mxu0
        %7575 = vmatprep.mubr.f32.mxu0 0.0
        %7576 = vmatmul.mubr.f32.gmra.mxu0 %v7368
        %v7577 = vpop.f32.mrf.mxu0
        %v7578 = vadd.f32 %v7399, %v7577
        %v7579 = vpop.f32.mrf.mxu0
        %7580 = vmatprep.mubr.f32.mxu0 0.0
        %7581 = vmatmul.mubr.f32.gmra.mxu0 %v7369
        %v7582 = vpop.f32.mrf.mxu0
        %v7583 = vadd.f32 %v7399, %v7582
        %v7584 = vpop.f32.mrf.mxu0
        %7585 = vmatprep.mubr.f32.mxu0 0.0
        %7586 = vmatmul.mubr.f32.gmra.mxu0 %v7370
        %v7587 = vpop.f32.mrf.mxu0
        %v7588 = vadd.f32 %v7399, %v7587
        %v7589 = vpop.f32.mrf.mxu0
        %7590 = vmatprep.mubr.f32.mxu0 0.0
        %7591 = vmatmul.mubr.f32.gmra.mxu0 %v7371
        %v7592 = vpop.f32.mrf.mxu0
        %v7593 = vadd.f32 %v7399, %v7592
        %v7594 = vpop.f32.mrf.mxu0
        %7595 = vmatprep.mubr.f32.mxu0 0.0
        %7596 = vmatmul.mubr.f32.gmra.mxu0 %v7372
        %v7597 = vpop.f32.mrf.mxu0
        %v7598 = vadd.f32 %v7399, %v7597
        %v7599 = vpop.f32.mrf.mxu0
        %7600 = vmatprep.mubr.f32.mxu0 0.0
        %7601 = vmatmul.mubr.f32.gmra.mxu0 %v7373
        %v7602 = vpop.f32.mrf.mxu0
        %v7603 = vadd.f32 %v7399, %v7602
        %v7604 = vpop.f32.mrf.mxu0
        %7605 = vmatprep.mubr.f32.mxu0 0.0
        %7606 = vmatmul.mubr.f32.gmra.mxu0 %v7374
        %v7607 = vpop.f32.mrf.mxu0
        %v7608 = vadd.f32 %v7399, %v7607
        %v7609 = vpop.f32.mrf.mxu0
        %7610 = vmatprep.mubr.f32.mxu0 0.0
        %7611 = vmatmul.mubr.f32.gmra.mxu0 %v7375
        %v7612 = vpop.f32.mrf.mxu0
        %v7613 = vadd.f32 %v7399, %v7612
        %v7614 = vpop.f32.mrf.mxu0
        %7615 = vmatprep.mubr.f32.mxu0 0.0
        %7616 = vmatmul.mubr.f32.gmra.mxu0 %v7376
        %v7617 = vpop.f32.mrf.mxu0
        %v7618 = vadd.f32 %v7399, %v7617
        %v7619 = vpop.f32.mrf.mxu0
        %7620 = vmatprep.mubr.f32.mxu0 0.0
        %7621 = vmatmul.mubr.f32.gmra.mxu0 %v7377
        %v7622 = vpop.f32.mrf.mxu0
        %v7623 = vadd.f32 %v7399, %v7622
        %v7624 = vpop.f32.mrf.mxu0
        %7625 = vdwg.mxu0
        %7626 = vst [vmem:[%s358] sm:$0xff] %v7468
        %7627 = vst [vmem:[%s358 + $0x8] sm:$0xff] %v7473
        %7628 = vst [vmem:[%s358 + $0x10] sm:$0xff] %v7478
        %7629 = vst [vmem:[%s358 + $0x18] sm:$0xff] %v7483
        %7630 = vst [vmem:[%s358 + $0x20] sm:$0xff] %v7488
        %7631 = vst [vmem:[%s358 + $0x28] sm:$0xff] %v7493
        %7632 = vst [vmem:[%s358 + $0x30] sm:$0xff] %v7498
        %7633 = vst [vmem:[%s358 + $0x38] sm:$0xff] %v7503
        %7634 = vst [vmem:[%s358 + $0x40] sm:$0xff] %v7508
        %7635 = vst [vmem:[%s358 + $0x48] sm:$0xff] %v7513
        %7636 = vst [vmem:[%s358 + $0x50] sm:$0xff] %v7518
        %7637 = vst [vmem:[%s358 + $0x58] sm:$0xff] %v7523
        %7638 = vst [vmem:[%s358 + $0x60] sm:$0xff] %v7528
        %7639 = vst [vmem:[%s358 + $0x68] sm:$0xff] %v7533
        %7640 = vst [vmem:[%s358 + $0x70] sm:$0xff] %v7538
        %7641 = vst [vmem:[%s358 + $0x78] sm:$0xff] %v7543
        %7642 = vst [vmem:[%s358 + $0x80] sm:$0xff] %v7548
        %7643 = vst [vmem:[%s358 + $0x88] sm:$0xff] %v7553
        %7644 = vst [vmem:[%s358 + $0x90] sm:$0xff] %v7558
        %7645 = vst [vmem:[%s358 + $0x98] sm:$0xff] %v7563
        %7646 = vst [vmem:[%s358 + $0xa0] sm:$0xff] %v7568
        %7647 = vst [vmem:[%s358 + $0xa8] sm:$0xff] %v7573
        %7648 = vst [vmem:[%s358 + $0xb0] sm:$0xff] %v7578
        %7649 = vst [vmem:[%s358 + $0xb8] sm:$0xff] %v7583
        %7650 = vst [vmem:[%s358 + $0xc0] sm:$0xff] %v7588
        %7651 = vst [vmem:[%s358 + $0xc8] sm:$0xff] %v7593
        %7652 = vst [vmem:[%s358 + $0xd0] sm:$0xff] %v7598
        %7653 = vst [vmem:[%s358 + $0xd8] sm:$0xff] %v7603
        %7654 = vst [vmem:[%s358 + $0xe0] sm:$0xff] %v7608
        %7655 = vst [vmem:[%s358 + $0xe8] sm:$0xff] %v7613
        %7656 = vst [vmem:[%s358 + $0xf0] sm:$0xff] %v7618
        %7657 = vst [vmem:[%s358 + $0xf8] sm:$0xff] %v7623
        %s7658 = sand.u32 %s202, 1
        %s7659 = scalar_lea.sflag [#allocation5], %s7658
        %s7660 = sand.u32 %s202, 1
        %s7661 = smul.addr %s7660, 256
        %s7662 = scalar_lea.vmem [#allocation11], %s7661
        // Predicated region
        $region73: #{tpu_custom_call.1} parent=47 // pred_check
          %p7663 = pneg %p212
        $region74: #{tpu_custom_call.1} parent=47 // pred_check_branch
          %7665 = sbr.rel (%p7663) target = $region76
        $region75: #{tpu_custom_call.1} parent=47 // pred_region
          %s7666 = smul.u32 4, %s31
          %s7668 = ssub.s32 4096, 4096
          %7669 = vsyncadd %s7659, %s7668
          %s7670 = smul.addr %s7666, 8
          %s7671 = smul.addr %s30, 64
          %s7672 = sadd.s32 %s7670, %s7671
          %s7673 = smul.addr %s7672, 128
          %s7674 = scalar_lea.hbm %s7, %s7673
          %s7675 = sshll.u32 %s7662, 4
          %s7676 = int_to_ptr.vmem [resolvable:$true] %s7675
          %7681 = dma.vmem_to_hbm [thread:$0]  %s7676, 4096, %s7674, %s7659, 128, 128, 8
        $region76: #{tpu_custom_call.1} parent=47 // pred_fallthru
          _
      $region48: #{tpu_custom_call.1} parent=5 // pred_fallthru
        _
      %p7682 = scmp.le.s32.totalorder 2, %s21
      // Predicated region
      $region77: #{tpu_custom_call.1} parent=5 // pred_check
        %p7683 = pneg %p7682
      $region78: #{tpu_custom_call.1} parent=5 // pred_check_branch
        %7685 = sbr.rel (%p7683) target = $region80
      $region79: #{tpu_custom_call.1} parent=5 // pred_region
        %s7686 = ssub.s32 %s21, 2
        // Predicated region
        $region81: #{tpu_custom_call.1} parent=79 // pred_check
          %p7687 = pneg %p218
        $region82: #{tpu_custom_call.1} parent=79 // pred_check_branch
          %7689 = sbr.rel (%p7687) target = $region84
        $region83: #{tpu_custom_call.1} parent=79 // pred_region
          %s7690 = sand.u32 %s203, 1
          %s7691 = scalar_lea.sflag [#allocation5], %s7690
          %s7692 = sand.u32 %s203, 1
          %s7693 = smul.addr %s7692, 256
          %s7694 = scalar_lea.vmem [#allocation11], %s7693
          %7695 = dma.done %s7691, 4096
        $region84: #{tpu_custom_call.1} parent=79 // pred_fallthru
          _
      $region80: #{tpu_custom_call.1} parent=5 // pred_fallthru
        _
    $region6: #{tpu_custom_call.1} parent=1 // loop_footer
      %s25 = sadd.s32 1, %s21
    $region7: #{tpu_custom_call.1} parent=1 // loop_footer_branch
      %20 = sbr.rel target = $region3
    $region8: #{tpu_custom_call.1} parent=1 // loop_exit
      _
    %7696 = vsyncpa [#allocation4], 1
    %s7697 = scalar_lea.sflag [#allocation4], 1
    %7698 = vsyncpa %s7697, 1
    %7699 = vsyncpa [#allocation7], 1
    %7700 = vsyncpa [#allocation10], 1
    %7701 = vsyncpa [#allocation5], 1
    %s7702 = scalar_lea.sflag [#allocation5], 1
    %7703 = vsyncpa %s7702, 1

</llo_original>
